<compile_context>
chip_gen: v7x
topology: tpu7x:2x2x1
jax: 0.10.0
libtpu: 0.0.40
codegen_flags: <defaults>
</compile_context>

<pallas_src>
import jax
import jax.numpy as jnp
from jax.experimental import pallas as pl
from jax.experimental.pallas import tpu as pltpu

_MIB = 1024 * 1024


# ---------------------------------------------------------------------------
# Kernel
# ---------------------------------------------------------------------------
def _mlp_kernel(x_ref,
                w1_ref, w2_ref, w3_ref, w4_ref, w5_ref,
                b_ref,
                o_ref):
    """Fused 5-layer MLP forward for one batch tile (all operands in VMEM).

    Weights already have eval-mode BatchNorm folded in; biases are packed as
    rows 0..4 of b_ref (float32). Hidden layers are Linear -> bias -> ReLU.
    """

    def hidden(h, w_ref, row):
        width = w_ref.shape[1]
        z = jnp.dot(h.astype(w_ref.dtype), w_ref[...],
                    preferred_element_type=jnp.float32)
        z = z + b_ref[row:row + 1, 0:width]
        return jnp.maximum(z, 0.0)

    h = x_ref[...]
    h = hidden(h, w1_ref, 0)
    h = hidden(h, w2_ref, 1)
    h = hidden(h, w3_ref, 2)
    h = hidden(h, w4_ref, 3)

    width = w5_ref.shape[1]
    z = jnp.dot(h.astype(w5_ref.dtype), w5_ref[...],
                preferred_element_type=jnp.float32)
    o_ref[...] = z + b_ref[4:5, 0:width]


# ---------------------------------------------------------------------------
# Helpers
# ---------------------------------------------------------------------------
def _round_up(n, m):
    return ((n + m - 1) // m) * m


def _tpu_vmem_and_cores():
    """(vmem_capacity_bytes, tensorcores_per_chip) with conservative fallbacks."""
    vmem = 128 * _MIB
    cores = 1
    try:
        info = pltpu.get_tpu_info()
        vmem = int(getattr(info, "vmem_capacity_bytes", vmem))
        for attr in ("num_cores", "core_count", "num_tensorcores",
                     "tensorcores_per_chip", "cores_per_chip"):
            v = getattr(info, attr, None)
            if v is not None:
                cores = int(v)
                break
        else:
            # v7x exposes 64 MiB VMEM per TensorCore and has 2 TCs per chip.
            cores = 2 if vmem <= 64 * _MIB else 1
    except Exception:
        pass  # interpret mode / older jax: keep conservative fallbacks
    return vmem, cores


# ---------------------------------------------------------------------------
# Wrapper
# ---------------------------------------------------------------------------
def mlp_forward(x, params, *, batch_tile=512, compute_dtype=jnp.bfloat16):
    """x: (B, n_feature) float32. params: raw per-layer w/b and BN s/t."""
    B, F = x.shape
    n_output = params["w5"].shape[1]

    # --- fold eval-mode BN (scale s, shift t) into the NEXT layer (exact) ---
    # (relu_out * s + t) @ W + b == relu_out @ (diag(s) @ W) + (t @ W + b)
    Ws, bs = [], []
    prev_s = prev_t = None
    for i in range(1, 6):
        W = params[f"w{i}"].astype(jnp.float32)
        b = params[f"b{i}"].reshape(-1).astype(jnp.float32)
        if prev_s is not None:
            b = b + prev_t @ W           # uses the ORIGINAL W
            W = prev_s[:, None] * W
        if i <= 4:
            prev_s = params[f"s{i}"].reshape(-1).astype(jnp.float32)
            prev_t = params[f"t{i}"].reshape(-1).astype(jnp.float32)
        Ws.append(W)
        bs.append(b)

    # --- pad every feature dim to a multiple of 128 (lane-dense tiles) ---
    pad_in = [_round_up(w.shape[0], 128) for w in Ws]
    pad_out = [_round_up(w.shape[1], 128) for w in Ws]

    Ws_p = []
    for W, pi, po in zip(Ws, pad_in, pad_out):
        Wp = jnp.zeros((pi, po), jnp.float32).at[:W.shape[0], :W.shape[1]].set(W)
        Ws_p.append(Wp.astype(compute_dtype))

    dmax = max(pad_out)
    bias_pack = jnp.zeros((8, dmax), jnp.float32)
    for row, b in enumerate(bs):
        bias_pack = bias_pack.at[row, :b.shape[0]].set(b)

    F_pad = pad_in[0]
    N_pad = pad_out[-1]

    # --- generation-aware VMEM budget & sublane-aligned batch tiling --------
    vmem_cap_bytes, n_cores = _tpu_vmem_and_cores()
    vmem_budget = min(vmem_cap_bytes - 16 * _MIB, 112 * _MIB)  # leave headroom

    cbytes = jnp.dtype(compute_dtype).itemsize
    sub = 16 if cbytes == 2 else (32 if cbytes == 1 else 8)  # sublane packing

    bt = max(sub, min(int(batch_tile), _round_up(B, sub)))
    bt = _round_up(bt, sub)
    if n_cores >= 2 and _round_up(B, bt) == bt and bt >= 2 * sub:
        # keep at least 2 grid steps so both TensorCores (v7x) get work
        bt = _round_up(bt // 2, sub)

    weight_bytes = (sum(int(w.size) for w in Ws_p) * cbytes
                    + int(bias_pack.size) * 4)

    def est_vmem(bt_):
        return (2 * bt_ * F_pad * cbytes        # x tile (double-buffered)
                + 2 * bt_ * N_pad * 4           # out tile (double-buffered)
                + weight_bytes                  # single-buffered resident params
                + 4 * bt_ * dmax * 4)           # inter-layer activation headroom

    while bt > sub and est_vmem(bt) > vmem_budget:
        bt = _round_up(max(bt // 2, sub), sub)

    B_pad = _round_up(B, bt)
    grid = (B_pad // bt,)

    x_p = jnp.zeros((B_pad, F_pad), jnp.float32).at[:B, :F].set(x)
    x_p = x_p.astype(compute_dtype)

    # extra headroom covers the fallback where params end up double-buffered
    vmem_limit = int(min(max(est_vmem(bt) + weight_bytes, 32 * _MIB),
                         vmem_budget))

    # --- cost estimate for XLA scheduling -----------------------------------
    flops = 2 * B_pad * sum(pi * po for pi, po in zip(pad_in, pad_out))
    bytes_accessed = int(x_p.size) * cbytes + weight_bytes + B_pad * N_pad * 4
    cost = pl.CostEstimate(flops=int(flops), transcendentals=0,
                           bytes_accessed=int(bytes_accessed))

    x_spec = pl.BlockSpec((bt, F_pad), lambda i: (i, 0))
    out_spec = pl.BlockSpec((bt, N_pad), lambda i: (i, 0))

    def _invariant_spec(arr, bufs):
        idx = lambda i: (0,) * arr.ndim
        if bufs == 1:
            try:
                # grid-invariant -> single buffer (halves resident param VMEM)
                return pl.BlockSpec(arr.shape, idx, pipeline_mode=pl.Buffered(1))
            except TypeError:
                pass
        return pl.BlockSpec(arr.shape, idx)

    def _call(bufs):
        in_specs = ([x_spec]
                    + [_invariant_spec(w, bufs) for w in Ws_p]
                    + [_invariant_spec(bias_pack, bufs)])
        return pl.pallas_call(
            _mlp_kernel,
            out_shape=jax.ShapeDtypeStruct((B_pad, N_pad), jnp.float32),
            grid_spec=pltpu.PrefetchScalarGridSpec(
                num_scalar_prefetch=0,
                grid=grid,
                in_specs=in_specs,
                out_specs=out_spec,
            ),
            compiler_params=pltpu.CompilerParams(
                dimension_semantics=("parallel",),
                vmem_limit_bytes=vmem_limit,
            ),
            cost_estimate=cost,
        )(x_p, *Ws_p, bias_pack)

    try:
        out_p = _call(bufs=1)   # single-buffered grid-invariant params
    except Exception:
        out_p = _call(bufs=2)   # fallback: default double-buffering

    return out_p[:B, :n_output]


# ---------------------------------------------------------------------------
# Parameter init (matches the PyTorch module's shapes; eval-mode BN folded
# to per-feature scale/shift s, t)
# ---------------------------------------------------------------------------
def init_params(key, n_feature, n_hidden, n_output):
    dims = [
        (n_feature, n_hidden),           # hidden_1
        (n_hidden, n_hidden // 2),       # hidden_2
        (n_hidden // 2, n_hidden // 4),  # hidden_3
        (n_hidden // 4, n_hidden // 8),  # hidden_4
        (n_hidden // 8, n_output),       # out
    ]
    params = {}
    eps = 1e-5
    for idx, (d_in, d_out) in enumerate(dims, start=1):
        key, kw, kb, kg, kbe, km, kv = jax.random.split(key, 7)
        bound = 1.0 / (d_in ** 0.5)
        # stored as (in, out) so kernel computes x @ W
        params[f"w{idx}"] = jax.random.uniform(
            kw, (d_in, d_out), jnp.float32, -bound, bound)
        params[f"b{idx}"] = jax.random.uniform(
            kb, (1, d_out), jnp.float32, -bound, bound)
        if idx <= 4:
            # non-trivial BN stats so the fold is actually exercised
            gamma = jax.random.uniform(kg, (1, d_out), jnp.float32, 0.5, 1.5)
            beta = 0.1 * jax.random.normal(kbe, (1, d_out), jnp.float32)
            running_mean = 0.1 * jax.random.normal(km, (1, d_out), jnp.float32)
            running_var = jax.random.uniform(kv, (1, d_out), jnp.float32, 0.5, 1.5)
            scale = gamma / jnp.sqrt(running_var + eps)
            shift = beta - running_mean * scale
            params[f"s{idx}"] = scale
            params[f"t{idx}"] = shift
    return params


def mlp_reference(x, params, compute_dtype=jnp.float32):
    """Plain-JAX reference of the same eval-mode forward (no folding)."""
    h = x
    for i in range(1, 5):
        z = jnp.dot(h.astype(compute_dtype), params[f"w{i}"].astype(compute_dtype),
                    preferred_element_type=jnp.float32) + params[f"b{i}"]
        z = jnp.maximum(z, 0.0)
        h = z * params[f"s{i}"] + params[f"t{i}"]
    return jnp.dot(h.astype(compute_dtype), params["w5"].astype(compute_dtype),
                   preferred_element_type=jnp.float32) + params["b5"]


if __name__ == "__main__":
    n_feature, n_hidden, n_output = 32, 32, 2
    batch = 200  # deliberately not a multiple of the tile -> exercises padding

    key = jax.random.PRNGKey(0)
    key_x, key_p = jax.random.split(key)
    x = jax.random.normal(key_x, (batch, n_feature), jnp.float32)
    params = init_params(key_p, n_feature, n_hidden, n_output)

    # float32 path (tight check)
    out = mlp_forward(x, params, compute_dtype=jnp.float32)
    out = jax.block_until_ready(out)
    ref = mlp_reference(x, params, jnp.float32)
    assert out.shape == (batch, n_output)
    assert jnp.allclose(out, ref, atol=1e-4, rtol=1e-4), "f32 mismatch vs reference"

    # default path: bf16 weights/activations, f32 MXU accumulation (looser
    # check; BN is folded in f32 then cast, so it won't bit-match layerwise bf16)
    out_bf = mlp_forward(x, params)
    out_bf = jax.block_until_ready(out_bf)
    ref_bf = mlp_reference(x, params, jnp.bfloat16)
    assert out_bf.shape == (batch, n_output)
    assert jnp.allclose(out_bf, ref_bf, atol=5e-2, rtol=5e-2), "bf16 mismatch vs reference"

    print("KERNEL_OK")
</pallas_src>

<mosaic_0001>
module attributes {stable_mosaic.version = 11 : i64} {
  func.func @_mlp_kernel(%arg0: i32, %arg1: memref<200x128xf32, #tpu.memory_space<vmem>>, %arg2: memref<128x128xf32, #tpu.memory_space<vmem>>, %arg3: memref<128x128xf32, #tpu.memory_space<vmem>>, %arg4: memref<128x128xf32, #tpu.memory_space<vmem>>, %arg5: memref<128x128xf32, #tpu.memory_space<vmem>>, %arg6: memref<128x128xf32, #tpu.memory_space<vmem>>, %arg7: memref<8x128xf32, #tpu.memory_space<vmem>>, %arg8: memref<200x128xf32, #tpu.memory_space<vmem>>) attributes {dimension_semantics = [#tpu.dimension_semantics<parallel>], iteration_bounds = array<i64: 1>, scalar_prefetch = 0 : i64, scratch_operands = 0 : i64, tpu.core_type = #tpu.core_type<tc>, window_params = [{transform_indices = @transform_0, window_bounds = array<i64: 200, 128>}, {pipeline_mode = #tpu.pipeline_mode<synchronous>, transform_indices = @transform_1, window_bounds = array<i64: 128, 128>}, {pipeline_mode = #tpu.pipeline_mode<synchronous>, transform_indices = @transform_2, window_bounds = array<i64: 128, 128>}, {pipeline_mode = #tpu.pipeline_mode<synchronous>, transform_indices = @transform_3, window_bounds = array<i64: 128, 128>}, {pipeline_mode = #tpu.pipeline_mode<synchronous>, transform_indices = @transform_4, window_bounds = array<i64: 128, 128>}, {pipeline_mode = #tpu.pipeline_mode<synchronous>, transform_indices = @transform_5, window_bounds = array<i64: 128, 128>}, {pipeline_mode = #tpu.pipeline_mode<synchronous>, transform_indices = @transform_6, window_bounds = array<i64: 8, 128>}, {transform_indices = @transform_7, window_bounds = array<i64: 200, 128>}]} {
    %c0 = arith.constant 0 : index
    %c0_0 = arith.constant 0 : index
    %0 = vector.load %arg1[%c0, %c0_0] : memref<200x128xf32, #tpu.memory_space<vmem>>, vector<200x128xf32>
    %c0_1 = arith.constant 0 : index
    %c0_2 = arith.constant 0 : index
    %1 = vector.load %arg2[%c0_1, %c0_2] : memref<128x128xf32, #tpu.memory_space<vmem>>, vector<128x128xf32>
    %cst = arith.constant dense<0.000000e+00> : vector<200x128xf32>
    %2 = tpu.matmul %0, %1, %cst {dimension_numbers = #tpu.dot_dimension_numbers<[1], [0], [0], [1], [0, 0, 1, 1], [], []>} : vector<200x128xf32>, vector<128x128xf32>, vector<200x128xf32> -> vector<200x128xf32>
    %c0_3 = arith.constant 0 : index
    %c0_4 = arith.constant 0 : index
    %3 = vector.load %arg7[%c0_3, %c0_4] : memref<8x128xf32, #tpu.memory_space<vmem>>, vector<1x128xf32>
    %4 = vector.broadcast %3 : vector<1x128xf32> to vector<200x128xf32>
    %5 = arith.addf %2, %4 : vector<200x128xf32>
    %cst_5 = arith.constant 0.000000e+00 : f32
    %6 = vector.broadcast %cst_5 : f32 to vector<200x128xf32>
    %7 = arith.maximumf %5, %6 : vector<200x128xf32>
    %c0_6 = arith.constant 0 : index
    %c0_7 = arith.constant 0 : index
    %8 = vector.load %arg3[%c0_6, %c0_7] : memref<128x128xf32, #tpu.memory_space<vmem>>, vector<128x128xf32>
    %cst_8 = arith.constant dense<0.000000e+00> : vector<200x128xf32>
    %9 = tpu.matmul %7, %8, %cst_8 {dimension_numbers = #tpu.dot_dimension_numbers<[1], [0], [0], [1], [0, 0, 1, 1], [], []>} : vector<200x128xf32>, vector<128x128xf32>, vector<200x128xf32> -> vector<200x128xf32>
    %c1 = arith.constant 1 : index
    %c0_9 = arith.constant 0 : index
    %10 = vector.load %arg7[%c1, %c0_9] : memref<8x128xf32, #tpu.memory_space<vmem>>, vector<1x128xf32>
    %11 = vector.broadcast %10 : vector<1x128xf32> to vector<200x128xf32>
    %12 = arith.addf %9, %11 : vector<200x128xf32>
    %cst_10 = arith.constant 0.000000e+00 : f32
    %13 = vector.broadcast %cst_10 : f32 to vector<200x128xf32>
    %14 = arith.maximumf %12, %13 : vector<200x128xf32>
    %c0_11 = arith.constant 0 : index
    %c0_12 = arith.constant 0 : index
    %15 = vector.load %arg4[%c0_11, %c0_12] : memref<128x128xf32, #tpu.memory_space<vmem>>, vector<128x128xf32>
    %cst_13 = arith.constant dense<0.000000e+00> : vector<200x128xf32>
    %16 = tpu.matmul %14, %15, %cst_13 {dimension_numbers = #tpu.dot_dimension_numbers<[1], [0], [0], [1], [0, 0, 1, 1], [], []>} : vector<200x128xf32>, vector<128x128xf32>, vector<200x128xf32> -> vector<200x128xf32>
    %c2 = arith.constant 2 : index
    %c0_14 = arith.constant 0 : index
    %17 = vector.load %arg7[%c2, %c0_14] : memref<8x128xf32, #tpu.memory_space<vmem>>, vector<1x128xf32>
    %18 = vector.broadcast %17 : vector<1x128xf32> to vector<200x128xf32>
    %19 = arith.addf %16, %18 : vector<200x128xf32>
    %cst_15 = arith.constant 0.000000e+00 : f32
    %20 = vector.broadcast %cst_15 : f32 to vector<200x128xf32>
    %21 = arith.maximumf %19, %20 : vector<200x128xf32>
    %c0_16 = arith.constant 0 : index
    %c0_17 = arith.constant 0 : index
    %22 = vector.load %arg5[%c0_16, %c0_17] : memref<128x128xf32, #tpu.memory_space<vmem>>, vector<128x128xf32>
    %cst_18 = arith.constant dense<0.000000e+00> : vector<200x128xf32>
    %23 = tpu.matmul %21, %22, %cst_18 {dimension_numbers = #tpu.dot_dimension_numbers<[1], [0], [0], [1], [0, 0, 1, 1], [], []>} : vector<200x128xf32>, vector<128x128xf32>, vector<200x128xf32> -> vector<200x128xf32>
    %c3 = arith.constant 3 : index
    %c0_19 = arith.constant 0 : index
    %24 = vector.load %arg7[%c3, %c0_19] : memref<8x128xf32, #tpu.memory_space<vmem>>, vector<1x128xf32>
    %25 = vector.broadcast %24 : vector<1x128xf32> to vector<200x128xf32>
    %26 = arith.addf %23, %25 : vector<200x128xf32>
    %cst_20 = arith.constant 0.000000e+00 : f32
    %27 = vector.broadcast %cst_20 : f32 to vector<200x128xf32>
    %28 = arith.maximumf %26, %27 : vector<200x128xf32>
    %c0_21 = arith.constant 0 : index
    %c0_22 = arith.constant 0 : index
    %29 = vector.load %arg6[%c0_21, %c0_22] : memref<128x128xf32, #tpu.memory_space<vmem>>, vector<128x128xf32>
    %cst_23 = arith.constant dense<0.000000e+00> : vector<200x128xf32>
    %30 = tpu.matmul %28, %29, %cst_23 {dimension_numbers = #tpu.dot_dimension_numbers<[1], [0], [0], [1], [0, 0, 1, 1], [], []>} : vector<200x128xf32>, vector<128x128xf32>, vector<200x128xf32> -> vector<200x128xf32>
    %c4 = arith.constant 4 : index
    %c0_24 = arith.constant 0 : index
    %31 = vector.load %arg7[%c4, %c0_24] : memref<8x128xf32, #tpu.memory_space<vmem>>, vector<1x128xf32>
    %32 = vector.broadcast %31 : vector<1x128xf32> to vector<200x128xf32>
    %33 = arith.addf %30, %32 : vector<200x128xf32>
    %c0_25 = arith.constant 0 : index
    %c0_26 = arith.constant 0 : index
    %34 = vector.load %arg8[%c0_25, %c0_26] : memref<200x128xf32, #tpu.memory_space<vmem>>, vector<200x128xf32>
    tpu.vector_store %arg8[%c0_25, %c0_26], %33 {strides = array<i32>} : memref<200x128xf32, #tpu.memory_space<vmem>>, vector<200x128xf32>,
    return
  }
  func.func @transform_0(%arg0: i32) -> (i32, i32) {
    %c0_i32 = arith.constant 0 : i32
    %c0_i32_0 = arith.constant 0 : i32
    return %arg0, %c0_i32 : i32, i32
  }
  func.func @transform_1(%arg0: i32) -> (i32, i32) {
    %c0_i32 = arith.constant 0 : i32
    %c0_i32_0 = arith.constant 0 : i32
    %c0_i32_1 = arith.constant 0 : i32
    return %c0_i32, %c0_i32_0 : i32, i32
  }
  func.func @transform_2(%arg0: i32) -> (i32, i32) {
    %c0_i32 = arith.constant 0 : i32
    %c0_i32_0 = arith.constant 0 : i32
    %c0_i32_1 = arith.constant 0 : i32
    return %c0_i32, %c0_i32_0 : i32, i32
  }
  func.func @transform_3(%arg0: i32) -> (i32, i32) {
    %c0_i32 = arith.constant 0 : i32
    %c0_i32_0 = arith.constant 0 : i32
    %c0_i32_1 = arith.constant 0 : i32
    return %c0_i32, %c0_i32_0 : i32, i32
  }
  func.func @transform_4(%arg0: i32) -> (i32, i32) {
    %c0_i32 = arith.constant 0 : i32
    %c0_i32_0 = arith.constant 0 : i32
    %c0_i32_1 = arith.constant 0 : i32
    return %c0_i32, %c0_i32_0 : i32, i32
  }
  func.func @transform_5(%arg0: i32) -> (i32, i32) {
    %c0_i32 = arith.constant 0 : i32
    %c0_i32_0 = arith.constant 0 : i32
    %c0_i32_1 = arith.constant 0 : i32
    return %c0_i32, %c0_i32_0 : i32, i32
  }
  func.func @transform_6(%arg0: i32) -> (i32, i32) {
    %c0_i32 = arith.constant 0 : i32
    %c0_i32_0 = arith.constant 0 : i32
    %c0_i32_1 = arith.constant 0 : i32
    return %c0_i32, %c0_i32_0 : i32, i32
  }
  func.func @transform_7(%arg0: i32) -> (i32, i32) {
    %c0_i32 = arith.constant 0 : i32
    %c0_i32_0 = arith.constant 0 : i32
    return %arg0, %c0_i32 : i32, i32
  }
}

module attributes {stable_mosaic.version = 11 : i64} {
  func.func @_mlp_kernel(%arg0: i32, %arg1: memref<200x128xf32, #tpu.memory_space<vmem>>, %arg2: memref<128x128xf32, #tpu.memory_space<vmem>>, %arg3: memref<128x128xf32, #tpu.memory_space<vmem>>, %arg4: memref<128x128xf32, #tpu.memory_space<vmem>>, %arg5: memref<128x128xf32, #tpu.memory_space<vmem>>, %arg6: memref<128x128xf32, #tpu.memory_space<vmem>>, %arg7: memref<8x128xf32, #tpu.memory_space<vmem>>, %arg8: memref<200x128xf32, #tpu.memory_space<vmem>>) attributes {dimension_semantics = [#tpu.dimension_semantics<parallel>], iteration_bounds = array<i64: 1>, scalar_prefetch = 0 : i64, scratch_operands = 0 : i64, tpu.core_type = #tpu.core_type<tc>, window_params = [{transform_indices = @transform_0, window_bounds = array<i64: 200, 128>}, {pipeline_mode = #tpu.pipeline_mode<synchronous>, transform_indices = @transform_1, window_bounds = array<i64: 128, 128>}, {pipeline_mode = #tpu.pipeline_mode<synchronous>, transform_indices = @transform_2, window_bounds = array<i64: 128, 128>}, {pipeline_mode = #tpu.pipeline_mode<synchronous>, transform_indices = @transform_3, window_bounds = array<i64: 128, 128>}, {pipeline_mode = #tpu.pipeline_mode<synchronous>, transform_indices = @transform_4, window_bounds = array<i64: 128, 128>}, {pipeline_mode = #tpu.pipeline_mode<synchronous>, transform_indices = @transform_5, window_bounds = array<i64: 128, 128>}, {pipeline_mode = #tpu.pipeline_mode<synchronous>, transform_indices = @transform_6, window_bounds = array<i64: 8, 128>}, {transform_indices = @transform_7, window_bounds = array<i64: 200, 128>}]} {
    %c0 = arith.constant 0 : index
    %c0_0 = arith.constant 0 : index
    %0 = vector.load %arg1[%c0, %c0_0] : memref<200x128xf32, #tpu.memory_space<vmem>>, vector<200x128xf32>
    %c0_1 = arith.constant 0 : index
    %c0_2 = arith.constant 0 : index
    %1 = vector.load %arg2[%c0_1, %c0_2] : memref<128x128xf32, #tpu.memory_space<vmem>>, vector<128x128xf32>
    %cst = arith.constant dense<0.000000e+00> : vector<200x128xf32>
    %2 = tpu.matmul %0, %1, %cst {dimension_numbers = #tpu.dot_dimension_numbers<[1], [0], [0], [1], [0, 0, 1, 1], [], []>} : vector<200x128xf32>, vector<128x128xf32>, vector<200x128xf32> -> vector<200x128xf32>
    %c0_3 = arith.constant 0 : index
    %c0_4 = arith.constant 0 : index
    %3 = vector.load %arg7[%c0_3, %c0_4] : memref<8x128xf32, #tpu.memory_space<vmem>>, vector<1x128xf32>
    %4 = vector.broadcast %3 : vector<1x128xf32> to vector<200x128xf32>
    %5 = arith.addf %2, %4 : vector<200x128xf32>
    %cst_5 = arith.constant 0.000000e+00 : f32
    %6 = vector.broadcast %cst_5 : f32 to vector<200x128xf32>
    %7 = arith.maximumf %5, %6 : vector<200x128xf32>
    %c0_6 = arith.constant 0 : index
    %c0_7 = arith.constant 0 : index
    %8 = vector.load %arg3[%c0_6, %c0_7] : memref<128x128xf32, #tpu.memory_space<vmem>>, vector<128x128xf32>
    %cst_8 = arith.constant dense<0.000000e+00> : vector<200x128xf32>
    %9 = tpu.matmul %7, %8, %cst_8 {dimension_numbers = #tpu.dot_dimension_numbers<[1], [0], [0], [1], [0, 0, 1, 1], [], []>} : vector<200x128xf32>, vector<128x128xf32>, vector<200x128xf32> -> vector<200x128xf32>
    %c1 = arith.constant 1 : index
    %c0_9 = arith.constant 0 : index
    %10 = vector.load %arg7[%c1, %c0_9] : memref<8x128xf32, #tpu.memory_space<vmem>>, vector<1x128xf32>
    %11 = vector.broadcast %10 : vector<1x128xf32> to vector<200x128xf32>
    %12 = arith.addf %9, %11 : vector<200x128xf32>
    %cst_10 = arith.constant 0.000000e+00 : f32
    %13 = vector.broadcast %cst_10 : f32 to vector<200x128xf32>
    %14 = arith.maximumf %12, %13 : vector<200x128xf32>
    %c0_11 = arith.constant 0 : index
    %c0_12 = arith.constant 0 : index
    %15 = vector.load %arg4[%c0_11, %c0_12] : memref<128x128xf32, #tpu.memory_space<vmem>>, vector<128x128xf32>
    %cst_13 = arith.constant dense<0.000000e+00> : vector<200x128xf32>
    %16 = tpu.matmul %14, %15, %cst_13 {dimension_numbers = #tpu.dot_dimension_numbers<[1], [0], [0], [1], [0, 0, 1, 1], [], []>} : vector<200x128xf32>, vector<128x128xf32>, vector<200x128xf32> -> vector<200x128xf32>
    %c2 = arith.constant 2 : index
    %c0_14 = arith.constant 0 : index
    %17 = vector.load %arg7[%c2, %c0_14] : memref<8x128xf32, #tpu.memory_space<vmem>>, vector<1x128xf32>
    %18 = vector.broadcast %17 : vector<1x128xf32> to vector<200x128xf32>
    %19 = arith.addf %16, %18 : vector<200x128xf32>
    %cst_15 = arith.constant 0.000000e+00 : f32
    %20 = vector.broadcast %cst_15 : f32 to vector<200x128xf32>
    %21 = arith.maximumf %19, %20 : vector<200x128xf32>
    %c0_16 = arith.constant 0 : index
    %c0_17 = arith.constant 0 : index
    %22 = vector.load %arg5[%c0_16, %c0_17] : memref<128x128xf32, #tpu.memory_space<vmem>>, vector<128x128xf32>
    %cst_18 = arith.constant dense<0.000000e+00> : vector<200x128xf32>
    %23 = tpu.matmul %21, %22, %cst_18 {dimension_numbers = #tpu.dot_dimension_numbers<[1], [0], [0], [1], [0, 0, 1, 1], [], []>} : vector<200x128xf32>, vector<128x128xf32>, vector<200x128xf32> -> vector<200x128xf32>
    %c3 = arith.constant 3 : index
    %c0_19 = arith.constant 0 : index
    %24 = vector.load %arg7[%c3, %c0_19] : memref<8x128xf32, #tpu.memory_space<vmem>>, vector<1x128xf32>
    %25 = vector.broadcast %24 : vector<1x128xf32> to vector<200x128xf32>
    %26 = arith.addf %23, %25 : vector<200x128xf32>
    %cst_20 = arith.constant 0.000000e+00 : f32
    %27 = vector.broadcast %cst_20 : f32 to vector<200x128xf32>
    %28 = arith.maximumf %26, %27 : vector<200x128xf32>
    %c0_21 = arith.constant 0 : index
    %c0_22 = arith.constant 0 : index
    %29 = vector.load %arg6[%c0_21, %c0_22] : memref<128x128xf32, #tpu.memory_space<vmem>>, vector<128x128xf32>
    %cst_23 = arith.constant dense<0.000000e+00> : vector<200x128xf32>
    %30 = tpu.matmul %28, %29, %cst_23 {dimension_numbers = #tpu.dot_dimension_numbers<[1], [0], [0], [1], [0, 0, 1, 1], [], []>} : vector<200x128xf32>, vector<128x128xf32>, vector<200x128xf32> -> vector<200x128xf32>
    %c4 = arith.constant 4 : index
    %c0_24 = arith.constant 0 : index
    %31 = vector.load %arg7[%c4, %c0_24] : memref<8x128xf32, #tpu.memory_space<vmem>>, vector<1x128xf32>
    %32 = vector.broadcast %31 : vector<1x128xf32> to vector<200x128xf32>
    %33 = arith.addf %30, %32 : vector<200x128xf32>
    %c0_25 = arith.constant 0 : index
    %c0_26 = arith.constant 0 : index
    %34 = vector.load %arg8[%c0_25, %c0_26] : memref<200x128xf32, #tpu.memory_space<vmem>>, vector<200x128xf32>
    tpu.vector_store %arg8[%c0_25, %c0_26], %33 {strides = array<i32>} : memref<200x128xf32, #tpu.memory_space<vmem>>, vector<200x128xf32>,
    return
  }
  func.func @transform_0(%arg0: i32) -> (i32, i32) {
    %c0_i32 = arith.constant 0 : i32
    %c0_i32_0 = arith.constant 0 : i32
    return %arg0, %c0_i32 : i32, i32
  }
  func.func @transform_1(%arg0: i32) -> (i32, i32) {
    %c0_i32 = arith.constant 0 : i32
    %c0_i32_0 = arith.constant 0 : i32
    %c0_i32_1 = arith.constant 0 : i32
    return %c0_i32, %c0_i32_0 : i32, i32
  }
  func.func @transform_2(%arg0: i32) -> (i32, i32) {
    %c0_i32 = arith.constant 0 : i32
    %c0_i32_0 = arith.constant 0 : i32
    %c0_i32_1 = arith.constant 0 : i32
    return %c0_i32, %c0_i32_0 : i32, i32
  }
  func.func @transform_3(%arg0: i32) -> (i32, i32) {
    %c0_i32 = arith.constant 0 : i32
    %c0_i32_0 = arith.constant 0 : i32
    %c0_i32_1 = arith.constant 0 : i32
    return %c0_i32, %c0_i32_0 : i32, i32
  }
  func.func @transform_4(%arg0: i32) -> (i32, i32) {
    %c0_i32 = arith.constant 0 : i32
    %c0_i32_0 = arith.constant 0 : i32
    %c0_i32_1 = arith.constant 0 : i32
    return %c0_i32, %c0_i32_0 : i32, i32
  }
  func.func @transform_5(%arg0: i32) -> (i32, i32) {
    %c0_i32 = arith.constant 0 : i32
    %c0_i32_0 = arith.constant 0 : i32
    %c0_i32_1 = arith.constant 0 : i32
    return %c0_i32, %c0_i32_0 : i32, i32
  }
  func.func @transform_6(%arg0: i32) -> (i32, i32) {
    %c0_i32 = arith.constant 0 : i32
    %c0_i32_0 = arith.constant 0 : i32
    %c0_i32_1 = arith.constant 0 : i32
    return %c0_i32, %c0_i32_0 : i32, i32
  }
  func.func @transform_7(%arg0: i32) -> (i32, i32) {
    %c0_i32 = arith.constant 0 : i32
    %c0_i32_0 = arith.constant 0 : i32
    return %arg0, %c0_i32 : i32, i32
  }
}

</mosaic_0001>

<llo_original>
// kernel: tpu_custom_call.1
$region0: #{tpu_custom_call.1}
  #allocation0 [shape = 'u32[]', space=smem, size = 0x4, offset = 0x4, fixed_abs, tag = 'smem constant byte address 0x4 - core index']
  #allocation1 [shape = 'u32[144,128]{1,0:T(1,128)}', space=vmem, size = 0x12000, scoped, tag = 'internal scratch']
  %s0 = inlined_call_operand.hbm [shape: f32[200,128], index: 0, kind: input, shape index: {}]
  %s1 = inlined_call_operand.hbm [shape: f32[128,128], index: 1, kind: input, shape index: {}]
  %s2 = inlined_call_operand.hbm [shape: f32[128,128], index: 2, kind: input, shape index: {}]
  %s3 = inlined_call_operand.hbm [shape: f32[128,128], index: 3, kind: input, shape index: {}]
  %s4 = inlined_call_operand.hbm [shape: f32[128,128], index: 4, kind: input, shape index: {}]
  %s5 = inlined_call_operand.hbm [shape: f32[128,128], index: 5, kind: input, shape index: {}]
  %s6 = inlined_call_operand.vmem [shape: f32[8,128], index: 6, kind: input, shape index: {}]
  %s7 = inlined_call_operand.hbm [shape: f32[200,128], index: 7, kind: output, shape index: {}]
  %s8 = sld [smem:[#allocation0]]
  $region62: #{tpu_custom_call.1} parent=0
    _
  %s10 = ssub.s32 1, %s8
  %s11 = scalar_select 0, %s10, %s8
  $region1: #{tpu_custom_call.1} parent=0
    #allocation2 [shape = 'u8[102400]{0}', space=vmem, size = 0x19000, scoped, tag = 'input window, operand 0, single buffered']
    #allocation3 [shape = 's32[1]{0}', space=sflag, size = 0x4, scoped, tag = 'scoped memory for tpu_custom_call.1']
    #allocation4 [shape = 's32[1]{0}', space=sflag, size = 0x4, scoped, tag = 'scoped memory for tpu_custom_call.1']
    #allocation5 [shape = 'u8[65536]{0}', space=vmem, size = 0x10000, scoped, tag = 'input window, operand 1, single buffered']
    #allocation6 [shape = 's32[1]{0}', space=sflag, size = 0x4, scoped, tag = 'scoped memory for tpu_custom_call.1']
    #allocation7 [shape = 'u8[65536]{0}', space=vmem, size = 0x10000, scoped, tag = 'input window, operand 2, single buffered']
    #allocation8 [shape = 'u8[65536]{0}', space=vmem, size = 0x10000, scoped, tag = 'input window, operand 3, single buffered']
    #allocation9 [shape = 's32[1]{0}', space=sflag, size = 0x4, scoped, tag = 'scoped memory for tpu_custom_call.1']
    #allocation10 [shape = 'u8[65536]{0}', space=vmem, size = 0x10000, scoped, tag = 'input window, operand 4, single buffered']
    #allocation11 [shape = 'u8[65536]{0}', space=vmem, size = 0x10000, scoped, tag = 'input window, operand 5, single buffered']
    #allocation12 [shape = 's32[1]{0}', space=sflag, size = 0x4, scoped, tag = 'scoped memory for tpu_custom_call.1']
    #allocation13 [shape = 'u8[102400]{0}', space=vmem, size = 0x19000, scoped, tag = 'output window, operand 0, single buffered']
    %12 = vsyncpa [#allocation3], 0
    %13 = vsyncpa [#allocation6], 0
    %14 = vsyncpa [#allocation9], 0
    %15 = vsyncpa [#allocation12], 0
    %16 = vsyncpa [#allocation4], 0
    // Predicated region
    $region2: #{tpu_custom_call.1} parent=1 // pred_check
      _
    $region3: #{tpu_custom_call.1} parent=1 // pred_check_branch
      %18 = sbr.rel (0) target = $region5
    $region4: #{tpu_custom_call.1} parent=1 // pred_region
      %s20 = ssub.s32 3200, 3200
      %21 = vsyncadd [#allocation3], %s20
      %s22 = sshll.u32 [#allocation2], 4
      %s23 = int_to_ptr.vmem [resolvable:$true] %s22
      %28 = dma.hbm_to_vmem [thread:$0]  %s0, 3200, %s23, [#allocation3], 128, 128, 8
    $region5: #{tpu_custom_call.1} parent=1 // pred_fallthru
      _
    // Predicated region
    $region6: #{tpu_custom_call.1} parent=1 // pred_check
      _
    $region7: #{tpu_custom_call.1} parent=1 // pred_check_branch
      %30 = sbr.rel (0) target = $region9
    $region8: #{tpu_custom_call.1} parent=1 // pred_region
      %s32 = ssub.s32 2048, 2048
      %33 = vsyncadd [#allocation6], %s32
      %s34 = sshll.u32 [#allocation5], 4
      %s35 = int_to_ptr.vmem [resolvable:$true] %s34
      %40 = dma.hbm_to_vmem [thread:$0]  %s1, 2048, %s35, [#allocation6], 128, 128, 8
    $region9: #{tpu_custom_call.1} parent=1 // pred_fallthru
      _
    // Predicated region
    $region10: #{tpu_custom_call.1} parent=1 // pred_check
      _
    $region11: #{tpu_custom_call.1} parent=1 // pred_check_branch
      %42 = sbr.rel (0) target = $region13
    $region12: #{tpu_custom_call.1} parent=1 // pred_region
      %s44 = ssub.s32 2048, 2048
      %45 = vsyncadd [#allocation6], %s44
      %s46 = sshll.u32 [#allocation7], 4
      %s47 = int_to_ptr.vmem [resolvable:$true] %s46
      %52 = dma.hbm_to_vmem [thread:$0]  %s2, 2048, %s47, [#allocation6], 128, 128, 8
    $region13: #{tpu_custom_call.1} parent=1 // pred_fallthru
      _
    // Predicated region
    $region14: #{tpu_custom_call.1} parent=1 // pred_check
      _
    $region15: #{tpu_custom_call.1} parent=1 // pred_check_branch
      %54 = sbr.rel (0) target = $region17
    $region16: #{tpu_custom_call.1} parent=1 // pred_region
      %s56 = ssub.s32 2048, 2048
      %57 = vsyncadd [#allocation9], %s56
      %s58 = sshll.u32 [#allocation8], 4
      %s59 = int_to_ptr.vmem [resolvable:$true] %s58
      %64 = dma.hbm_to_vmem [thread:$0]  %s3, 2048, %s59, [#allocation9], 128, 128, 8
    $region17: #{tpu_custom_call.1} parent=1 // pred_fallthru
      _
    // Predicated region
    $region18: #{tpu_custom_call.1} parent=1 // pred_check
      _
    $region19: #{tpu_custom_call.1} parent=1 // pred_check_branch
      %66 = sbr.rel (0) target = $region21
    $region20: #{tpu_custom_call.1} parent=1 // pred_region
      %s68 = ssub.s32 2048, 2048
      %69 = vsyncadd [#allocation9], %s68
      %s70 = sshll.u32 [#allocation10], 4
      %s71 = int_to_ptr.vmem [resolvable:$true] %s70
      %76 = dma.hbm_to_vmem [thread:$0]  %s4, 2048, %s71, [#allocation9], 128, 128, 8
    $region21: #{tpu_custom_call.1} parent=1 // pred_fallthru
      _
    // Predicated region
    $region22: #{tpu_custom_call.1} parent=1 // pred_check
      _
    $region23: #{tpu_custom_call.1} parent=1 // pred_check_branch
      %78 = sbr.rel (0) target = $region25
    $region24: #{tpu_custom_call.1} parent=1 // pred_region
      %s80 = ssub.s32 2048, 2048
      %81 = vsyncadd [#allocation12], %s80
      %s82 = sshll.u32 [#allocation11], 4
      %s83 = int_to_ptr.vmem [resolvable:$true] %s82
      %88 = dma.hbm_to_vmem [thread:$0]  %s5, 2048, %s83, [#allocation12], 128, 128, 8
    $region25: #{tpu_custom_call.1} parent=1 // pred_fallthru
      _
    // Predicated region
    $region26: #{tpu_custom_call.1} parent=1 // pred_check
      _
    $region27: #{tpu_custom_call.1} parent=1 // pred_check_branch
      %90 = sbr.rel (0) target = $region29
    $region28: #{tpu_custom_call.1} parent=1 // pred_region
      _
    $region29: #{tpu_custom_call.1} parent=1 // pred_fallthru
      _
    // Predicated region
    $region30: #{tpu_custom_call.1} parent=1 // pred_check
      _
    $region31: #{tpu_custom_call.1} parent=1 // pred_check_branch
      %92 = sbr.rel (0) target = $region33
    $region32: #{tpu_custom_call.1} parent=1 // pred_region
      %93 = dma.done [#allocation3], 3200
    $region33: #{tpu_custom_call.1} parent=1 // pred_fallthru
      _
    // Predicated region
    $region34: #{tpu_custom_call.1} parent=1 // pred_check
      _
    $region35: #{tpu_custom_call.1} parent=1 // pred_check_branch
      %95 = sbr.rel (0) target = $region37
    $region36: #{tpu_custom_call.1} parent=1 // pred_region
      %96 = dma.done [#allocation6], 2048
    $region37: #{tpu_custom_call.1} parent=1 // pred_fallthru
      _
    // Predicated region
    $region38: #{tpu_custom_call.1} parent=1 // pred_check
      _
    $region39: #{tpu_custom_call.1} parent=1 // pred_check_branch
      %98 = sbr.rel (0) target = $region41
    $region40: #{tpu_custom_call.1} parent=1 // pred_region
      %99 = dma.done [#allocation6], 2048
    $region41: #{tpu_custom_call.1} parent=1 // pred_fallthru
      _
    // Predicated region
    $region42: #{tpu_custom_call.1} parent=1 // pred_check
      _
    $region43: #{tpu_custom_call.1} parent=1 // pred_check_branch
      %101 = sbr.rel (0) target = $region45
    $region44: #{tpu_custom_call.1} parent=1 // pred_region
      %102 = dma.done [#allocation9], 2048
    $region45: #{tpu_custom_call.1} parent=1 // pred_fallthru
      _
    // Predicated region
    $region46: #{tpu_custom_call.1} parent=1 // pred_check
      _
    $region47: #{tpu_custom_call.1} parent=1 // pred_check_branch
      %104 = sbr.rel (0) target = $region49
    $region48: #{tpu_custom_call.1} parent=1 // pred_region
      %105 = dma.done [#allocation9], 2048
    $region49: #{tpu_custom_call.1} parent=1 // pred_fallthru
      _
    // Predicated region
    $region50: #{tpu_custom_call.1} parent=1 // pred_check
      _
    $region51: #{tpu_custom_call.1} parent=1 // pred_check_branch
      %107 = sbr.rel (0) target = $region53
    $region52: #{tpu_custom_call.1} parent=1 // pred_region
      %108 = dma.done [#allocation12], 2048
    $region53: #{tpu_custom_call.1} parent=1 // pred_fallthru
      _
    %v109 = vld [vmem:[#allocation2] sm:$0xff]
    %v110 = vld [vmem:[#allocation2 + $0x8] sm:$0xff]
    %v111 = vld [vmem:[#allocation2 + $0x10] sm:$0xff]
    %v112 = vld [vmem:[#allocation2 + $0x18] sm:$0xff]
    %v113 = vld [vmem:[#allocation2 + $0x20] sm:$0xff]
    %v114 = vld [vmem:[#allocation2 + $0x28] sm:$0xff]
    %v115 = vld [vmem:[#allocation2 + $0x30] sm:$0xff]
    %v116 = vld [vmem:[#allocation2 + $0x38] sm:$0xff]
    %v117 = vld [vmem:[#allocation2 + $0x40] sm:$0xff]
    %v118 = vld [vmem:[#allocation2 + $0x48] sm:$0xff]
    %v119 = vld [vmem:[#allocation2 + $0x50] sm:$0xff]
    %v120 = vld [vmem:[#allocation2 + $0x58] sm:$0xff]
    %v121 = vld [vmem:[#allocation2 + $0x60] sm:$0xff]
    %v122 = vld [vmem:[#allocation2 + $0x68] sm:$0xff]
    %v123 = vld [vmem:[#allocation2 + $0x70] sm:$0xff]
    %v124 = vld [vmem:[#allocation2 + $0x78] sm:$0xff]
    %v125 = vld [vmem:[#allocation2 + $0x80] sm:$0xff]
    %v126 = vld [vmem:[#allocation2 + $0x88] sm:$0xff]
    %v127 = vld [vmem:[#allocation2 + $0x90] sm:$0xff]
    %v128 = vld [vmem:[#allocation2 + $0x98] sm:$0xff]
    %v129 = vld [vmem:[#allocation2 + $0xa0] sm:$0xff]
    %v130 = vld [vmem:[#allocation2 + $0xa8] sm:$0xff]
    %v131 = vld [vmem:[#allocation2 + $0xb0] sm:$0xff]
    %v132 = vld [vmem:[#allocation2 + $0xb8] sm:$0xff]
    %v133 = vld [vmem:[#allocation2 + $0xc0] sm:$0xff]
    %v134 = vld [vmem:[#allocation5] sm:$0xff]
    %v135 = vld [vmem:[#allocation5 + $0x8] sm:$0xff]
    %v136 = vld [vmem:[#allocation5 + $0x10] sm:$0xff]
    %v137 = vld [vmem:[#allocation5 + $0x18] sm:$0xff]
    %v138 = vld [vmem:[#allocation5 + $0x20] sm:$0xff]
    %v139 = vld [vmem:[#allocation5 + $0x28] sm:$0xff]
    %v140 = vld [vmem:[#allocation5 + $0x30] sm:$0xff]
    %v141 = vld [vmem:[#allocation5 + $0x38] sm:$0xff]
    %v142 = vld [vmem:[#allocation5 + $0x40] sm:$0xff]
    %v143 = vld [vmem:[#allocation5 + $0x48] sm:$0xff]
    %v144 = vld [vmem:[#allocation5 + $0x50] sm:$0xff]
    %v145 = vld [vmem:[#allocation5 + $0x58] sm:$0xff]
    %v146 = vld [vmem:[#allocation5 + $0x60] sm:$0xff]
    %v147 = vld [vmem:[#allocation5 + $0x68] sm:$0xff]
    %v148 = vld [vmem:[#allocation5 + $0x70] sm:$0xff]
    %v149 = vld [vmem:[#allocation5 + $0x78] sm:$0xff]
    %v150 = vld [vmem:[%s6] sm:$0x1]
    %v151 = vlaneseq
    %v152 = vshrl.u32 %v151, 7
    %v153 = vsub.s32 0, %v152
    %v154 = vrot.slane %v150, %v153
    %155 = vmatprep.subr.mxu0 0.0
    %156 = vmatpush1.msra.mxu0 %v134
    %157 = vmatprep.subr.mxu0 0.0
    %158 = vmatpush1.msra.mxu0 %v135
    %159 = vmatprep.subr.mxu0 0.0
    %160 = vmatpush1.msra.mxu0 %v136
    %161 = vmatprep.subr.mxu0 0.0
    %162 = vmatpush1.msra.mxu0 %v137
    %163 = vmatprep.subr.mxu0 0.0
    %164 = vmatpush1.msra.mxu0 %v138
    %165 = vmatprep.subr.mxu0 0.0
    %166 = vmatpush1.msra.mxu0 %v139
    %167 = vmatprep.subr.mxu0 0.0
    %168 = vmatpush1.msra.mxu0 %v140
    %169 = vmatprep.subr.mxu0 0.0
    %170 = vmatpush1.msra.mxu0 %v141
    %171 = vmatprep.subr.mxu0 0.0
    %172 = vmatpush1.msra.mxu0 %v142
    %173 = vmatprep.subr.mxu0 0.0
    %174 = vmatpush1.msra.mxu0 %v143
    %175 = vmatprep.subr.mxu0 0.0
    %176 = vmatpush1.msra.mxu0 %v144
    %177 = vmatprep.subr.mxu0 0.0
    %178 = vmatpush1.msra.mxu0 %v145
    %179 = vmatprep.subr.mxu0 0.0
    %180 = vmatpush1.msra.mxu0 %v146
    %181 = vmatprep.subr.mxu0 0.0
    %182 = vmatpush1.msra.mxu0 %v147
    %183 = vmatprep.subr.mxu0 0.0
    %184 = vmatpush1.msra.mxu0 %v148
    %185 = vmatprep.subr.mxu0 0.0
    %186 = vmatpush1.msra.mxu0 %v149
    %187 = vmatprep.subr.mxu0 0.0
    %188 = vmatpush1.msra.mxu0 0.0
    %189 = vmatprep.subr.mxu0 0.0
    %190 = vmatpush1.msra.mxu0 0.0
    %191 = vmatprep.subr.mxu0 0.0
    %192 = vmatpush1.msra.mxu0 0.0
    %193 = vmatprep.subr.mxu0 0.0
    %194 = vmatpush1.msra.mxu0 0.0
    %195 = vmatprep.subr.mxu0 0.0
    %196 = vmatpush1.msra.mxu0 0.0
    %197 = vmatprep.subr.mxu0 0.0
    %198 = vmatpush1.msra.mxu0 0.0
    %199 = vmatprep.subr.mxu0 0.0
    %200 = vmatpush1.msra.mxu0 0.0
    %201 = vmatprep.subr.mxu0 0.0
    %202 = vmatpush1.msra.mxu0 0.0
    %203 = vmatprep.subr.mxu0 0.0
    %204 = vmatpush1.msra.mxu0 0.0
    %205 = vmatprep.subr.mxu0 0.0
    %206 = vmatpush1.msra.mxu0 0.0
    %207 = vmatprep.subr.mxu0 0.0
    %208 = vmatpush1.msra.mxu0 0.0
    %209 = vmatprep.subr.mxu0 0.0
    %210 = vmatpush1.msra.mxu0 0.0
    %211 = vmatprep.subr.mxu0 0.0
    %212 = vmatpush1.msra.mxu0 0.0
    %213 = vmatprep.subr.mxu0 0.0
    %214 = vmatpush1.msra.mxu0 0.0
    %215 = vmatprep.subr.mxu0 0.0
    %216 = vmatpush1.msra.mxu0 0.0
    %217 = vmatprep.subr.mxu0 0.0
    %218 = vmatpush1.msra.mxu0 0.0
    %219 = vmatprep.mubr.f32.mxu0 0.0
    %220 = vmatmul.mubr.f32.gmra.mrb[0].mxu0 %v109
    %v221 = vpop.f32.mrb[0].mxu0
    %v222 = vadd.f32 %v154, %v221
    %v223 = vpop.f32.mrb[0].mxu0
    %224 = vmatprep.mubr.f32.mxu0 0.0
    %225 = vmatmul.mubr.f32.gmra.mrb[0].mxu0 %v110
    %v226 = vpop.f32.mrb[0].mxu0
    %v227 = vadd.f32 %v154, %v226
    %v228 = vpop.f32.mrb[0].mxu0
    %229 = vmatprep.mubr.f32.mxu0 0.0
    %230 = vmatmul.mubr.f32.gmra.mrb[0].mxu0 %v111
    %v231 = vpop.f32.mrb[0].mxu0
    %v232 = vadd.f32 %v154, %v231
    %v233 = vpop.f32.mrb[0].mxu0
    %234 = vmatprep.mubr.f32.mxu0 0.0
    %235 = vmatmul.mubr.f32.gmra.mrb[0].mxu0 %v112
    %v236 = vpop.f32.mrb[0].mxu0
    %v237 = vadd.f32 %v154, %v236
    %v238 = vpop.f32.mrb[0].mxu0
    %239 = vmatprep.mubr.f32.mxu0 0.0
    %240 = vmatmul.mubr.f32.gmra.mrb[0].mxu0 %v113
    %v241 = vpop.f32.mrb[0].mxu0
    %v242 = vadd.f32 %v154, %v241
    %v243 = vpop.f32.mrb[0].mxu0
    %244 = vmatprep.mubr.f32.mxu0 0.0
    %245 = vmatmul.mubr.f32.gmra.mrb[0].mxu0 %v114
    %v246 = vpop.f32.mrb[0].mxu0
    %v247 = vadd.f32 %v154, %v246
    %v248 = vpop.f32.mrb[0].mxu0
    %249 = vmatprep.mubr.f32.mxu0 0.0
    %250 = vmatmul.mubr.f32.gmra.mrb[0].mxu0 %v115
    %v251 = vpop.f32.mrb[0].mxu0
    %v252 = vadd.f32 %v154, %v251
    %v253 = vpop.f32.mrb[0].mxu0
    %254 = vmatprep.mubr.f32.mxu0 0.0
    %255 = vmatmul.mubr.f32.gmra.mrb[0].mxu0 %v116
    %v256 = vpop.f32.mrb[0].mxu0
    %v257 = vadd.f32 %v154, %v256
    %v258 = vpop.f32.mrb[0].mxu0
    %259 = vmatprep.mubr.f32.mxu0 0.0
    %260 = vmatmul.mubr.f32.gmra.mrb[0].mxu0 %v117
    %v261 = vpop.f32.mrb[0].mxu0
    %v262 = vadd.f32 %v154, %v261
    %v263 = vpop.f32.mrb[0].mxu0
    %264 = vmatprep.mubr.f32.mxu0 0.0
    %265 = vmatmul.mubr.f32.gmra.mrb[0].mxu0 %v118
    %v266 = vpop.f32.mrb[0].mxu0
    %v267 = vadd.f32 %v154, %v266
    %v268 = vpop.f32.mrb[0].mxu0
    %269 = vmatprep.mubr.f32.mxu0 0.0
    %270 = vmatmul.mubr.f32.gmra.mrb[0].mxu0 %v119
    %v271 = vpop.f32.mrb[0].mxu0
    %v272 = vadd.f32 %v154, %v271
    %v273 = vpop.f32.mrb[0].mxu0
    %274 = vmatprep.mubr.f32.mxu0 0.0
    %275 = vmatmul.mubr.f32.gmra.mrb[0].mxu0 %v120
    %v276 = vpop.f32.mrb[0].mxu0
    %v277 = vadd.f32 %v154, %v276
    %v278 = vpop.f32.mrb[0].mxu0
    %279 = vmatprep.mubr.f32.mxu0 0.0
    %280 = vmatmul.mubr.f32.gmra.mrb[0].mxu0 %v121
    %v281 = vpop.f32.mrb[0].mxu0
    %v282 = vadd.f32 %v154, %v281
    %v283 = vpop.f32.mrb[0].mxu0
    %284 = vmatprep.mubr.f32.mxu0 0.0
    %285 = vmatmul.mubr.f32.gmra.mrb[0].mxu0 %v122
    %v286 = vpop.f32.mrb[0].mxu0
    %v287 = vadd.f32 %v154, %v286
    %v288 = vpop.f32.mrb[0].mxu0
    %289 = vmatprep.mubr.f32.mxu0 0.0
    %290 = vmatmul.mubr.f32.gmra.mrb[0].mxu0 %v123
    %v291 = vpop.f32.mrb[0].mxu0
    %v292 = vadd.f32 %v154, %v291
    %v293 = vpop.f32.mrb[0].mxu0
    %294 = vmatprep.mubr.f32.mxu0 0.0
    %295 = vmatmul.mubr.f32.gmra.mrb[0].mxu0 %v124
    %v296 = vpop.f32.mrb[0].mxu0
    %v297 = vadd.f32 %v154, %v296
    %v298 = vpop.f32.mrb[0].mxu0
    %299 = vmatprep.mubr.f32.mxu0 0.0
    %300 = vmatmul.mubr.f32.gmra.mrb[0].mxu0 %v125
    %v301 = vpop.f32.mrb[0].mxu0
    %v302 = vadd.f32 %v154, %v301
    %v303 = vpop.f32.mrb[0].mxu0
    %304 = vmatprep.mubr.f32.mxu0 0.0
    %305 = vmatmul.mubr.f32.gmra.mrb[0].mxu0 %v126
    %v306 = vpop.f32.mrb[0].mxu0
    %v307 = vadd.f32 %v154, %v306
    %v308 = vpop.f32.mrb[0].mxu0
    %309 = vmatprep.mubr.f32.mxu0 0.0
    %310 = vmatmul.mubr.f32.gmra.mrb[0].mxu0 %v127
    %v311 = vpop.f32.mrb[0].mxu0
    %v312 = vadd.f32 %v154, %v311
    %v313 = vpop.f32.mrb[0].mxu0
    %314 = vmatprep.mubr.f32.mxu0 0.0
    %315 = vmatmul.mubr.f32.gmra.mrb[0].mxu0 %v128
    %v316 = vpop.f32.mrb[0].mxu0
    %v317 = vadd.f32 %v154, %v316
    %v318 = vpop.f32.mrb[0].mxu0
    %319 = vmatprep.mubr.f32.mxu0 0.0
    %320 = vmatmul.mubr.f32.gmra.mrb[0].mxu0 %v129
    %v321 = vpop.f32.mrb[0].mxu0
    %v322 = vadd.f32 %v154, %v321
    %v323 = vpop.f32.mrb[0].mxu0
    %324 = vmatprep.mubr.f32.mxu0 0.0
    %325 = vmatmul.mubr.f32.gmra.mrb[0].mxu0 %v130
    %v326 = vpop.f32.mrb[0].mxu0
    %v327 = vadd.f32 %v154, %v326
    %v328 = vpop.f32.mrb[0].mxu0
    %329 = vmatprep.mubr.f32.mxu0 0.0
    %330 = vmatmul.mubr.f32.gmra.mrb[0].mxu0 %v131
    %v331 = vpop.f32.mrb[0].mxu0
    %v332 = vadd.f32 %v154, %v331
    %v333 = vpop.f32.mrb[0].mxu0
    %334 = vmatprep.mubr.f32.mxu0 0.0
    %335 = vmatmul.mubr.f32.gmra.mrb[0].mxu0 %v132
    %v336 = vpop.f32.mrb[0].mxu0
    %v337 = vadd.f32 %v154, %v336
    %v338 = vpop.f32.mrb[0].mxu0
    %339 = vmatprep.mubr.f32.mxu0 0.0
    %340 = vmatmul.mubr.f32.gmra.mrb[0].mxu0 %v133
    %v341 = vpop.f32.mrb[0].mxu0
    %v342 = vadd.f32 %v154, %v341
    %v343 = vpop.f32.mrb[0].mxu0
    %344 = vdwg.mxu0
    %v345 = vmax.f32 %v222, 0.0
    %v346 = vmax.f32 %v227, 0.0
    %v347 = vmax.f32 %v232, 0.0
    %v348 = vmax.f32 %v237, 0.0
    %v349 = vmax.f32 %v242, 0.0
    %v350 = vmax.f32 %v247, 0.0
    %v351 = vmax.f32 %v252, 0.0
    %v352 = vmax.f32 %v257, 0.0
    %v353 = vmax.f32 %v262, 0.0
    %v354 = vmax.f32 %v267, 0.0
    %v355 = vmax.f32 %v272, 0.0
    %v356 = vmax.f32 %v277, 0.0
    %v357 = vmax.f32 %v282, 0.0
    %v358 = vmax.f32 %v287, 0.0
    %v359 = vmax.f32 %v292, 0.0
    %v360 = vmax.f32 %v297, 0.0
    %v361 = vmax.f32 %v302, 0.0
    %v362 = vmax.f32 %v307, 0.0
    %v363 = vmax.f32 %v312, 0.0
    %v364 = vmax.f32 %v317, 0.0
    %v365 = vmax.f32 %v322, 0.0
    %v366 = vmax.f32 %v327, 0.0
    %v367 = vmax.f32 %v332, 0.0
    %v368 = vmax.f32 %v337, 0.0
    %v369 = vmax.f32 %v342, 0.0
    %v370 = vld [vmem:[#allocation7] sm:$0xff]
    %v371 = vld [vmem:[#allocation7 + $0x8] sm:$0xff]
    %v372 = vld [vmem:[#allocation7 + $0x10] sm:$0xff]
    %v373 = vld [vmem:[#allocation7 + $0x18] sm:$0xff]
    %v374 = vld [vmem:[#allocation7 + $0x20] sm:$0xff]
    %v375 = vld [vmem:[#allocation7 + $0x28] sm:$0xff]
    %v376 = vld [vmem:[#allocation7 + $0x30] sm:$0xff]
    %v377 = vld [vmem:[#allocation7 + $0x38] sm:$0xff]
    %v378 = vld [vmem:[#allocation7 + $0x40] sm:$0xff]
    %v379 = vld [vmem:[#allocation7 + $0x48] sm:$0xff]
    %v380 = vld [vmem:[#allocation7 + $0x50] sm:$0xff]
    %v381 = vld [vmem:[#allocation7 + $0x58] sm:$0xff]
    %v382 = vld [vmem:[#allocation7 + $0x60] sm:$0xff]
    %v383 = vld [vmem:[#allocation7 + $0x68] sm:$0xff]
    %v384 = vld [vmem:[#allocation7 + $0x70] sm:$0xff]
    %v385 = vld [vmem:[#allocation7 + $0x78] sm:$0xff]
    %v386 = vld [vmem:[%s6 + $0x1] sm:$0x1]
    %v387 = vlaneseq
    %v388 = vshrl.u32 %v387, 7
    %v389 = vsub.s32 0, %v388
    %v390 = vrot.slane %v386, %v389
    %391 = vmatprep.subr.mxu0 0.0
    %392 = vmatpush1.msra.mxu0 %v370
    %393 = vmatprep.subr.mxu0 0.0
    %394 = vmatpush1.msra.mxu0 %v371
    %395 = vmatprep.subr.mxu0 0.0
    %396 = vmatpush1.msra.mxu0 %v372
    %397 = vmatprep.subr.mxu0 0.0
    %398 = vmatpush1.msra.mxu0 %v373
    %399 = vmatprep.subr.mxu0 0.0
    %400 = vmatpush1.msra.mxu0 %v374
    %401 = vmatprep.subr.mxu0 0.0
    %402 = vmatpush1.msra.mxu0 %v375
    %403 = vmatprep.subr.mxu0 0.0
    %404 = vmatpush1.msra.mxu0 %v376
    %405 = vmatprep.subr.mxu0 0.0
    %406 = vmatpush1.msra.mxu0 %v377
    %407 = vmatprep.subr.mxu0 0.0
    %408 = vmatpush1.msra.mxu0 %v378
    %409 = vmatprep.subr.mxu0 0.0
    %410 = vmatpush1.msra.mxu0 %v379
    %411 = vmatprep.subr.mxu0 0.0
    %412 = vmatpush1.msra.mxu0 %v380
    %413 = vmatprep.subr.mxu0 0.0
    %414 = vmatpush1.msra.mxu0 %v381
    %415 = vmatprep.subr.mxu0 0.0
    %416 = vmatpush1.msra.mxu0 %v382
    %417 = vmatprep.subr.mxu0 0.0
    %418 = vmatpush1.msra.mxu0 %v383
    %419 = vmatprep.subr.mxu0 0.0
    %420 = vmatpush1.msra.mxu0 %v384
    %421 = vmatprep.subr.mxu0 0.0
    %422 = vmatpush1.msra.mxu0 %v385
    %423 = vmatprep.subr.mxu0 0.0
    %424 = vmatpush1.msra.mxu0 0.0
    %425 = vmatprep.subr.mxu0 0.0
    %426 = vmatpush1.msra.mxu0 0.0
    %427 = vmatprep.subr.mxu0 0.0
    %428 = vmatpush1.msra.mxu0 0.0
    %429 = vmatprep.subr.mxu0 0.0
    %430 = vmatpush1.msra.mxu0 0.0
    %431 = vmatprep.subr.mxu0 0.0
    %432 = vmatpush1.msra.mxu0 0.0
    %433 = vmatprep.subr.mxu0 0.0
    %434 = vmatpush1.msra.mxu0 0.0
    %435 = vmatprep.subr.mxu0 0.0
    %436 = vmatpush1.msra.mxu0 0.0
    %437 = vmatprep.subr.mxu0 0.0
    %438 = vmatpush1.msra.mxu0 0.0
    %439 = vmatprep.subr.mxu0 0.0
    %440 = vmatpush1.msra.mxu0 0.0
    %441 = vmatprep.subr.mxu0 0.0
    %442 = vmatpush1.msra.mxu0 0.0
    %443 = vmatprep.subr.mxu0 0.0
    %444 = vmatpush1.msra.mxu0 0.0
    %445 = vmatprep.subr.mxu0 0.0
    %446 = vmatpush1.msra.mxu0 0.0
    %447 = vmatprep.subr.mxu0 0.0
    %448 = vmatpush1.msra.mxu0 0.0
    %449 = vmatprep.subr.mxu0 0.0
    %450 = vmatpush1.msra.mxu0 0.0
    %451 = vmatprep.subr.mxu0 0.0
    %452 = vmatpush1.msra.mxu0 0.0
    %453 = vmatprep.subr.mxu0 0.0
    %454 = vmatpush1.msra.mxu0 0.0
    %455 = vmatprep.mubr.f32.mxu0 0.0
    %456 = vmatmul.mubr.f32.gmra.mrb[0].mxu0 %v345
    %v457 = vpop.f32.mrb[0].mxu0
    %v458 = vadd.f32 %v390, %v457
    %v459 = vpop.f32.mrb[0].mxu0
    %460 = vmatprep.mubr.f32.mxu0 0.0
    %461 = vmatmul.mubr.f32.gmra.mrb[0].mxu0 %v346
    %v462 = vpop.f32.mrb[0].mxu0
    %v463 = vadd.f32 %v390, %v462
    %v464 = vpop.f32.mrb[0].mxu0
    %465 = vmatprep.mubr.f32.mxu0 0.0
    %466 = vmatmul.mubr.f32.gmra.mrb[0].mxu0 %v347
    %v467 = vpop.f32.mrb[0].mxu0
    %v468 = vadd.f32 %v390, %v467
    %v469 = vpop.f32.mrb[0].mxu0
    %470 = vmatprep.mubr.f32.mxu0 0.0
    %471 = vmatmul.mubr.f32.gmra.mrb[0].mxu0 %v348
    %v472 = vpop.f32.mrb[0].mxu0
    %v473 = vadd.f32 %v390, %v472
    %v474 = vpop.f32.mrb[0].mxu0
    %475 = vmatprep.mubr.f32.mxu0 0.0
    %476 = vmatmul.mubr.f32.gmra.mrb[0].mxu0 %v349
    %v477 = vpop.f32.mrb[0].mxu0
    %v478 = vadd.f32 %v390, %v477
    %v479 = vpop.f32.mrb[0].mxu0
    %480 = vmatprep.mubr.f32.mxu0 0.0
    %481 = vmatmul.mubr.f32.gmra.mrb[0].mxu0 %v350
    %v482 = vpop.f32.mrb[0].mxu0
    %v483 = vadd.f32 %v390, %v482
    %v484 = vpop.f32.mrb[0].mxu0
    %485 = vmatprep.mubr.f32.mxu0 0.0
    %486 = vmatmul.mubr.f32.gmra.mrb[0].mxu0 %v351
    %v487 = vpop.f32.mrb[0].mxu0
    %v488 = vadd.f32 %v390, %v487
    %v489 = vpop.f32.mrb[0].mxu0
    %490 = vmatprep.mubr.f32.mxu0 0.0
    %491 = vmatmul.mubr.f32.gmra.mrb[0].mxu0 %v352
    %v492 = vpop.f32.mrb[0].mxu0
    %v493 = vadd.f32 %v390, %v492
    %v494 = vpop.f32.mrb[0].mxu0
    %495 = vmatprep.mubr.f32.mxu0 0.0
    %496 = vmatmul.mubr.f32.gmra.mrb[0].mxu0 %v353
    %v497 = vpop.f32.mrb[0].mxu0
    %v498 = vadd.f32 %v390, %v497
    %v499 = vpop.f32.mrb[0].mxu0
    %500 = vmatprep.mubr.f32.mxu0 0.0
    %501 = vmatmul.mubr.f32.gmra.mrb[0].mxu0 %v354
    %v502 = vpop.f32.mrb[0].mxu0
    %v503 = vadd.f32 %v390, %v502
    %v504 = vpop.f32.mrb[0].mxu0
    %505 = vmatprep.mubr.f32.mxu0 0.0
    %506 = vmatmul.mubr.f32.gmra.mrb[0].mxu0 %v355
    %v507 = vpop.f32.mrb[0].mxu0
    %v508 = vadd.f32 %v390, %v507
    %v509 = vpop.f32.mrb[0].mxu0
    %510 = vmatprep.mubr.f32.mxu0 0.0
    %511 = vmatmul.mubr.f32.gmra.mrb[0].mxu0 %v356
    %v512 = vpop.f32.mrb[0].mxu0
    %v513 = vadd.f32 %v390, %v512
    %v514 = vpop.f32.mrb[0].mxu0
    %515 = vmatprep.mubr.f32.mxu0 0.0
    %516 = vmatmul.mubr.f32.gmra.mrb[0].mxu0 %v357
    %v517 = vpop.f32.mrb[0].mxu0
    %v518 = vadd.f32 %v390, %v517
    %v519 = vpop.f32.mrb[0].mxu0
    %520 = vmatprep.mubr.f32.mxu0 0.0
    %521 = vmatmul.mubr.f32.gmra.mrb[0].mxu0 %v358
    %v522 = vpop.f32.mrb[0].mxu0
    %v523 = vadd.f32 %v390, %v522
    %v524 = vpop.f32.mrb[0].mxu0
    %525 = vmatprep.mubr.f32.mxu0 0.0
    %526 = vmatmul.mubr.f32.gmra.mrb[0].mxu0 %v359
    %v527 = vpop.f32.mrb[0].mxu0
    %v528 = vadd.f32 %v390, %v527
    %v529 = vpop.f32.mrb[0].mxu0
    %530 = vmatprep.mubr.f32.mxu0 0.0
    %531 = vmatmul.mubr.f32.gmra.mrb[0].mxu0 %v360
    %v532 = vpop.f32.mrb[0].mxu0
    %v533 = vadd.f32 %v390, %v532
    %v534 = vpop.f32.mrb[0].mxu0
    %535 = vmatprep.mubr.f32.mxu0 0.0
    %536 = vmatmul.mubr.f32.gmra.mrb[0].mxu0 %v361
    %v537 = vpop.f32.mrb[0].mxu0
    %v538 = vadd.f32 %v390, %v537
    %v539 = vpop.f32.mrb[0].mxu0
    %540 = vmatprep.mubr.f32.mxu0 0.0
    %541 = vmatmul.mubr.f32.gmra.mrb[0].mxu0 %v362
    %v542 = vpop.f32.mrb[0].mxu0
    %v543 = vadd.f32 %v390, %v542
    %v544 = vpop.f32.mrb[0].mxu0
    %545 = vmatprep.mubr.f32.mxu0 0.0
    %546 = vmatmul.mubr.f32.gmra.mrb[0].mxu0 %v363
    %v547 = vpop.f32.mrb[0].mxu0
    %v548 = vadd.f32 %v390, %v547
    %v549 = vpop.f32.mrb[0].mxu0
    %550 = vmatprep.mubr.f32.mxu0 0.0
    %551 = vmatmul.mubr.f32.gmra.mrb[0].mxu0 %v364
    %v552 = vpop.f32.mrb[0].mxu0
    %v553 = vadd.f32 %v390, %v552
    %v554 = vpop.f32.mrb[0].mxu0
    %555 = vmatprep.mubr.f32.mxu0 0.0
    %556 = vmatmul.mubr.f32.gmra.mrb[0].mxu0 %v365
    %v557 = vpop.f32.mrb[0].mxu0
    %v558 = vadd.f32 %v390, %v557
    %v559 = vpop.f32.mrb[0].mxu0
    %560 = vmatprep.mubr.f32.mxu0 0.0
    %561 = vmatmul.mubr.f32.gmra.mrb[0].mxu0 %v366
    %v562 = vpop.f32.mrb[0].mxu0
    %v563 = vadd.f32 %v390, %v562
    %v564 = vpop.f32.mrb[0].mxu0
    %565 = vmatprep.mubr.f32.mxu0 0.0
    %566 = vmatmul.mubr.f32.gmra.mrb[0].mxu0 %v367
    %v567 = vpop.f32.mrb[0].mxu0
    %v568 = vadd.f32 %v390, %v567
    %v569 = vpop.f32.mrb[0].mxu0
    %570 = vmatprep.mubr.f32.mxu0 0.0
    %571 = vmatmul.mubr.f32.gmra.mrb[0].mxu0 %v368
    %v572 = vpop.f32.mrb[0].mxu0
    %v573 = vadd.f32 %v390, %v572
    %v574 = vpop.f32.mrb[0].mxu0
    %575 = vmatprep.mubr.f32.mxu0 0.0
    %576 = vmatmul.mubr.f32.gmra.mrb[0].mxu0 %v369
    %v577 = vpop.f32.mrb[0].mxu0
    %v578 = vadd.f32 %v390, %v577
    %v579 = vpop.f32.mrb[0].mxu0
    %580 = vdwg.mxu0
    %v581 = vmax.f32 %v458, 0.0
    %v582 = vmax.f32 %v463, 0.0
    %v583 = vmax.f32 %v468, 0.0
    %v584 = vmax.f32 %v473, 0.0
    %v585 = vmax.f32 %v478, 0.0
    %v586 = vmax.f32 %v483, 0.0
    %v587 = vmax.f32 %v488, 0.0
    %v588 = vmax.f32 %v493, 0.0
    %v589 = vmax.f32 %v498, 0.0
    %v590 = vmax.f32 %v503, 0.0
    %v591 = vmax.f32 %v508, 0.0
    %v592 = vmax.f32 %v513, 0.0
    %v593 = vmax.f32 %v518, 0.0
    %v594 = vmax.f32 %v523, 0.0
    %v595 = vmax.f32 %v528, 0.0
    %v596 = vmax.f32 %v533, 0.0
    %v597 = vmax.f32 %v538, 0.0
    %v598 = vmax.f32 %v543, 0.0
    %v599 = vmax.f32 %v548, 0.0
    %v600 = vmax.f32 %v553, 0.0
    %v601 = vmax.f32 %v558, 0.0
    %v602 = vmax.f32 %v563, 0.0
    %v603 = vmax.f32 %v568, 0.0
    %v604 = vmax.f32 %v573, 0.0
    %v605 = vmax.f32 %v578, 0.0
    %v606 = vld [vmem:[#allocation8] sm:$0xff]
    %v607 = vld [vmem:[#allocation8 + $0x8] sm:$0xff]
    %v608 = vld [vmem:[#allocation8 + $0x10] sm:$0xff]
    %v609 = vld [vmem:[#allocation8 + $0x18] sm:$0xff]
    %v610 = vld [vmem:[#allocation8 + $0x20] sm:$0xff]
    %v611 = vld [vmem:[#allocation8 + $0x28] sm:$0xff]
    %v612 = vld [vmem:[#allocation8 + $0x30] sm:$0xff]
    %v613 = vld [vmem:[#allocation8 + $0x38] sm:$0xff]
    %v614 = vld [vmem:[#allocation8 + $0x40] sm:$0xff]
    %v615 = vld [vmem:[#allocation8 + $0x48] sm:$0xff]
    %v616 = vld [vmem:[#allocation8 + $0x50] sm:$0xff]
    %v617 = vld [vmem:[#allocation8 + $0x58] sm:$0xff]
    %v618 = vld [vmem:[#allocation8 + $0x60] sm:$0xff]
    %v619 = vld [vmem:[#allocation8 + $0x68] sm:$0xff]
    %v620 = vld [vmem:[#allocation8 + $0x70] sm:$0xff]
    %v621 = vld [vmem:[#allocation8 + $0x78] sm:$0xff]
    %v622 = vld [vmem:[%s6 + $0x2] sm:$0x1]
    %v623 = vlaneseq
    %v624 = vshrl.u32 %v623, 7
    %v625 = vsub.s32 0, %v624
    %v626 = vrot.slane %v622, %v625
    %627 = vmatprep.subr.mxu0 0.0
    %628 = vmatpush1.msra.mxu0 %v606
    %629 = vmatprep.subr.mxu0 0.0
    %630 = vmatpush1.msra.mxu0 %v607
    %631 = vmatprep.subr.mxu0 0.0
    %632 = vmatpush1.msra.mxu0 %v608
    %633 = vmatprep.subr.mxu0 0.0
    %634 = vmatpush1.msra.mxu0 %v609
    %635 = vmatprep.subr.mxu0 0.0
    %636 = vmatpush1.msra.mxu0 %v610
    %637 = vmatprep.subr.mxu0 0.0
    %638 = vmatpush1.msra.mxu0 %v611
    %639 = vmatprep.subr.mxu0 0.0
    %640 = vmatpush1.msra.mxu0 %v612
    %641 = vmatprep.subr.mxu0 0.0
    %642 = vmatpush1.msra.mxu0 %v613
    %643 = vmatprep.subr.mxu0 0.0
    %644 = vmatpush1.msra.mxu0 %v614
    %645 = vmatprep.subr.mxu0 0.0
    %646 = vmatpush1.msra.mxu0 %v615
    %647 = vmatprep.subr.mxu0 0.0
    %648 = vmatpush1.msra.mxu0 %v616
    %649 = vmatprep.subr.mxu0 0.0
    %650 = vmatpush1.msra.mxu0 %v617
    %651 = vmatprep.subr.mxu0 0.0
    %652 = vmatpush1.msra.mxu0 %v618
    %653 = vmatprep.subr.mxu0 0.0
    %654 = vmatpush1.msra.mxu0 %v619
    %655 = vmatprep.subr.mxu0 0.0
    %656 = vmatpush1.msra.mxu0 %v620
    %657 = vmatprep.subr.mxu0 0.0
    %658 = vmatpush1.msra.mxu0 %v621
    %659 = vmatprep.subr.mxu0 0.0
    %660 = vmatpush1.msra.mxu0 0.0
    %661 = vmatprep.subr.mxu0 0.0
    %662 = vmatpush1.msra.mxu0 0.0
    %663 = vmatprep.subr.mxu0 0.0
    %664 = vmatpush1.msra.mxu0 0.0
    %665 = vmatprep.subr.mxu0 0.0
    %666 = vmatpush1.msra.mxu0 0.0
    %667 = vmatprep.subr.mxu0 0.0
    %668 = vmatpush1.msra.mxu0 0.0
    %669 = vmatprep.subr.mxu0 0.0
    %670 = vmatpush1.msra.mxu0 0.0
    %671 = vmatprep.subr.mxu0 0.0
    %672 = vmatpush1.msra.mxu0 0.0
    %673 = vmatprep.subr.mxu0 0.0
    %674 = vmatpush1.msra.mxu0 0.0
    %675 = vmatprep.subr.mxu0 0.0
    %676 = vmatpush1.msra.mxu0 0.0
    %677 = vmatprep.subr.mxu0 0.0
    %678 = vmatpush1.msra.mxu0 0.0
    %679 = vmatprep.subr.mxu0 0.0
    %680 = vmatpush1.msra.mxu0 0.0
    %681 = vmatprep.subr.mxu0 0.0
    %682 = vmatpush1.msra.mxu0 0.0
    %683 = vmatprep.subr.mxu0 0.0
    %684 = vmatpush1.msra.mxu0 0.0
    %685 = vmatprep.subr.mxu0 0.0
    %686 = vmatpush1.msra.mxu0 0.0
    %687 = vmatprep.subr.mxu0 0.0
    %688 = vmatpush1.msra.mxu0 0.0
    %689 = vmatprep.subr.mxu0 0.0
    %690 = vmatpush1.msra.mxu0 0.0
    %691 = vmatprep.mubr.f32.mxu0 0.0
    %692 = vmatmul.mubr.f32.gmra.mrb[0].mxu0 %v581
    %v693 = vpop.f32.mrb[0].mxu0
    %v694 = vadd.f32 %v626, %v693
    %v695 = vpop.f32.mrb[0].mxu0
    %696 = vmatprep.mubr.f32.mxu0 0.0
    %697 = vmatmul.mubr.f32.gmra.mrb[0].mxu0 %v582
    %v698 = vpop.f32.mrb[0].mxu0
    %v699 = vadd.f32 %v626, %v698
    %v700 = vpop.f32.mrb[0].mxu0
    %701 = vmatprep.mubr.f32.mxu0 0.0
    %702 = vmatmul.mubr.f32.gmra.mrb[0].mxu0 %v583
    %v703 = vpop.f32.mrb[0].mxu0
    %v704 = vadd.f32 %v626, %v703
    %v705 = vpop.f32.mrb[0].mxu0
    %706 = vmatprep.mubr.f32.mxu0 0.0
    %707 = vmatmul.mubr.f32.gmra.mrb[0].mxu0 %v584
    %v708 = vpop.f32.mrb[0].mxu0
    %v709 = vadd.f32 %v626, %v708
    %v710 = vpop.f32.mrb[0].mxu0
    %711 = vmatprep.mubr.f32.mxu0 0.0
    %712 = vmatmul.mubr.f32.gmra.mrb[0].mxu0 %v585
    %v713 = vpop.f32.mrb[0].mxu0
    %v714 = vadd.f32 %v626, %v713
    %v715 = vpop.f32.mrb[0].mxu0
    %716 = vmatprep.mubr.f32.mxu0 0.0
    %717 = vmatmul.mubr.f32.gmra.mrb[0].mxu0 %v586
    %v718 = vpop.f32.mrb[0].mxu0
    %v719 = vadd.f32 %v626, %v718
    %v720 = vpop.f32.mrb[0].mxu0
    %721 = vmatprep.mubr.f32.mxu0 0.0
    %722 = vmatmul.mubr.f32.gmra.mrb[0].mxu0 %v587
    %v723 = vpop.f32.mrb[0].mxu0
    %v724 = vadd.f32 %v626, %v723
    %v725 = vpop.f32.mrb[0].mxu0
    %726 = vmatprep.mubr.f32.mxu0 0.0
    %727 = vmatmul.mubr.f32.gmra.mrb[0].mxu0 %v588
    %v728 = vpop.f32.mrb[0].mxu0
    %v729 = vadd.f32 %v626, %v728
    %v730 = vpop.f32.mrb[0].mxu0
    %731 = vmatprep.mubr.f32.mxu0 0.0
    %732 = vmatmul.mubr.f32.gmra.mrb[0].mxu0 %v589
    %v733 = vpop.f32.mrb[0].mxu0
    %v734 = vadd.f32 %v626, %v733
    %v735 = vpop.f32.mrb[0].mxu0
    %736 = vmatprep.mubr.f32.mxu0 0.0
    %737 = vmatmul.mubr.f32.gmra.mrb[0].mxu0 %v590
    %v738 = vpop.f32.mrb[0].mxu0
    %v739 = vadd.f32 %v626, %v738
    %v740 = vpop.f32.mrb[0].mxu0
    %741 = vmatprep.mubr.f32.mxu0 0.0
    %742 = vmatmul.mubr.f32.gmra.mrb[0].mxu0 %v591
    %v743 = vpop.f32.mrb[0].mxu0
    %v744 = vadd.f32 %v626, %v743
    %v745 = vpop.f32.mrb[0].mxu0
    %746 = vmatprep.mubr.f32.mxu0 0.0
    %747 = vmatmul.mubr.f32.gmra.mrb[0].mxu0 %v592
    %v748 = vpop.f32.mrb[0].mxu0
    %v749 = vadd.f32 %v626, %v748
    %v750 = vpop.f32.mrb[0].mxu0
    %751 = vmatprep.mubr.f32.mxu0 0.0
    %752 = vmatmul.mubr.f32.gmra.mrb[0].mxu0 %v593
    %v753 = vpop.f32.mrb[0].mxu0
    %v754 = vadd.f32 %v626, %v753
    %v755 = vpop.f32.mrb[0].mxu0
    %756 = vmatprep.mubr.f32.mxu0 0.0
    %757 = vmatmul.mubr.f32.gmra.mrb[0].mxu0 %v594
    %v758 = vpop.f32.mrb[0].mxu0
    %v759 = vadd.f32 %v626, %v758
    %v760 = vpop.f32.mrb[0].mxu0
    %761 = vmatprep.mubr.f32.mxu0 0.0
    %762 = vmatmul.mubr.f32.gmra.mrb[0].mxu0 %v595
    %v763 = vpop.f32.mrb[0].mxu0
    %v764 = vadd.f32 %v626, %v763
    %v765 = vpop.f32.mrb[0].mxu0
    %766 = vmatprep.mubr.f32.mxu0 0.0
    %767 = vmatmul.mubr.f32.gmra.mrb[0].mxu0 %v596
    %v768 = vpop.f32.mrb[0].mxu0
    %v769 = vadd.f32 %v626, %v768
    %v770 = vpop.f32.mrb[0].mxu0
    %771 = vmatprep.mubr.f32.mxu0 0.0
    %772 = vmatmul.mubr.f32.gmra.mrb[0].mxu0 %v597
    %v773 = vpop.f32.mrb[0].mxu0
    %v774 = vadd.f32 %v626, %v773
    %v775 = vpop.f32.mrb[0].mxu0
    %776 = vmatprep.mubr.f32.mxu0 0.0
    %777 = vmatmul.mubr.f32.gmra.mrb[0].mxu0 %v598
    %v778 = vpop.f32.mrb[0].mxu0
    %v779 = vadd.f32 %v626, %v778
    %v780 = vpop.f32.mrb[0].mxu0
    %781 = vmatprep.mubr.f32.mxu0 0.0
    %782 = vmatmul.mubr.f32.gmra.mrb[0].mxu0 %v599
    %v783 = vpop.f32.mrb[0].mxu0
    %v784 = vadd.f32 %v626, %v783
    %v785 = vpop.f32.mrb[0].mxu0
    %786 = vmatprep.mubr.f32.mxu0 0.0
    %787 = vmatmul.mubr.f32.gmra.mrb[0].mxu0 %v600
    %v788 = vpop.f32.mrb[0].mxu0
    %v789 = vadd.f32 %v626, %v788
    %v790 = vpop.f32.mrb[0].mxu0
    %791 = vmatprep.mubr.f32.mxu0 0.0
    %792 = vmatmul.mubr.f32.gmra.mrb[0].mxu0 %v601
    %v793 = vpop.f32.mrb[0].mxu0
    %v794 = vadd.f32 %v626, %v793
    %v795 = vpop.f32.mrb[0].mxu0
    %796 = vmatprep.mubr.f32.mxu0 0.0
    %797 = vmatmul.mubr.f32.gmra.mrb[0].mxu0 %v602
    %v798 = vpop.f32.mrb[0].mxu0
    %v799 = vadd.f32 %v626, %v798
    %v800 = vpop.f32.mrb[0].mxu0
    %801 = vmatprep.mubr.f32.mxu0 0.0
    %802 = vmatmul.mubr.f32.gmra.mrb[0].mxu0 %v603
    %v803 = vpop.f32.mrb[0].mxu0
    %v804 = vadd.f32 %v626, %v803
    %v805 = vpop.f32.mrb[0].mxu0
    %806 = vmatprep.mubr.f32.mxu0 0.0
    %807 = vmatmul.mubr.f32.gmra.mrb[0].mxu0 %v604
    %v808 = vpop.f32.mrb[0].mxu0
    %v809 = vadd.f32 %v626, %v808
    %v810 = vpop.f32.mrb[0].mxu0
    %811 = vmatprep.mubr.f32.mxu0 0.0
    %812 = vmatmul.mubr.f32.gmra.mrb[0].mxu0 %v605
    %v813 = vpop.f32.mrb[0].mxu0
    %v814 = vadd.f32 %v626, %v813
    %v815 = vpop.f32.mrb[0].mxu0
    %816 = vdwg.mxu0
    %v817 = vmax.f32 %v694, 0.0
    %v818 = vmax.f32 %v699, 0.0
    %v819 = vmax.f32 %v704, 0.0
    %v820 = vmax.f32 %v709, 0.0
    %v821 = vmax.f32 %v714, 0.0
    %v822 = vmax.f32 %v719, 0.0
    %v823 = vmax.f32 %v724, 0.0
    %v824 = vmax.f32 %v729, 0.0
    %v825 = vmax.f32 %v734, 0.0
    %v826 = vmax.f32 %v739, 0.0
    %v827 = vmax.f32 %v744, 0.0
    %v828 = vmax.f32 %v749, 0.0
    %v829 = vmax.f32 %v754, 0.0
    %v830 = vmax.f32 %v759, 0.0
    %v831 = vmax.f32 %v764, 0.0
    %v832 = vmax.f32 %v769, 0.0
    %v833 = vmax.f32 %v774, 0.0
    %v834 = vmax.f32 %v779, 0.0
    %v835 = vmax.f32 %v784, 0.0
    %v836 = vmax.f32 %v789, 0.0
    %v837 = vmax.f32 %v794, 0.0
    %v838 = vmax.f32 %v799, 0.0
    %v839 = vmax.f32 %v804, 0.0
    %v840 = vmax.f32 %v809, 0.0
    %v841 = vmax.f32 %v814, 0.0
    %v842 = vld [vmem:[#allocation10] sm:$0xff]
    %v843 = vld [vmem:[#allocation10 + $0x8] sm:$0xff]
    %v844 = vld [vmem:[#allocation10 + $0x10] sm:$0xff]
    %v845 = vld [vmem:[#allocation10 + $0x18] sm:$0xff]
    %v846 = vld [vmem:[#allocation10 + $0x20] sm:$0xff]
    %v847 = vld [vmem:[#allocation10 + $0x28] sm:$0xff]
    %v848 = vld [vmem:[#allocation10 + $0x30] sm:$0xff]
    %v849 = vld [vmem:[#allocation10 + $0x38] sm:$0xff]
    %v850 = vld [vmem:[#allocation10 + $0x40] sm:$0xff]
    %v851 = vld [vmem:[#allocation10 + $0x48] sm:$0xff]
    %v852 = vld [vmem:[#allocation10 + $0x50] sm:$0xff]
    %v853 = vld [vmem:[#allocation10 + $0x58] sm:$0xff]
    %v854 = vld [vmem:[#allocation10 + $0x60] sm:$0xff]
    %v855 = vld [vmem:[#allocation10 + $0x68] sm:$0xff]
    %v856 = vld [vmem:[#allocation10 + $0x70] sm:$0xff]
    %v857 = vld [vmem:[#allocation10 + $0x78] sm:$0xff]
    %v858 = vld [vmem:[%s6 + $0x3] sm:$0x1]
    %v859 = vlaneseq
    %v860 = vshrl.u32 %v859, 7
    %v861 = vsub.s32 0, %v860
    %v862 = vrot.slane %v858, %v861
    %863 = vmatprep.subr.mxu0 0.0
    %864 = vmatpush1.msra.mxu0 %v842
    %865 = vmatprep.subr.mxu0 0.0
    %866 = vmatpush1.msra.mxu0 %v843
    %867 = vmatprep.subr.mxu0 0.0
    %868 = vmatpush1.msra.mxu0 %v844
    %869 = vmatprep.subr.mxu0 0.0
    %870 = vmatpush1.msra.mxu0 %v845
    %871 = vmatprep.subr.mxu0 0.0
    %872 = vmatpush1.msra.mxu0 %v846
    %873 = vmatprep.subr.mxu0 0.0
    %874 = vmatpush1.msra.mxu0 %v847
    %875 = vmatprep.subr.mxu0 0.0
    %876 = vmatpush1.msra.mxu0 %v848
    %877 = vmatprep.subr.mxu0 0.0
    %878 = vmatpush1.msra.mxu0 %v849
    %879 = vmatprep.subr.mxu0 0.0
    %880 = vmatpush1.msra.mxu0 %v850
    %881 = vmatprep.subr.mxu0 0.0
    %882 = vmatpush1.msra.mxu0 %v851
    %883 = vmatprep.subr.mxu0 0.0
    %884 = vmatpush1.msra.mxu0 %v852
    %885 = vmatprep.subr.mxu0 0.0
    %886 = vmatpush1.msra.mxu0 %v853
    %887 = vmatprep.subr.mxu0 0.0
    %888 = vmatpush1.msra.mxu0 %v854
    %889 = vmatprep.subr.mxu0 0.0
    %890 = vmatpush1.msra.mxu0 %v855
    %891 = vmatprep.subr.mxu0 0.0
    %892 = vmatpush1.msra.mxu0 %v856
    %893 = vmatprep.subr.mxu0 0.0
    %894 = vmatpush1.msra.mxu0 %v857
    %895 = vmatprep.subr.mxu0 0.0
    %896 = vmatpush1.msra.mxu0 0.0
    %897 = vmatprep.subr.mxu0 0.0
    %898 = vmatpush1.msra.mxu0 0.0
    %899 = vmatprep.subr.mxu0 0.0
    %900 = vmatpush1.msra.mxu0 0.0
    %901 = vmatprep.subr.mxu0 0.0
    %902 = vmatpush1.msra.mxu0 0.0
    %903 = vmatprep.subr.mxu0 0.0
    %904 = vmatpush1.msra.mxu0 0.0
    %905 = vmatprep.subr.mxu0 0.0
    %906 = vmatpush1.msra.mxu0 0.0
    %907 = vmatprep.subr.mxu0 0.0
    %908 = vmatpush1.msra.mxu0 0.0
    %909 = vmatprep.subr.mxu0 0.0
    %910 = vmatpush1.msra.mxu0 0.0
    %911 = vmatprep.subr.mxu0 0.0
    %912 = vmatpush1.msra.mxu0 0.0
    %913 = vmatprep.subr.mxu0 0.0
    %914 = vmatpush1.msra.mxu0 0.0
    %915 = vmatprep.subr.mxu0 0.0
    %916 = vmatpush1.msra.mxu0 0.0
    %917 = vmatprep.subr.mxu0 0.0
    %918 = vmatpush1.msra.mxu0 0.0
    %919 = vmatprep.subr.mxu0 0.0
    %920 = vmatpush1.msra.mxu0 0.0
    %921 = vmatprep.subr.mxu0 0.0
    %922 = vmatpush1.msra.mxu0 0.0
    %923 = vmatprep.subr.mxu0 0.0
    %924 = vmatpush1.msra.mxu0 0.0
    %925 = vmatprep.subr.mxu0 0.0
    %926 = vmatpush1.msra.mxu0 0.0
    %927 = vmatprep.mubr.f32.mxu0 0.0
    %928 = vmatmul.mubr.f32.gmra.mrb[0].mxu0 %v817
    %v929 = vpop.f32.mrb[0].mxu0
    %v930 = vadd.f32 %v862, %v929
    %v931 = vpop.f32.mrb[0].mxu0
    %932 = vmatprep.mubr.f32.mxu0 0.0
    %933 = vmatmul.mubr.f32.gmra.mrb[0].mxu0 %v818
    %v934 = vpop.f32.mrb[0].mxu0
    %v935 = vadd.f32 %v862, %v934
    %v936 = vpop.f32.mrb[0].mxu0
    %937 = vmatprep.mubr.f32.mxu0 0.0
    %938 = vmatmul.mubr.f32.gmra.mrb[0].mxu0 %v819
    %v939 = vpop.f32.mrb[0].mxu0
    %v940 = vadd.f32 %v862, %v939
    %v941 = vpop.f32.mrb[0].mxu0
    %942 = vmatprep.mubr.f32.mxu0 0.0
    %943 = vmatmul.mubr.f32.gmra.mrb[0].mxu0 %v820
    %v944 = vpop.f32.mrb[0].mxu0
    %v945 = vadd.f32 %v862, %v944
    %v946 = vpop.f32.mrb[0].mxu0
    %947 = vmatprep.mubr.f32.mxu0 0.0
    %948 = vmatmul.mubr.f32.gmra.mrb[0].mxu0 %v821
    %v949 = vpop.f32.mrb[0].mxu0
    %v950 = vadd.f32 %v862, %v949
    %v951 = vpop.f32.mrb[0].mxu0
    %952 = vmatprep.mubr.f32.mxu0 0.0
    %953 = vmatmul.mubr.f32.gmra.mrb[0].mxu0 %v822
    %v954 = vpop.f32.mrb[0].mxu0
    %v955 = vadd.f32 %v862, %v954
    %v956 = vpop.f32.mrb[0].mxu0
    %957 = vmatprep.mubr.f32.mxu0 0.0
    %958 = vmatmul.mubr.f32.gmra.mrb[0].mxu0 %v823
    %v959 = vpop.f32.mrb[0].mxu0
    %v960 = vadd.f32 %v862, %v959
    %v961 = vpop.f32.mrb[0].mxu0
    %962 = vmatprep.mubr.f32.mxu0 0.0
    %963 = vmatmul.mubr.f32.gmra.mrb[0].mxu0 %v824
    %v964 = vpop.f32.mrb[0].mxu0
    %v965 = vadd.f32 %v862, %v964
    %v966 = vpop.f32.mrb[0].mxu0
    %967 = vmatprep.mubr.f32.mxu0 0.0
    %968 = vmatmul.mubr.f32.gmra.mrb[0].mxu0 %v825
    %v969 = vpop.f32.mrb[0].mxu0
    %v970 = vadd.f32 %v862, %v969
    %v971 = vpop.f32.mrb[0].mxu0
    %972 = vmatprep.mubr.f32.mxu0 0.0
    %973 = vmatmul.mubr.f32.gmra.mrb[0].mxu0 %v826
    %v974 = vpop.f32.mrb[0].mxu0
    %v975 = vadd.f32 %v862, %v974
    %v976 = vpop.f32.mrb[0].mxu0
    %977 = vmatprep.mubr.f32.mxu0 0.0
    %978 = vmatmul.mubr.f32.gmra.mrb[0].mxu0 %v827
    %v979 = vpop.f32.mrb[0].mxu0
    %v980 = vadd.f32 %v862, %v979
    %v981 = vpop.f32.mrb[0].mxu0
    %982 = vmatprep.mubr.f32.mxu0 0.0
    %983 = vmatmul.mubr.f32.gmra.mrb[0].mxu0 %v828
    %v984 = vpop.f32.mrb[0].mxu0
    %v985 = vadd.f32 %v862, %v984
    %v986 = vpop.f32.mrb[0].mxu0
    %987 = vmatprep.mubr.f32.mxu0 0.0
    %988 = vmatmul.mubr.f32.gmra.mrb[0].mxu0 %v829
    %v989 = vpop.f32.mrb[0].mxu0
    %v990 = vadd.f32 %v862, %v989
    %v991 = vpop.f32.mrb[0].mxu0
    %992 = vmatprep.mubr.f32.mxu0 0.0
    %993 = vmatmul.mubr.f32.gmra.mrb[0].mxu0 %v830
    %v994 = vpop.f32.mrb[0].mxu0
    %v995 = vadd.f32 %v862, %v994
    %v996 = vpop.f32.mrb[0].mxu0
    %997 = vmatprep.mubr.f32.mxu0 0.0
    %998 = vmatmul.mubr.f32.gmra.mrb[0].mxu0 %v831
    %v999 = vpop.f32.mrb[0].mxu0
    %v1000 = vadd.f32 %v862, %v999
    %v1001 = vpop.f32.mrb[0].mxu0
    %1002 = vmatprep.mubr.f32.mxu0 0.0
    %1003 = vmatmul.mubr.f32.gmra.mrb[0].mxu0 %v832
    %v1004 = vpop.f32.mrb[0].mxu0
    %v1005 = vadd.f32 %v862, %v1004
    %v1006 = vpop.f32.mrb[0].mxu0
    %1007 = vmatprep.mubr.f32.mxu0 0.0
    %1008 = vmatmul.mubr.f32.gmra.mrb[0].mxu0 %v833
    %v1009 = vpop.f32.mrb[0].mxu0
    %v1010 = vadd.f32 %v862, %v1009
    %v1011 = vpop.f32.mrb[0].mxu0
    %1012 = vmatprep.mubr.f32.mxu0 0.0
    %1013 = vmatmul.mubr.f32.gmra.mrb[0].mxu0 %v834
    %v1014 = vpop.f32.mrb[0].mxu0
    %v1015 = vadd.f32 %v862, %v1014
    %v1016 = vpop.f32.mrb[0].mxu0
    %1017 = vmatprep.mubr.f32.mxu0 0.0
    %1018 = vmatmul.mubr.f32.gmra.mrb[0].mxu0 %v835
    %v1019 = vpop.f32.mrb[0].mxu0
    %v1020 = vadd.f32 %v862, %v1019
    %v1021 = vpop.f32.mrb[0].mxu0
    %1022 = vmatprep.mubr.f32.mxu0 0.0
    %1023 = vmatmul.mubr.f32.gmra.mrb[0].mxu0 %v836
    %v1024 = vpop.f32.mrb[0].mxu0
    %v1025 = vadd.f32 %v862, %v1024
    %v1026 = vpop.f32.mrb[0].mxu0
    %1027 = vmatprep.mubr.f32.mxu0 0.0
    %1028 = vmatmul.mubr.f32.gmra.mrb[0].mxu0 %v837
    %v1029 = vpop.f32.mrb[0].mxu0
    %v1030 = vadd.f32 %v862, %v1029
    %v1031 = vpop.f32.mrb[0].mxu0
    %1032 = vmatprep.mubr.f32.mxu0 0.0
    %1033 = vmatmul.mubr.f32.gmra.mrb[0].mxu0 %v838
    %v1034 = vpop.f32.mrb[0].mxu0
    %v1035 = vadd.f32 %v862, %v1034
    %v1036 = vpop.f32.mrb[0].mxu0
    %1037 = vmatprep.mubr.f32.mxu0 0.0
    %1038 = vmatmul.mubr.f32.gmra.mrb[0].mxu0 %v839
    %v1039 = vpop.f32.mrb[0].mxu0
    %v1040 = vadd.f32 %v862, %v1039
    %v1041 = vpop.f32.mrb[0].mxu0
    %1042 = vmatprep.mubr.f32.mxu0 0.0
    %1043 = vmatmul.mubr.f32.gmra.mrb[0].mxu0 %v840
    %v1044 = vpop.f32.mrb[0].mxu0
    %v1045 = vadd.f32 %v862, %v1044
    %v1046 = vpop.f32.mrb[0].mxu0
    %1047 = vmatprep.mubr.f32.mxu0 0.0
    %1048 = vmatmul.mubr.f32.gmra.mrb[0].mxu0 %v841
    %v1049 = vpop.f32.mrb[0].mxu0
    %v1050 = vadd.f32 %v862, %v1049
    %v1051 = vpop.f32.mrb[0].mxu0
    %1052 = vdwg.mxu0
    %v1053 = vmax.f32 %v930, 0.0
    %v1054 = vmax.f32 %v935, 0.0
    %v1055 = vmax.f32 %v940, 0.0
    %v1056 = vmax.f32 %v945, 0.0
    %v1057 = vmax.f32 %v950, 0.0
    %v1058 = vmax.f32 %v955, 0.0
    %v1059 = vmax.f32 %v960, 0.0
    %v1060 = vmax.f32 %v965, 0.0
    %v1061 = vmax.f32 %v970, 0.0
    %v1062 = vmax.f32 %v975, 0.0
    %v1063 = vmax.f32 %v980, 0.0
    %v1064 = vmax.f32 %v985, 0.0
    %v1065 = vmax.f32 %v990, 0.0
    %v1066 = vmax.f32 %v995, 0.0
    %v1067 = vmax.f32 %v1000, 0.0
    %v1068 = vmax.f32 %v1005, 0.0
    %v1069 = vmax.f32 %v1010, 0.0
    %v1070 = vmax.f32 %v1015, 0.0
    %v1071 = vmax.f32 %v1020, 0.0
    %v1072 = vmax.f32 %v1025, 0.0
    %v1073 = vmax.f32 %v1030, 0.0
    %v1074 = vmax.f32 %v1035, 0.0
    %v1075 = vmax.f32 %v1040, 0.0
    %v1076 = vmax.f32 %v1045, 0.0
    %v1077 = vmax.f32 %v1050, 0.0
    %v1078 = vld [vmem:[#allocation11] sm:$0xff]
    %v1079 = vld [vmem:[#allocation11 + $0x8] sm:$0xff]
    %v1080 = vld [vmem:[#allocation11 + $0x10] sm:$0xff]
    %v1081 = vld [vmem:[#allocation11 + $0x18] sm:$0xff]
    %v1082 = vld [vmem:[#allocation11 + $0x20] sm:$0xff]
    %v1083 = vld [vmem:[#allocation11 + $0x28] sm:$0xff]
    %v1084 = vld [vmem:[#allocation11 + $0x30] sm:$0xff]
    %v1085 = vld [vmem:[#allocation11 + $0x38] sm:$0xff]
    %v1086 = vld [vmem:[#allocation11 + $0x40] sm:$0xff]
    %v1087 = vld [vmem:[#allocation11 + $0x48] sm:$0xff]
    %v1088 = vld [vmem:[#allocation11 + $0x50] sm:$0xff]
    %v1089 = vld [vmem:[#allocation11 + $0x58] sm:$0xff]
    %v1090 = vld [vmem:[#allocation11 + $0x60] sm:$0xff]
    %v1091 = vld [vmem:[#allocation11 + $0x68] sm:$0xff]
    %v1092 = vld [vmem:[#allocation11 + $0x70] sm:$0xff]
    %v1093 = vld [vmem:[#allocation11 + $0x78] sm:$0xff]
    %v1094 = vld [vmem:[%s6 + $0x4] sm:$0x1]
    %v1095 = vlaneseq
    %v1096 = vshrl.u32 %v1095, 7
    %v1097 = vsub.s32 0, %v1096
    %v1098 = vrot.slane %v1094, %v1097
    %1099 = vmatprep.subr.mxu0 0.0
    %1100 = vmatpush1.msra.mxu0 %v1078
    %1101 = vmatprep.subr.mxu0 0.0
    %1102 = vmatpush1.msra.mxu0 %v1079
    %1103 = vmatprep.subr.mxu0 0.0
    %1104 = vmatpush1.msra.mxu0 %v1080
    %1105 = vmatprep.subr.mxu0 0.0
    %1106 = vmatpush1.msra.mxu0 %v1081
    %1107 = vmatprep.subr.mxu0 0.0
    %1108 = vmatpush1.msra.mxu0 %v1082
    %1109 = vmatprep.subr.mxu0 0.0
    %1110 = vmatpush1.msra.mxu0 %v1083
    %1111 = vmatprep.subr.mxu0 0.0
    %1112 = vmatpush1.msra.mxu0 %v1084
    %1113 = vmatprep.subr.mxu0 0.0
    %1114 = vmatpush1.msra.mxu0 %v1085
    %1115 = vmatprep.subr.mxu0 0.0
    %1116 = vmatpush1.msra.mxu0 %v1086
    %1117 = vmatprep.subr.mxu0 0.0
    %1118 = vmatpush1.msra.mxu0 %v1087
    %1119 = vmatprep.subr.mxu0 0.0
    %1120 = vmatpush1.msra.mxu0 %v1088
    %1121 = vmatprep.subr.mxu0 0.0
    %1122 = vmatpush1.msra.mxu0 %v1089
    %1123 = vmatprep.subr.mxu0 0.0
    %1124 = vmatpush1.msra.mxu0 %v1090
    %1125 = vmatprep.subr.mxu0 0.0
    %1126 = vmatpush1.msra.mxu0 %v1091
    %1127 = vmatprep.subr.mxu0 0.0
    %1128 = vmatpush1.msra.mxu0 %v1092
    %1129 = vmatprep.subr.mxu0 0.0
    %1130 = vmatpush1.msra.mxu0 %v1093
    %1131 = vmatprep.subr.mxu0 0.0
    %1132 = vmatpush1.msra.mxu0 0.0
    %1133 = vmatprep.subr.mxu0 0.0
    %1134 = vmatpush1.msra.mxu0 0.0
    %1135 = vmatprep.subr.mxu0 0.0
    %1136 = vmatpush1.msra.mxu0 0.0
    %1137 = vmatprep.subr.mxu0 0.0
    %1138 = vmatpush1.msra.mxu0 0.0
    %1139 = vmatprep.subr.mxu0 0.0
    %1140 = vmatpush1.msra.mxu0 0.0
    %1141 = vmatprep.subr.mxu0 0.0
    %1142 = vmatpush1.msra.mxu0 0.0
    %1143 = vmatprep.subr.mxu0 0.0
    %1144 = vmatpush1.msra.mxu0 0.0
    %1145 = vmatprep.subr.mxu0 0.0
    %1146 = vmatpush1.msra.mxu0 0.0
    %1147 = vmatprep.subr.mxu0 0.0
    %1148 = vmatpush1.msra.mxu0 0.0
    %1149 = vmatprep.subr.mxu0 0.0
    %1150 = vmatpush1.msra.mxu0 0.0
    %1151 = vmatprep.subr.mxu0 0.0
    %1152 = vmatpush1.msra.mxu0 0.0
    %1153 = vmatprep.subr.mxu0 0.0
    %1154 = vmatpush1.msra.mxu0 0.0
    %1155 = vmatprep.subr.mxu0 0.0
    %1156 = vmatpush1.msra.mxu0 0.0
    %1157 = vmatprep.subr.mxu0 0.0
    %1158 = vmatpush1.msra.mxu0 0.0
    %1159 = vmatprep.subr.mxu0 0.0
    %1160 = vmatpush1.msra.mxu0 0.0
    %1161 = vmatprep.subr.mxu0 0.0
    %1162 = vmatpush1.msra.mxu0 0.0
    %1163 = vmatprep.mubr.f32.mxu0 0.0
    %1164 = vmatmul.mubr.f32.gmra.mrb[0].mxu0 %v1053
    %v1165 = vpop.f32.mrb[0].mxu0
    %v1166 = vadd.f32 %v1098, %v1165
    %v1167 = vpop.f32.mrb[0].mxu0
    %1168 = vmatprep.mubr.f32.mxu0 0.0
    %1169 = vmatmul.mubr.f32.gmra.mrb[0].mxu0 %v1054
    %v1170 = vpop.f32.mrb[0].mxu0
    %v1171 = vadd.f32 %v1098, %v1170
    %v1172 = vpop.f32.mrb[0].mxu0
    %1173 = vmatprep.mubr.f32.mxu0 0.0
    %1174 = vmatmul.mubr.f32.gmra.mrb[0].mxu0 %v1055
    %v1175 = vpop.f32.mrb[0].mxu0
    %v1176 = vadd.f32 %v1098, %v1175
    %v1177 = vpop.f32.mrb[0].mxu0
    %1178 = vmatprep.mubr.f32.mxu0 0.0
    %1179 = vmatmul.mubr.f32.gmra.mrb[0].mxu0 %v1056
    %v1180 = vpop.f32.mrb[0].mxu0
    %v1181 = vadd.f32 %v1098, %v1180
    %v1182 = vpop.f32.mrb[0].mxu0
    %1183 = vmatprep.mubr.f32.mxu0 0.0
    %1184 = vmatmul.mubr.f32.gmra.mrb[0].mxu0 %v1057
    %v1185 = vpop.f32.mrb[0].mxu0
    %v1186 = vadd.f32 %v1098, %v1185
    %v1187 = vpop.f32.mrb[0].mxu0
    %1188 = vmatprep.mubr.f32.mxu0 0.0
    %1189 = vmatmul.mubr.f32.gmra.mrb[0].mxu0 %v1058
    %v1190 = vpop.f32.mrb[0].mxu0
    %v1191 = vadd.f32 %v1098, %v1190
    %v1192 = vpop.f32.mrb[0].mxu0
    %1193 = vmatprep.mubr.f32.mxu0 0.0
    %1194 = vmatmul.mubr.f32.gmra.mrb[0].mxu0 %v1059
    %v1195 = vpop.f32.mrb[0].mxu0
    %v1196 = vadd.f32 %v1098, %v1195
    %v1197 = vpop.f32.mrb[0].mxu0
    %1198 = vmatprep.mubr.f32.mxu0 0.0
    %1199 = vmatmul.mubr.f32.gmra.mrb[0].mxu0 %v1060
    %v1200 = vpop.f32.mrb[0].mxu0
    %v1201 = vadd.f32 %v1098, %v1200
    %v1202 = vpop.f32.mrb[0].mxu0
    %1203 = vmatprep.mubr.f32.mxu0 0.0
    %1204 = vmatmul.mubr.f32.gmra.mrb[0].mxu0 %v1061
    %v1205 = vpop.f32.mrb[0].mxu0
    %v1206 = vadd.f32 %v1098, %v1205
    %v1207 = vpop.f32.mrb[0].mxu0
    %1208 = vmatprep.mubr.f32.mxu0 0.0
    %1209 = vmatmul.mubr.f32.gmra.mrb[0].mxu0 %v1062
    %v1210 = vpop.f32.mrb[0].mxu0
    %v1211 = vadd.f32 %v1098, %v1210
    %v1212 = vpop.f32.mrb[0].mxu0
    %1213 = vmatprep.mubr.f32.mxu0 0.0
    %1214 = vmatmul.mubr.f32.gmra.mrb[0].mxu0 %v1063
    %v1215 = vpop.f32.mrb[0].mxu0
    %v1216 = vadd.f32 %v1098, %v1215
    %v1217 = vpop.f32.mrb[0].mxu0
    %1218 = vmatprep.mubr.f32.mxu0 0.0
    %1219 = vmatmul.mubr.f32.gmra.mrb[0].mxu0 %v1064
    %v1220 = vpop.f32.mrb[0].mxu0
    %v1221 = vadd.f32 %v1098, %v1220
    %v1222 = vpop.f32.mrb[0].mxu0
    %1223 = vmatprep.mubr.f32.mxu0 0.0
    %1224 = vmatmul.mubr.f32.gmra.mrb[0].mxu0 %v1065
    %v1225 = vpop.f32.mrb[0].mxu0
    %v1226 = vadd.f32 %v1098, %v1225
    %v1227 = vpop.f32.mrb[0].mxu0
    %1228 = vmatprep.mubr.f32.mxu0 0.0
    %1229 = vmatmul.mubr.f32.gmra.mrb[0].mxu0 %v1066
    %v1230 = vpop.f32.mrb[0].mxu0
    %v1231 = vadd.f32 %v1098, %v1230
    %v1232 = vpop.f32.mrb[0].mxu0
    %1233 = vmatprep.mubr.f32.mxu0 0.0
    %1234 = vmatmul.mubr.f32.gmra.mrb[0].mxu0 %v1067
    %v1235 = vpop.f32.mrb[0].mxu0
    %v1236 = vadd.f32 %v1098, %v1235
    %v1237 = vpop.f32.mrb[0].mxu0
    %1238 = vmatprep.mubr.f32.mxu0 0.0
    %1239 = vmatmul.mubr.f32.gmra.mrb[0].mxu0 %v1068
    %v1240 = vpop.f32.mrb[0].mxu0
    %v1241 = vadd.f32 %v1098, %v1240
    %v1242 = vpop.f32.mrb[0].mxu0
    %1243 = vmatprep.mubr.f32.mxu0 0.0
    %1244 = vmatmul.mubr.f32.gmra.mrb[0].mxu0 %v1069
    %v1245 = vpop.f32.mrb[0].mxu0
    %v1246 = vadd.f32 %v1098, %v1245
    %v1247 = vpop.f32.mrb[0].mxu0
    %1248 = vmatprep.mubr.f32.mxu0 0.0
    %1249 = vmatmul.mubr.f32.gmra.mrb[0].mxu0 %v1070
    %v1250 = vpop.f32.mrb[0].mxu0
    %v1251 = vadd.f32 %v1098, %v1250
    %v1252 = vpop.f32.mrb[0].mxu0
    %1253 = vmatprep.mubr.f32.mxu0 0.0
    %1254 = vmatmul.mubr.f32.gmra.mrb[0].mxu0 %v1071
    %v1255 = vpop.f32.mrb[0].mxu0
    %v1256 = vadd.f32 %v1098, %v1255
    %v1257 = vpop.f32.mrb[0].mxu0
    %1258 = vmatprep.mubr.f32.mxu0 0.0
    %1259 = vmatmul.mubr.f32.gmra.mrb[0].mxu0 %v1072
    %v1260 = vpop.f32.mrb[0].mxu0
    %v1261 = vadd.f32 %v1098, %v1260
    %v1262 = vpop.f32.mrb[0].mxu0
    %1263 = vmatprep.mubr.f32.mxu0 0.0
    %1264 = vmatmul.mubr.f32.gmra.mrb[0].mxu0 %v1073
    %v1265 = vpop.f32.mrb[0].mxu0
    %v1266 = vadd.f32 %v1098, %v1265
    %v1267 = vpop.f32.mrb[0].mxu0
    %1268 = vmatprep.mubr.f32.mxu0 0.0
    %1269 = vmatmul.mubr.f32.gmra.mrb[0].mxu0 %v1074
    %v1270 = vpop.f32.mrb[0].mxu0
    %v1271 = vadd.f32 %v1098, %v1270
    %v1272 = vpop.f32.mrb[0].mxu0
    %1273 = vmatprep.mubr.f32.mxu0 0.0
    %1274 = vmatmul.mubr.f32.gmra.mrb[0].mxu0 %v1075
    %v1275 = vpop.f32.mrb[0].mxu0
    %v1276 = vadd.f32 %v1098, %v1275
    %v1277 = vpop.f32.mrb[0].mxu0
    %1278 = vmatprep.mubr.f32.mxu0 0.0
    %1279 = vmatmul.mubr.f32.gmra.mrb[0].mxu0 %v1076
    %v1280 = vpop.f32.mrb[0].mxu0
    %v1281 = vadd.f32 %v1098, %v1280
    %v1282 = vpop.f32.mrb[0].mxu0
    %1283 = vmatprep.mubr.f32.mxu0 0.0
    %1284 = vmatmul.mubr.f32.gmra.mrb[0].mxu0 %v1077
    %v1285 = vpop.f32.mrb[0].mxu0
    %v1286 = vadd.f32 %v1098, %v1285
    %v1287 = vpop.f32.mrb[0].mxu0
    %1288 = vdwg.mxu0
    %1289 = vst [vmem:[#allocation13] sm:$0xff] %v1166
    %1290 = vst [vmem:[#allocation13 + $0x8] sm:$0xff] %v1171
    %1291 = vst [vmem:[#allocation13 + $0x10] sm:$0xff] %v1176
    %1292 = vst [vmem:[#allocation13 + $0x18] sm:$0xff] %v1181
    %1293 = vst [vmem:[#allocation13 + $0x20] sm:$0xff] %v1186
    %1294 = vst [vmem:[#allocation13 + $0x28] sm:$0xff] %v1191
    %1295 = vst [vmem:[#allocation13 + $0x30] sm:$0xff] %v1196
    %1296 = vst [vmem:[#allocation13 + $0x38] sm:$0xff] %v1201
    %1297 = vst [vmem:[#allocation13 + $0x40] sm:$0xff] %v1206
    %1298 = vst [vmem:[#allocation13 + $0x48] sm:$0xff] %v1211
    %1299 = vst [vmem:[#allocation13 + $0x50] sm:$0xff] %v1216
    %1300 = vst [vmem:[#allocation13 + $0x58] sm:$0xff] %v1221
    %1301 = vst [vmem:[#allocation13 + $0x60] sm:$0xff] %v1226
    %1302 = vst [vmem:[#allocation13 + $0x68] sm:$0xff] %v1231
    %1303 = vst [vmem:[#allocation13 + $0x70] sm:$0xff] %v1236
    %1304 = vst [vmem:[#allocation13 + $0x78] sm:$0xff] %v1241
    %1305 = vst [vmem:[#allocation13 + $0x80] sm:$0xff] %v1246
    %1306 = vst [vmem:[#allocation13 + $0x88] sm:$0xff] %v1251
    %1307 = vst [vmem:[#allocation13 + $0x90] sm:$0xff] %v1256
    %1308 = vst [vmem:[#allocation13 + $0x98] sm:$0xff] %v1261
    %1309 = vst [vmem:[#allocation13 + $0xa0] sm:$0xff] %v1266
    %1310 = vst [vmem:[#allocation13 + $0xa8] sm:$0xff] %v1271
    %1311 = vst [vmem:[#allocation13 + $0xb0] sm:$0xff] %v1276
    %1312 = vst [vmem:[#allocation13 + $0xb8] sm:$0xff] %v1281
    %1313 = vst [vmem:[#allocation13 + $0xc0] sm:$0xff] %v1286
    // Predicated region
    $region54: #{tpu_custom_call.1} parent=1 // pred_check
      _
    $region55: #{tpu_custom_call.1} parent=1 // pred_check_branch
      %1315 = sbr.rel (0) target = $region57
    $region56: #{tpu_custom_call.1} parent=1 // pred_region
      %s1317 = ssub.s32 3200, 3200
      %1318 = vsyncadd [#allocation4], %s1317
      %s1319 = sshll.u32 [#allocation13], 4
      %s1320 = int_to_ptr.vmem [resolvable:$true] %s1319
      %1325 = dma.vmem_to_hbm [thread:$0]  %s1320, 3200, %s7, [#allocation4], 128, 128, 8
    $region57: #{tpu_custom_call.1} parent=1 // pred_fallthru
      _
    // Predicated region
    $region58: #{tpu_custom_call.1} parent=1 // pred_check
      _
    $region59: #{tpu_custom_call.1} parent=1 // pred_check_branch
      %1327 = sbr.rel (0) target = $region61
    $region60: #{tpu_custom_call.1} parent=1 // pred_region
      %1328 = dma.done [#allocation4], 3200
    $region61: #{tpu_custom_call.1} parent=1 // pred_fallthru
      _
    %1329 = vsyncpa [#allocation3], 1
    %1330 = vsyncpa [#allocation6], 1
    %1331 = vsyncpa [#allocation9], 1
    %1332 = vsyncpa [#allocation12], 1
    %1333 = vsyncpa [#allocation4], 1

// kernel: tpu_custom_call.1
$region0: #{tpu_custom_call.1}
  #allocation0 [shape = 'u32[]', space=smem, size = 0x4, offset = 0x4, fixed_abs, tag = 'smem constant byte address 0x4 - core index']
  #allocation1 [shape = 'u32[144,128]{1,0:T(1,128)}', space=vmem, size = 0x12000, scoped, tag = 'internal scratch']
  %s0 = inlined_call_operand.hbm [shape: f32[200,128], index: 0, kind: input, shape index: {}]
  %s1 = inlined_call_operand.hbm [shape: f32[128,128], index: 1, kind: input, shape index: {}]
  %s2 = inlined_call_operand.hbm [shape: f32[128,128], index: 2, kind: input, shape index: {}]
  %s3 = inlined_call_operand.hbm [shape: f32[128,128], index: 3, kind: input, shape index: {}]
  %s4 = inlined_call_operand.hbm [shape: f32[128,128], index: 4, kind: input, shape index: {}]
  %s5 = inlined_call_operand.hbm [shape: f32[128,128], index: 5, kind: input, shape index: {}]
  %s6 = inlined_call_operand.vmem [shape: f32[8,128], index: 6, kind: input, shape index: {}]
  %s7 = inlined_call_operand.hbm [shape: f32[200,128], index: 7, kind: output, shape index: {}]
  %s8 = sld [smem:[#allocation0]]
  $region62: #{tpu_custom_call.1} parent=0
    _
  %s10 = ssub.s32 1, %s8
  %s11 = scalar_select 0, %s10, %s8
  $region1: #{tpu_custom_call.1} parent=0
    #allocation2 [shape = 'u8[102400]{0}', space=vmem, size = 0x19000, scoped, tag = 'input window, operand 0, single buffered']
    #allocation3 [shape = 's32[1]{0}', space=sflag, size = 0x4, scoped, tag = 'scoped memory for tpu_custom_call.1']
    #allocation4 [shape = 's32[1]{0}', space=sflag, size = 0x4, scoped, tag = 'scoped memory for tpu_custom_call.1']
    #allocation5 [shape = 'u8[65536]{0}', space=vmem, size = 0x10000, scoped, tag = 'input window, operand 1, single buffered']
    #allocation6 [shape = 's32[1]{0}', space=sflag, size = 0x4, scoped, tag = 'scoped memory for tpu_custom_call.1']
    #allocation7 [shape = 'u8[65536]{0}', space=vmem, size = 0x10000, scoped, tag = 'input window, operand 2, single buffered']
    #allocation8 [shape = 'u8[65536]{0}', space=vmem, size = 0x10000, scoped, tag = 'input window, operand 3, single buffered']
    #allocation9 [shape = 's32[1]{0}', space=sflag, size = 0x4, scoped, tag = 'scoped memory for tpu_custom_call.1']
    #allocation10 [shape = 'u8[65536]{0}', space=vmem, size = 0x10000, scoped, tag = 'input window, operand 4, single buffered']
    #allocation11 [shape = 'u8[65536]{0}', space=vmem, size = 0x10000, scoped, tag = 'input window, operand 5, single buffered']
    #allocation12 [shape = 's32[1]{0}', space=sflag, size = 0x4, scoped, tag = 'scoped memory for tpu_custom_call.1']
    #allocation13 [shape = 'u8[102400]{0}', space=vmem, size = 0x19000, scoped, tag = 'output window, operand 0, single buffered']
    %12 = vsyncpa [#allocation3], 0
    %13 = vsyncpa [#allocation6], 0
    %14 = vsyncpa [#allocation9], 0
    %15 = vsyncpa [#allocation12], 0
    %16 = vsyncpa [#allocation4], 0
    // Predicated region
    $region2: #{tpu_custom_call.1} parent=1 // pred_check
      _
    $region3: #{tpu_custom_call.1} parent=1 // pred_check_branch
      %18 = sbr.rel (0) target = $region5
    $region4: #{tpu_custom_call.1} parent=1 // pred_region
      %s20 = ssub.s32 3200, 3200
      %21 = vsyncadd [#allocation3], %s20
      %s22 = sshll.u32 [#allocation2], 4
      %s23 = int_to_ptr.vmem [resolvable:$true] %s22
      %28 = dma.hbm_to_vmem [thread:$0]  %s0, 3200, %s23, [#allocation3], 128, 128, 8
    $region5: #{tpu_custom_call.1} parent=1 // pred_fallthru
      _
    // Predicated region
    $region6: #{tpu_custom_call.1} parent=1 // pred_check
      _
    $region7: #{tpu_custom_call.1} parent=1 // pred_check_branch
      %30 = sbr.rel (0) target = $region9
    $region8: #{tpu_custom_call.1} parent=1 // pred_region
      %s32 = ssub.s32 2048, 2048
      %33 = vsyncadd [#allocation6], %s32
      %s34 = sshll.u32 [#allocation5], 4
      %s35 = int_to_ptr.vmem [resolvable:$true] %s34
      %40 = dma.hbm_to_vmem [thread:$0]  %s1, 2048, %s35, [#allocation6], 128, 128, 8
    $region9: #{tpu_custom_call.1} parent=1 // pred_fallthru
      _
    // Predicated region
    $region10: #{tpu_custom_call.1} parent=1 // pred_check
      _
    $region11: #{tpu_custom_call.1} parent=1 // pred_check_branch
      %42 = sbr.rel (0) target = $region13
    $region12: #{tpu_custom_call.1} parent=1 // pred_region
      %s44 = ssub.s32 2048, 2048
      %45 = vsyncadd [#allocation6], %s44
      %s46 = sshll.u32 [#allocation7], 4
      %s47 = int_to_ptr.vmem [resolvable:$true] %s46
      %52 = dma.hbm_to_vmem [thread:$0]  %s2, 2048, %s47, [#allocation6], 128, 128, 8
    $region13: #{tpu_custom_call.1} parent=1 // pred_fallthru
      _
    // Predicated region
    $region14: #{tpu_custom_call.1} parent=1 // pred_check
      _
    $region15: #{tpu_custom_call.1} parent=1 // pred_check_branch
      %54 = sbr.rel (0) target = $region17
    $region16: #{tpu_custom_call.1} parent=1 // pred_region
      %s56 = ssub.s32 2048, 2048
      %57 = vsyncadd [#allocation9], %s56
      %s58 = sshll.u32 [#allocation8], 4
      %s59 = int_to_ptr.vmem [resolvable:$true] %s58
      %64 = dma.hbm_to_vmem [thread:$0]  %s3, 2048, %s59, [#allocation9], 128, 128, 8
    $region17: #{tpu_custom_call.1} parent=1 // pred_fallthru
      _
    // Predicated region
    $region18: #{tpu_custom_call.1} parent=1 // pred_check
      _
    $region19: #{tpu_custom_call.1} parent=1 // pred_check_branch
      %66 = sbr.rel (0) target = $region21
    $region20: #{tpu_custom_call.1} parent=1 // pred_region
      %s68 = ssub.s32 2048, 2048
      %69 = vsyncadd [#allocation9], %s68
      %s70 = sshll.u32 [#allocation10], 4
      %s71 = int_to_ptr.vmem [resolvable:$true] %s70
      %76 = dma.hbm_to_vmem [thread:$0]  %s4, 2048, %s71, [#allocation9], 128, 128, 8
    $region21: #{tpu_custom_call.1} parent=1 // pred_fallthru
      _
    // Predicated region
    $region22: #{tpu_custom_call.1} parent=1 // pred_check
      _
    $region23: #{tpu_custom_call.1} parent=1 // pred_check_branch
      %78 = sbr.rel (0) target = $region25
    $region24: #{tpu_custom_call.1} parent=1 // pred_region
      %s80 = ssub.s32 2048, 2048
      %81 = vsyncadd [#allocation12], %s80
      %s82 = sshll.u32 [#allocation11], 4
      %s83 = int_to_ptr.vmem [resolvable:$true] %s82
      %88 = dma.hbm_to_vmem [thread:$0]  %s5, 2048, %s83, [#allocation12], 128, 128, 8
    $region25: #{tpu_custom_call.1} parent=1 // pred_fallthru
      _
    // Predicated region
    $region26: #{tpu_custom_call.1} parent=1 // pred_check
      _
    $region27: #{tpu_custom_call.1} parent=1 // pred_check_branch
      %90 = sbr.rel (0) target = $region29
    $region28: #{tpu_custom_call.1} parent=1 // pred_region
      _
    $region29: #{tpu_custom_call.1} parent=1 // pred_fallthru
      _
    // Predicated region
    $region30: #{tpu_custom_call.1} parent=1 // pred_check
      _
    $region31: #{tpu_custom_call.1} parent=1 // pred_check_branch
      %92 = sbr.rel (0) target = $region33
    $region32: #{tpu_custom_call.1} parent=1 // pred_region
      %93 = dma.done [#allocation3], 3200
    $region33: #{tpu_custom_call.1} parent=1 // pred_fallthru
      _
    // Predicated region
    $region34: #{tpu_custom_call.1} parent=1 // pred_check
      _
    $region35: #{tpu_custom_call.1} parent=1 // pred_check_branch
      %95 = sbr.rel (0) target = $region37
    $region36: #{tpu_custom_call.1} parent=1 // pred_region
      %96 = dma.done [#allocation6], 2048
    $region37: #{tpu_custom_call.1} parent=1 // pred_fallthru
      _
    // Predicated region
    $region38: #{tpu_custom_call.1} parent=1 // pred_check
      _
    $region39: #{tpu_custom_call.1} parent=1 // pred_check_branch
      %98 = sbr.rel (0) target = $region41
    $region40: #{tpu_custom_call.1} parent=1 // pred_region
      %99 = dma.done [#allocation6], 2048
    $region41: #{tpu_custom_call.1} parent=1 // pred_fallthru
      _
    // Predicated region
    $region42: #{tpu_custom_call.1} parent=1 // pred_check
      _
    $region43: #{tpu_custom_call.1} parent=1 // pred_check_branch
      %101 = sbr.rel (0) target = $region45
    $region44: #{tpu_custom_call.1} parent=1 // pred_region
      %102 = dma.done [#allocation9], 2048
    $region45: #{tpu_custom_call.1} parent=1 // pred_fallthru
      _
    // Predicated region
    $region46: #{tpu_custom_call.1} parent=1 // pred_check
      _
    $region47: #{tpu_custom_call.1} parent=1 // pred_check_branch
      %104 = sbr.rel (0) target = $region49
    $region48: #{tpu_custom_call.1} parent=1 // pred_region
      %105 = dma.done [#allocation9], 2048
    $region49: #{tpu_custom_call.1} parent=1 // pred_fallthru
      _
    // Predicated region
    $region50: #{tpu_custom_call.1} parent=1 // pred_check
      _
    $region51: #{tpu_custom_call.1} parent=1 // pred_check_branch
      %107 = sbr.rel (0) target = $region53
    $region52: #{tpu_custom_call.1} parent=1 // pred_region
      %108 = dma.done [#allocation12], 2048
    $region53: #{tpu_custom_call.1} parent=1 // pred_fallthru
      _
    %v109 = vld [vmem:[#allocation2] sm:$0xff]
    %v110 = vld [vmem:[#allocation2 + $0x8] sm:$0xff]
    %v111 = vld [vmem:[#allocation2 + $0x10] sm:$0xff]
    %v112 = vld [vmem:[#allocation2 + $0x18] sm:$0xff]
    %v113 = vld [vmem:[#allocation2 + $0x20] sm:$0xff]
    %v114 = vld [vmem:[#allocation2 + $0x28] sm:$0xff]
    %v115 = vld [vmem:[#allocation2 + $0x30] sm:$0xff]
    %v116 = vld [vmem:[#allocation2 + $0x38] sm:$0xff]
    %v117 = vld [vmem:[#allocation2 + $0x40] sm:$0xff]
    %v118 = vld [vmem:[#allocation2 + $0x48] sm:$0xff]
    %v119 = vld [vmem:[#allocation2 + $0x50] sm:$0xff]
    %v120 = vld [vmem:[#allocation2 + $0x58] sm:$0xff]
    %v121 = vld [vmem:[#allocation2 + $0x60] sm:$0xff]
    %v122 = vld [vmem:[#allocation2 + $0x68] sm:$0xff]
    %v123 = vld [vmem:[#allocation2 + $0x70] sm:$0xff]
    %v124 = vld [vmem:[#allocation2 + $0x78] sm:$0xff]
    %v125 = vld [vmem:[#allocation2 + $0x80] sm:$0xff]
    %v126 = vld [vmem:[#allocation2 + $0x88] sm:$0xff]
    %v127 = vld [vmem:[#allocation2 + $0x90] sm:$0xff]
    %v128 = vld [vmem:[#allocation2 + $0x98] sm:$0xff]
    %v129 = vld [vmem:[#allocation2 + $0xa0] sm:$0xff]
    %v130 = vld [vmem:[#allocation2 + $0xa8] sm:$0xff]
    %v131 = vld [vmem:[#allocation2 + $0xb0] sm:$0xff]
    %v132 = vld [vmem:[#allocation2 + $0xb8] sm:$0xff]
    %v133 = vld [vmem:[#allocation2 + $0xc0] sm:$0xff]
    %v134 = vld [vmem:[#allocation5] sm:$0xff]
    %v135 = vld [vmem:[#allocation5 + $0x8] sm:$0xff]
    %v136 = vld [vmem:[#allocation5 + $0x10] sm:$0xff]
    %v137 = vld [vmem:[#allocation5 + $0x18] sm:$0xff]
    %v138 = vld [vmem:[#allocation5 + $0x20] sm:$0xff]
    %v139 = vld [vmem:[#allocation5 + $0x28] sm:$0xff]
    %v140 = vld [vmem:[#allocation5 + $0x30] sm:$0xff]
    %v141 = vld [vmem:[#allocation5 + $0x38] sm:$0xff]
    %v142 = vld [vmem:[#allocation5 + $0x40] sm:$0xff]
    %v143 = vld [vmem:[#allocation5 + $0x48] sm:$0xff]
    %v144 = vld [vmem:[#allocation5 + $0x50] sm:$0xff]
    %v145 = vld [vmem:[#allocation5 + $0x58] sm:$0xff]
    %v146 = vld [vmem:[#allocation5 + $0x60] sm:$0xff]
    %v147 = vld [vmem:[#allocation5 + $0x68] sm:$0xff]
    %v148 = vld [vmem:[#allocation5 + $0x70] sm:$0xff]
    %v149 = vld [vmem:[#allocation5 + $0x78] sm:$0xff]
    %v150 = vld [vmem:[%s6] sm:$0x1]
    %v151 = vlaneseq
    %v152 = vshrl.u32 %v151, 7
    %v153 = vsub.s32 0, %v152
    %v154 = vrot.slane %v150, %v153
    %155 = vmatprep.subr.mxu0 0.0
    %156 = vmatpush1.msra.mxu0 %v134
    %157 = vmatprep.subr.mxu0 0.0
    %158 = vmatpush1.msra.mxu0 %v135
    %159 = vmatprep.subr.mxu0 0.0
    %160 = vmatpush1.msra.mxu0 %v136
    %161 = vmatprep.subr.mxu0 0.0
    %162 = vmatpush1.msra.mxu0 %v137
    %163 = vmatprep.subr.mxu0 0.0
    %164 = vmatpush1.msra.mxu0 %v138
    %165 = vmatprep.subr.mxu0 0.0
    %166 = vmatpush1.msra.mxu0 %v139
    %167 = vmatprep.subr.mxu0 0.0
    %168 = vmatpush1.msra.mxu0 %v140
    %169 = vmatprep.subr.mxu0 0.0
    %170 = vmatpush1.msra.mxu0 %v141
    %171 = vmatprep.subr.mxu0 0.0
    %172 = vmatpush1.msra.mxu0 %v142
    %173 = vmatprep.subr.mxu0 0.0
    %174 = vmatpush1.msra.mxu0 %v143
    %175 = vmatprep.subr.mxu0 0.0
    %176 = vmatpush1.msra.mxu0 %v144
    %177 = vmatprep.subr.mxu0 0.0
    %178 = vmatpush1.msra.mxu0 %v145
    %179 = vmatprep.subr.mxu0 0.0
    %180 = vmatpush1.msra.mxu0 %v146
    %181 = vmatprep.subr.mxu0 0.0
    %182 = vmatpush1.msra.mxu0 %v147
    %183 = vmatprep.subr.mxu0 0.0
    %184 = vmatpush1.msra.mxu0 %v148
    %185 = vmatprep.subr.mxu0 0.0
    %186 = vmatpush1.msra.mxu0 %v149
    %187 = vmatprep.subr.mxu0 0.0
    %188 = vmatpush1.msra.mxu0 0.0
    %189 = vmatprep.subr.mxu0 0.0
    %190 = vmatpush1.msra.mxu0 0.0
    %191 = vmatprep.subr.mxu0 0.0
    %192 = vmatpush1.msra.mxu0 0.0
    %193 = vmatprep.subr.mxu0 0.0
    %194 = vmatpush1.msra.mxu0 0.0
    %195 = vmatprep.subr.mxu0 0.0
    %196 = vmatpush1.msra.mxu0 0.0
    %197 = vmatprep.subr.mxu0 0.0
    %198 = vmatpush1.msra.mxu0 0.0
    %199 = vmatprep.subr.mxu0 0.0
    %200 = vmatpush1.msra.mxu0 0.0
    %201 = vmatprep.subr.mxu0 0.0
    %202 = vmatpush1.msra.mxu0 0.0
    %203 = vmatprep.subr.mxu0 0.0
    %204 = vmatpush1.msra.mxu0 0.0
    %205 = vmatprep.subr.mxu0 0.0
    %206 = vmatpush1.msra.mxu0 0.0
    %207 = vmatprep.subr.mxu0 0.0
    %208 = vmatpush1.msra.mxu0 0.0
    %209 = vmatprep.subr.mxu0 0.0
    %210 = vmatpush1.msra.mxu0 0.0
    %211 = vmatprep.subr.mxu0 0.0
    %212 = vmatpush1.msra.mxu0 0.0
    %213 = vmatprep.subr.mxu0 0.0
    %214 = vmatpush1.msra.mxu0 0.0
    %215 = vmatprep.subr.mxu0 0.0
    %216 = vmatpush1.msra.mxu0 0.0
    %217 = vmatprep.subr.mxu0 0.0
    %218 = vmatpush1.msra.mxu0 0.0
    %219 = vmatprep.mubr.f32.mxu0 0.0
    %220 = vmatmul.mubr.f32.gmra.mrb[0].mxu0 %v109
    %v221 = vpop.f32.mrb[0].mxu0
    %v222 = vadd.f32 %v154, %v221
    %v223 = vpop.f32.mrb[0].mxu0
    %224 = vmatprep.mubr.f32.mxu0 0.0
    %225 = vmatmul.mubr.f32.gmra.mrb[0].mxu0 %v110
    %v226 = vpop.f32.mrb[0].mxu0
    %v227 = vadd.f32 %v154, %v226
    %v228 = vpop.f32.mrb[0].mxu0
    %229 = vmatprep.mubr.f32.mxu0 0.0
    %230 = vmatmul.mubr.f32.gmra.mrb[0].mxu0 %v111
    %v231 = vpop.f32.mrb[0].mxu0
    %v232 = vadd.f32 %v154, %v231
    %v233 = vpop.f32.mrb[0].mxu0
    %234 = vmatprep.mubr.f32.mxu0 0.0
    %235 = vmatmul.mubr.f32.gmra.mrb[0].mxu0 %v112
    %v236 = vpop.f32.mrb[0].mxu0
    %v237 = vadd.f32 %v154, %v236
    %v238 = vpop.f32.mrb[0].mxu0
    %239 = vmatprep.mubr.f32.mxu0 0.0
    %240 = vmatmul.mubr.f32.gmra.mrb[0].mxu0 %v113
    %v241 = vpop.f32.mrb[0].mxu0
    %v242 = vadd.f32 %v154, %v241
    %v243 = vpop.f32.mrb[0].mxu0
    %244 = vmatprep.mubr.f32.mxu0 0.0
    %245 = vmatmul.mubr.f32.gmra.mrb[0].mxu0 %v114
    %v246 = vpop.f32.mrb[0].mxu0
    %v247 = vadd.f32 %v154, %v246
    %v248 = vpop.f32.mrb[0].mxu0
    %249 = vmatprep.mubr.f32.mxu0 0.0
    %250 = vmatmul.mubr.f32.gmra.mrb[0].mxu0 %v115
    %v251 = vpop.f32.mrb[0].mxu0
    %v252 = vadd.f32 %v154, %v251
    %v253 = vpop.f32.mrb[0].mxu0
    %254 = vmatprep.mubr.f32.mxu0 0.0
    %255 = vmatmul.mubr.f32.gmra.mrb[0].mxu0 %v116
    %v256 = vpop.f32.mrb[0].mxu0
    %v257 = vadd.f32 %v154, %v256
    %v258 = vpop.f32.mrb[0].mxu0
    %259 = vmatprep.mubr.f32.mxu0 0.0
    %260 = vmatmul.mubr.f32.gmra.mrb[0].mxu0 %v117
    %v261 = vpop.f32.mrb[0].mxu0
    %v262 = vadd.f32 %v154, %v261
    %v263 = vpop.f32.mrb[0].mxu0
    %264 = vmatprep.mubr.f32.mxu0 0.0
    %265 = vmatmul.mubr.f32.gmra.mrb[0].mxu0 %v118
    %v266 = vpop.f32.mrb[0].mxu0
    %v267 = vadd.f32 %v154, %v266
    %v268 = vpop.f32.mrb[0].mxu0
    %269 = vmatprep.mubr.f32.mxu0 0.0
    %270 = vmatmul.mubr.f32.gmra.mrb[0].mxu0 %v119
    %v271 = vpop.f32.mrb[0].mxu0
    %v272 = vadd.f32 %v154, %v271
    %v273 = vpop.f32.mrb[0].mxu0
    %274 = vmatprep.mubr.f32.mxu0 0.0
    %275 = vmatmul.mubr.f32.gmra.mrb[0].mxu0 %v120
    %v276 = vpop.f32.mrb[0].mxu0
    %v277 = vadd.f32 %v154, %v276
    %v278 = vpop.f32.mrb[0].mxu0
    %279 = vmatprep.mubr.f32.mxu0 0.0
    %280 = vmatmul.mubr.f32.gmra.mrb[0].mxu0 %v121
    %v281 = vpop.f32.mrb[0].mxu0
    %v282 = vadd.f32 %v154, %v281
    %v283 = vpop.f32.mrb[0].mxu0
    %284 = vmatprep.mubr.f32.mxu0 0.0
    %285 = vmatmul.mubr.f32.gmra.mrb[0].mxu0 %v122
    %v286 = vpop.f32.mrb[0].mxu0
    %v287 = vadd.f32 %v154, %v286
    %v288 = vpop.f32.mrb[0].mxu0
    %289 = vmatprep.mubr.f32.mxu0 0.0
    %290 = vmatmul.mubr.f32.gmra.mrb[0].mxu0 %v123
    %v291 = vpop.f32.mrb[0].mxu0
    %v292 = vadd.f32 %v154, %v291
    %v293 = vpop.f32.mrb[0].mxu0
    %294 = vmatprep.mubr.f32.mxu0 0.0
    %295 = vmatmul.mubr.f32.gmra.mrb[0].mxu0 %v124
    %v296 = vpop.f32.mrb[0].mxu0
    %v297 = vadd.f32 %v154, %v296
    %v298 = vpop.f32.mrb[0].mxu0
    %299 = vmatprep.mubr.f32.mxu0 0.0
    %300 = vmatmul.mubr.f32.gmra.mrb[0].mxu0 %v125
    %v301 = vpop.f32.mrb[0].mxu0
    %v302 = vadd.f32 %v154, %v301
    %v303 = vpop.f32.mrb[0].mxu0
    %304 = vmatprep.mubr.f32.mxu0 0.0
    %305 = vmatmul.mubr.f32.gmra.mrb[0].mxu0 %v126
    %v306 = vpop.f32.mrb[0].mxu0
    %v307 = vadd.f32 %v154, %v306
    %v308 = vpop.f32.mrb[0].mxu0
    %309 = vmatprep.mubr.f32.mxu0 0.0
    %310 = vmatmul.mubr.f32.gmra.mrb[0].mxu0 %v127
    %v311 = vpop.f32.mrb[0].mxu0
    %v312 = vadd.f32 %v154, %v311
    %v313 = vpop.f32.mrb[0].mxu0
    %314 = vmatprep.mubr.f32.mxu0 0.0
    %315 = vmatmul.mubr.f32.gmra.mrb[0].mxu0 %v128
    %v316 = vpop.f32.mrb[0].mxu0
    %v317 = vadd.f32 %v154, %v316
    %v318 = vpop.f32.mrb[0].mxu0
    %319 = vmatprep.mubr.f32.mxu0 0.0
    %320 = vmatmul.mubr.f32.gmra.mrb[0].mxu0 %v129
    %v321 = vpop.f32.mrb[0].mxu0
    %v322 = vadd.f32 %v154, %v321
    %v323 = vpop.f32.mrb[0].mxu0
    %324 = vmatprep.mubr.f32.mxu0 0.0
    %325 = vmatmul.mubr.f32.gmra.mrb[0].mxu0 %v130
    %v326 = vpop.f32.mrb[0].mxu0
    %v327 = vadd.f32 %v154, %v326
    %v328 = vpop.f32.mrb[0].mxu0
    %329 = vmatprep.mubr.f32.mxu0 0.0
    %330 = vmatmul.mubr.f32.gmra.mrb[0].mxu0 %v131
    %v331 = vpop.f32.mrb[0].mxu0
    %v332 = vadd.f32 %v154, %v331
    %v333 = vpop.f32.mrb[0].mxu0
    %334 = vmatprep.mubr.f32.mxu0 0.0
    %335 = vmatmul.mubr.f32.gmra.mrb[0].mxu0 %v132
    %v336 = vpop.f32.mrb[0].mxu0
    %v337 = vadd.f32 %v154, %v336
    %v338 = vpop.f32.mrb[0].mxu0
    %339 = vmatprep.mubr.f32.mxu0 0.0
    %340 = vmatmul.mubr.f32.gmra.mrb[0].mxu0 %v133
    %v341 = vpop.f32.mrb[0].mxu0
    %v342 = vadd.f32 %v154, %v341
    %v343 = vpop.f32.mrb[0].mxu0
    %344 = vdwg.mxu0
    %v345 = vmax.f32 %v222, 0.0
    %v346 = vmax.f32 %v227, 0.0
    %v347 = vmax.f32 %v232, 0.0
    %v348 = vmax.f32 %v237, 0.0
    %v349 = vmax.f32 %v242, 0.0
    %v350 = vmax.f32 %v247, 0.0
    %v351 = vmax.f32 %v252, 0.0
    %v352 = vmax.f32 %v257, 0.0
    %v353 = vmax.f32 %v262, 0.0
    %v354 = vmax.f32 %v267, 0.0
    %v355 = vmax.f32 %v272, 0.0
    %v356 = vmax.f32 %v277, 0.0
    %v357 = vmax.f32 %v282, 0.0
    %v358 = vmax.f32 %v287, 0.0
    %v359 = vmax.f32 %v292, 0.0
    %v360 = vmax.f32 %v297, 0.0
    %v361 = vmax.f32 %v302, 0.0
    %v362 = vmax.f32 %v307, 0.0
    %v363 = vmax.f32 %v312, 0.0
    %v364 = vmax.f32 %v317, 0.0
    %v365 = vmax.f32 %v322, 0.0
    %v366 = vmax.f32 %v327, 0.0
    %v367 = vmax.f32 %v332, 0.0
    %v368 = vmax.f32 %v337, 0.0
    %v369 = vmax.f32 %v342, 0.0
    %v370 = vld [vmem:[#allocation7] sm:$0xff]
    %v371 = vld [vmem:[#allocation7 + $0x8] sm:$0xff]
    %v372 = vld [vmem:[#allocation7 + $0x10] sm:$0xff]
    %v373 = vld [vmem:[#allocation7 + $0x18] sm:$0xff]
    %v374 = vld [vmem:[#allocation7 + $0x20] sm:$0xff]
    %v375 = vld [vmem:[#allocation7 + $0x28] sm:$0xff]
    %v376 = vld [vmem:[#allocation7 + $0x30] sm:$0xff]
    %v377 = vld [vmem:[#allocation7 + $0x38] sm:$0xff]
    %v378 = vld [vmem:[#allocation7 + $0x40] sm:$0xff]
    %v379 = vld [vmem:[#allocation7 + $0x48] sm:$0xff]
    %v380 = vld [vmem:[#allocation7 + $0x50] sm:$0xff]
    %v381 = vld [vmem:[#allocation7 + $0x58] sm:$0xff]
    %v382 = vld [vmem:[#allocation7 + $0x60] sm:$0xff]
    %v383 = vld [vmem:[#allocation7 + $0x68] sm:$0xff]
    %v384 = vld [vmem:[#allocation7 + $0x70] sm:$0xff]
    %v385 = vld [vmem:[#allocation7 + $0x78] sm:$0xff]
    %v386 = vld [vmem:[%s6 + $0x1] sm:$0x1]
    %v387 = vlaneseq
    %v388 = vshrl.u32 %v387, 7
    %v389 = vsub.s32 0, %v388
    %v390 = vrot.slane %v386, %v389
    %391 = vmatprep.subr.mxu0 0.0
    %392 = vmatpush1.msra.mxu0 %v370
    %393 = vmatprep.subr.mxu0 0.0
    %394 = vmatpush1.msra.mxu0 %v371
    %395 = vmatprep.subr.mxu0 0.0
    %396 = vmatpush1.msra.mxu0 %v372
    %397 = vmatprep.subr.mxu0 0.0
    %398 = vmatpush1.msra.mxu0 %v373
    %399 = vmatprep.subr.mxu0 0.0
    %400 = vmatpush1.msra.mxu0 %v374
    %401 = vmatprep.subr.mxu0 0.0
    %402 = vmatpush1.msra.mxu0 %v375
    %403 = vmatprep.subr.mxu0 0.0
    %404 = vmatpush1.msra.mxu0 %v376
    %405 = vmatprep.subr.mxu0 0.0
    %406 = vmatpush1.msra.mxu0 %v377
    %407 = vmatprep.subr.mxu0 0.0
    %408 = vmatpush1.msra.mxu0 %v378
    %409 = vmatprep.subr.mxu0 0.0
    %410 = vmatpush1.msra.mxu0 %v379
    %411 = vmatprep.subr.mxu0 0.0
    %412 = vmatpush1.msra.mxu0 %v380
    %413 = vmatprep.subr.mxu0 0.0
    %414 = vmatpush1.msra.mxu0 %v381
    %415 = vmatprep.subr.mxu0 0.0
    %416 = vmatpush1.msra.mxu0 %v382
    %417 = vmatprep.subr.mxu0 0.0
    %418 = vmatpush1.msra.mxu0 %v383
    %419 = vmatprep.subr.mxu0 0.0
    %420 = vmatpush1.msra.mxu0 %v384
    %421 = vmatprep.subr.mxu0 0.0
    %422 = vmatpush1.msra.mxu0 %v385
    %423 = vmatprep.subr.mxu0 0.0
    %424 = vmatpush1.msra.mxu0 0.0
    %425 = vmatprep.subr.mxu0 0.0
    %426 = vmatpush1.msra.mxu0 0.0
    %427 = vmatprep.subr.mxu0 0.0
    %428 = vmatpush1.msra.mxu0 0.0
    %429 = vmatprep.subr.mxu0 0.0
    %430 = vmatpush1.msra.mxu0 0.0
    %431 = vmatprep.subr.mxu0 0.0
    %432 = vmatpush1.msra.mxu0 0.0
    %433 = vmatprep.subr.mxu0 0.0
    %434 = vmatpush1.msra.mxu0 0.0
    %435 = vmatprep.subr.mxu0 0.0
    %436 = vmatpush1.msra.mxu0 0.0
    %437 = vmatprep.subr.mxu0 0.0
    %438 = vmatpush1.msra.mxu0 0.0
    %439 = vmatprep.subr.mxu0 0.0
    %440 = vmatpush1.msra.mxu0 0.0
    %441 = vmatprep.subr.mxu0 0.0
    %442 = vmatpush1.msra.mxu0 0.0
    %443 = vmatprep.subr.mxu0 0.0
    %444 = vmatpush1.msra.mxu0 0.0
    %445 = vmatprep.subr.mxu0 0.0
    %446 = vmatpush1.msra.mxu0 0.0
    %447 = vmatprep.subr.mxu0 0.0
    %448 = vmatpush1.msra.mxu0 0.0
    %449 = vmatprep.subr.mxu0 0.0
    %450 = vmatpush1.msra.mxu0 0.0
    %451 = vmatprep.subr.mxu0 0.0
    %452 = vmatpush1.msra.mxu0 0.0
    %453 = vmatprep.subr.mxu0 0.0
    %454 = vmatpush1.msra.mxu0 0.0
    %455 = vmatprep.mubr.f32.mxu0 0.0
    %456 = vmatmul.mubr.f32.gmra.mrb[0].mxu0 %v345
    %v457 = vpop.f32.mrb[0].mxu0
    %v458 = vadd.f32 %v390, %v457
    %v459 = vpop.f32.mrb[0].mxu0
    %460 = vmatprep.mubr.f32.mxu0 0.0
    %461 = vmatmul.mubr.f32.gmra.mrb[0].mxu0 %v346
    %v462 = vpop.f32.mrb[0].mxu0
    %v463 = vadd.f32 %v390, %v462
    %v464 = vpop.f32.mrb[0].mxu0
    %465 = vmatprep.mubr.f32.mxu0 0.0
    %466 = vmatmul.mubr.f32.gmra.mrb[0].mxu0 %v347
    %v467 = vpop.f32.mrb[0].mxu0
    %v468 = vadd.f32 %v390, %v467
    %v469 = vpop.f32.mrb[0].mxu0
    %470 = vmatprep.mubr.f32.mxu0 0.0
    %471 = vmatmul.mubr.f32.gmra.mrb[0].mxu0 %v348
    %v472 = vpop.f32.mrb[0].mxu0
    %v473 = vadd.f32 %v390, %v472
    %v474 = vpop.f32.mrb[0].mxu0
    %475 = vmatprep.mubr.f32.mxu0 0.0
    %476 = vmatmul.mubr.f32.gmra.mrb[0].mxu0 %v349
    %v477 = vpop.f32.mrb[0].mxu0
    %v478 = vadd.f32 %v390, %v477
    %v479 = vpop.f32.mrb[0].mxu0
    %480 = vmatprep.mubr.f32.mxu0 0.0
    %481 = vmatmul.mubr.f32.gmra.mrb[0].mxu0 %v350
    %v482 = vpop.f32.mrb[0].mxu0
    %v483 = vadd.f32 %v390, %v482
    %v484 = vpop.f32.mrb[0].mxu0
    %485 = vmatprep.mubr.f32.mxu0 0.0
    %486 = vmatmul.mubr.f32.gmra.mrb[0].mxu0 %v351
    %v487 = vpop.f32.mrb[0].mxu0
    %v488 = vadd.f32 %v390, %v487
    %v489 = vpop.f32.mrb[0].mxu0
    %490 = vmatprep.mubr.f32.mxu0 0.0
    %491 = vmatmul.mubr.f32.gmra.mrb[0].mxu0 %v352
    %v492 = vpop.f32.mrb[0].mxu0
    %v493 = vadd.f32 %v390, %v492
    %v494 = vpop.f32.mrb[0].mxu0
    %495 = vmatprep.mubr.f32.mxu0 0.0
    %496 = vmatmul.mubr.f32.gmra.mrb[0].mxu0 %v353
    %v497 = vpop.f32.mrb[0].mxu0
    %v498 = vadd.f32 %v390, %v497
    %v499 = vpop.f32.mrb[0].mxu0
    %500 = vmatprep.mubr.f32.mxu0 0.0
    %501 = vmatmul.mubr.f32.gmra.mrb[0].mxu0 %v354
    %v502 = vpop.f32.mrb[0].mxu0
    %v503 = vadd.f32 %v390, %v502
    %v504 = vpop.f32.mrb[0].mxu0
    %505 = vmatprep.mubr.f32.mxu0 0.0
    %506 = vmatmul.mubr.f32.gmra.mrb[0].mxu0 %v355
    %v507 = vpop.f32.mrb[0].mxu0
    %v508 = vadd.f32 %v390, %v507
    %v509 = vpop.f32.mrb[0].mxu0
    %510 = vmatprep.mubr.f32.mxu0 0.0
    %511 = vmatmul.mubr.f32.gmra.mrb[0].mxu0 %v356
    %v512 = vpop.f32.mrb[0].mxu0
    %v513 = vadd.f32 %v390, %v512
    %v514 = vpop.f32.mrb[0].mxu0
    %515 = vmatprep.mubr.f32.mxu0 0.0
    %516 = vmatmul.mubr.f32.gmra.mrb[0].mxu0 %v357
    %v517 = vpop.f32.mrb[0].mxu0
    %v518 = vadd.f32 %v390, %v517
    %v519 = vpop.f32.mrb[0].mxu0
    %520 = vmatprep.mubr.f32.mxu0 0.0
    %521 = vmatmul.mubr.f32.gmra.mrb[0].mxu0 %v358
    %v522 = vpop.f32.mrb[0].mxu0
    %v523 = vadd.f32 %v390, %v522
    %v524 = vpop.f32.mrb[0].mxu0
    %525 = vmatprep.mubr.f32.mxu0 0.0
    %526 = vmatmul.mubr.f32.gmra.mrb[0].mxu0 %v359
    %v527 = vpop.f32.mrb[0].mxu0
    %v528 = vadd.f32 %v390, %v527
    %v529 = vpop.f32.mrb[0].mxu0
    %530 = vmatprep.mubr.f32.mxu0 0.0
    %531 = vmatmul.mubr.f32.gmra.mrb[0].mxu0 %v360
    %v532 = vpop.f32.mrb[0].mxu0
    %v533 = vadd.f32 %v390, %v532
    %v534 = vpop.f32.mrb[0].mxu0
    %535 = vmatprep.mubr.f32.mxu0 0.0
    %536 = vmatmul.mubr.f32.gmra.mrb[0].mxu0 %v361
    %v537 = vpop.f32.mrb[0].mxu0
    %v538 = vadd.f32 %v390, %v537
    %v539 = vpop.f32.mrb[0].mxu0
    %540 = vmatprep.mubr.f32.mxu0 0.0
    %541 = vmatmul.mubr.f32.gmra.mrb[0].mxu0 %v362
    %v542 = vpop.f32.mrb[0].mxu0
    %v543 = vadd.f32 %v390, %v542
    %v544 = vpop.f32.mrb[0].mxu0
    %545 = vmatprep.mubr.f32.mxu0 0.0
    %546 = vmatmul.mubr.f32.gmra.mrb[0].mxu0 %v363
    %v547 = vpop.f32.mrb[0].mxu0
    %v548 = vadd.f32 %v390, %v547
    %v549 = vpop.f32.mrb[0].mxu0
    %550 = vmatprep.mubr.f32.mxu0 0.0
    %551 = vmatmul.mubr.f32.gmra.mrb[0].mxu0 %v364
    %v552 = vpop.f32.mrb[0].mxu0
    %v553 = vadd.f32 %v390, %v552
    %v554 = vpop.f32.mrb[0].mxu0
    %555 = vmatprep.mubr.f32.mxu0 0.0
    %556 = vmatmul.mubr.f32.gmra.mrb[0].mxu0 %v365
    %v557 = vpop.f32.mrb[0].mxu0
    %v558 = vadd.f32 %v390, %v557
    %v559 = vpop.f32.mrb[0].mxu0
    %560 = vmatprep.mubr.f32.mxu0 0.0
    %561 = vmatmul.mubr.f32.gmra.mrb[0].mxu0 %v366
    %v562 = vpop.f32.mrb[0].mxu0
    %v563 = vadd.f32 %v390, %v562
    %v564 = vpop.f32.mrb[0].mxu0
    %565 = vmatprep.mubr.f32.mxu0 0.0
    %566 = vmatmul.mubr.f32.gmra.mrb[0].mxu0 %v367
    %v567 = vpop.f32.mrb[0].mxu0
    %v568 = vadd.f32 %v390, %v567
    %v569 = vpop.f32.mrb[0].mxu0
    %570 = vmatprep.mubr.f32.mxu0 0.0
    %571 = vmatmul.mubr.f32.gmra.mrb[0].mxu0 %v368
    %v572 = vpop.f32.mrb[0].mxu0
    %v573 = vadd.f32 %v390, %v572
    %v574 = vpop.f32.mrb[0].mxu0
    %575 = vmatprep.mubr.f32.mxu0 0.0
    %576 = vmatmul.mubr.f32.gmra.mrb[0].mxu0 %v369
    %v577 = vpop.f32.mrb[0].mxu0
    %v578 = vadd.f32 %v390, %v577
    %v579 = vpop.f32.mrb[0].mxu0
    %580 = vdwg.mxu0
    %v581 = vmax.f32 %v458, 0.0
    %v582 = vmax.f32 %v463, 0.0
    %v583 = vmax.f32 %v468, 0.0
    %v584 = vmax.f32 %v473, 0.0
    %v585 = vmax.f32 %v478, 0.0
    %v586 = vmax.f32 %v483, 0.0
    %v587 = vmax.f32 %v488, 0.0
    %v588 = vmax.f32 %v493, 0.0
    %v589 = vmax.f32 %v498, 0.0
    %v590 = vmax.f32 %v503, 0.0
    %v591 = vmax.f32 %v508, 0.0
    %v592 = vmax.f32 %v513, 0.0
    %v593 = vmax.f32 %v518, 0.0
    %v594 = vmax.f32 %v523, 0.0
    %v595 = vmax.f32 %v528, 0.0
    %v596 = vmax.f32 %v533, 0.0
    %v597 = vmax.f32 %v538, 0.0
    %v598 = vmax.f32 %v543, 0.0
    %v599 = vmax.f32 %v548, 0.0
    %v600 = vmax.f32 %v553, 0.0
    %v601 = vmax.f32 %v558, 0.0
    %v602 = vmax.f32 %v563, 0.0
    %v603 = vmax.f32 %v568, 0.0
    %v604 = vmax.f32 %v573, 0.0
    %v605 = vmax.f32 %v578, 0.0
    %v606 = vld [vmem:[#allocation8] sm:$0xff]
    %v607 = vld [vmem:[#allocation8 + $0x8] sm:$0xff]
    %v608 = vld [vmem:[#allocation8 + $0x10] sm:$0xff]
    %v609 = vld [vmem:[#allocation8 + $0x18] sm:$0xff]
    %v610 = vld [vmem:[#allocation8 + $0x20] sm:$0xff]
    %v611 = vld [vmem:[#allocation8 + $0x28] sm:$0xff]
    %v612 = vld [vmem:[#allocation8 + $0x30] sm:$0xff]
    %v613 = vld [vmem:[#allocation8 + $0x38] sm:$0xff]
    %v614 = vld [vmem:[#allocation8 + $0x40] sm:$0xff]
    %v615 = vld [vmem:[#allocation8 + $0x48] sm:$0xff]
    %v616 = vld [vmem:[#allocation8 + $0x50] sm:$0xff]
    %v617 = vld [vmem:[#allocation8 + $0x58] sm:$0xff]
    %v618 = vld [vmem:[#allocation8 + $0x60] sm:$0xff]
    %v619 = vld [vmem:[#allocation8 + $0x68] sm:$0xff]
    %v620 = vld [vmem:[#allocation8 + $0x70] sm:$0xff]
    %v621 = vld [vmem:[#allocation8 + $0x78] sm:$0xff]
    %v622 = vld [vmem:[%s6 + $0x2] sm:$0x1]
    %v623 = vlaneseq
    %v624 = vshrl.u32 %v623, 7
    %v625 = vsub.s32 0, %v624
    %v626 = vrot.slane %v622, %v625
    %627 = vmatprep.subr.mxu0 0.0
    %628 = vmatpush1.msra.mxu0 %v606
    %629 = vmatprep.subr.mxu0 0.0
    %630 = vmatpush1.msra.mxu0 %v607
    %631 = vmatprep.subr.mxu0 0.0
    %632 = vmatpush1.msra.mxu0 %v608
    %633 = vmatprep.subr.mxu0 0.0
    %634 = vmatpush1.msra.mxu0 %v609
    %635 = vmatprep.subr.mxu0 0.0
    %636 = vmatpush1.msra.mxu0 %v610
    %637 = vmatprep.subr.mxu0 0.0
    %638 = vmatpush1.msra.mxu0 %v611
    %639 = vmatprep.subr.mxu0 0.0
    %640 = vmatpush1.msra.mxu0 %v612
    %641 = vmatprep.subr.mxu0 0.0
    %642 = vmatpush1.msra.mxu0 %v613
    %643 = vmatprep.subr.mxu0 0.0
    %644 = vmatpush1.msra.mxu0 %v614
    %645 = vmatprep.subr.mxu0 0.0
    %646 = vmatpush1.msra.mxu0 %v615
    %647 = vmatprep.subr.mxu0 0.0
    %648 = vmatpush1.msra.mxu0 %v616
    %649 = vmatprep.subr.mxu0 0.0
    %650 = vmatpush1.msra.mxu0 %v617
    %651 = vmatprep.subr.mxu0 0.0
    %652 = vmatpush1.msra.mxu0 %v618
    %653 = vmatprep.subr.mxu0 0.0
    %654 = vmatpush1.msra.mxu0 %v619
    %655 = vmatprep.subr.mxu0 0.0
    %656 = vmatpush1.msra.mxu0 %v620
    %657 = vmatprep.subr.mxu0 0.0
    %658 = vmatpush1.msra.mxu0 %v621
    %659 = vmatprep.subr.mxu0 0.0
    %660 = vmatpush1.msra.mxu0 0.0
    %661 = vmatprep.subr.mxu0 0.0
    %662 = vmatpush1.msra.mxu0 0.0
    %663 = vmatprep.subr.mxu0 0.0
    %664 = vmatpush1.msra.mxu0 0.0
    %665 = vmatprep.subr.mxu0 0.0
    %666 = vmatpush1.msra.mxu0 0.0
    %667 = vmatprep.subr.mxu0 0.0
    %668 = vmatpush1.msra.mxu0 0.0
    %669 = vmatprep.subr.mxu0 0.0
    %670 = vmatpush1.msra.mxu0 0.0
    %671 = vmatprep.subr.mxu0 0.0
    %672 = vmatpush1.msra.mxu0 0.0
    %673 = vmatprep.subr.mxu0 0.0
    %674 = vmatpush1.msra.mxu0 0.0
    %675 = vmatprep.subr.mxu0 0.0
    %676 = vmatpush1.msra.mxu0 0.0
    %677 = vmatprep.subr.mxu0 0.0
    %678 = vmatpush1.msra.mxu0 0.0
    %679 = vmatprep.subr.mxu0 0.0
    %680 = vmatpush1.msra.mxu0 0.0
    %681 = vmatprep.subr.mxu0 0.0
    %682 = vmatpush1.msra.mxu0 0.0
    %683 = vmatprep.subr.mxu0 0.0
    %684 = vmatpush1.msra.mxu0 0.0
    %685 = vmatprep.subr.mxu0 0.0
    %686 = vmatpush1.msra.mxu0 0.0
    %687 = vmatprep.subr.mxu0 0.0
    %688 = vmatpush1.msra.mxu0 0.0
    %689 = vmatprep.subr.mxu0 0.0
    %690 = vmatpush1.msra.mxu0 0.0
    %691 = vmatprep.mubr.f32.mxu0 0.0
    %692 = vmatmul.mubr.f32.gmra.mrb[0].mxu0 %v581
    %v693 = vpop.f32.mrb[0].mxu0
    %v694 = vadd.f32 %v626, %v693
    %v695 = vpop.f32.mrb[0].mxu0
    %696 = vmatprep.mubr.f32.mxu0 0.0
    %697 = vmatmul.mubr.f32.gmra.mrb[0].mxu0 %v582
    %v698 = vpop.f32.mrb[0].mxu0
    %v699 = vadd.f32 %v626, %v698
    %v700 = vpop.f32.mrb[0].mxu0
    %701 = vmatprep.mubr.f32.mxu0 0.0
    %702 = vmatmul.mubr.f32.gmra.mrb[0].mxu0 %v583
    %v703 = vpop.f32.mrb[0].mxu0
    %v704 = vadd.f32 %v626, %v703
    %v705 = vpop.f32.mrb[0].mxu0
    %706 = vmatprep.mubr.f32.mxu0 0.0
    %707 = vmatmul.mubr.f32.gmra.mrb[0].mxu0 %v584
    %v708 = vpop.f32.mrb[0].mxu0
    %v709 = vadd.f32 %v626, %v708
    %v710 = vpop.f32.mrb[0].mxu0
    %711 = vmatprep.mubr.f32.mxu0 0.0
    %712 = vmatmul.mubr.f32.gmra.mrb[0].mxu0 %v585
    %v713 = vpop.f32.mrb[0].mxu0
    %v714 = vadd.f32 %v626, %v713
    %v715 = vpop.f32.mrb[0].mxu0
    %716 = vmatprep.mubr.f32.mxu0 0.0
    %717 = vmatmul.mubr.f32.gmra.mrb[0].mxu0 %v586
    %v718 = vpop.f32.mrb[0].mxu0
    %v719 = vadd.f32 %v626, %v718
    %v720 = vpop.f32.mrb[0].mxu0
    %721 = vmatprep.mubr.f32.mxu0 0.0
    %722 = vmatmul.mubr.f32.gmra.mrb[0].mxu0 %v587
    %v723 = vpop.f32.mrb[0].mxu0
    %v724 = vadd.f32 %v626, %v723
    %v725 = vpop.f32.mrb[0].mxu0
    %726 = vmatprep.mubr.f32.mxu0 0.0
    %727 = vmatmul.mubr.f32.gmra.mrb[0].mxu0 %v588
    %v728 = vpop.f32.mrb[0].mxu0
    %v729 = vadd.f32 %v626, %v728
    %v730 = vpop.f32.mrb[0].mxu0
    %731 = vmatprep.mubr.f32.mxu0 0.0
    %732 = vmatmul.mubr.f32.gmra.mrb[0].mxu0 %v589
    %v733 = vpop.f32.mrb[0].mxu0
    %v734 = vadd.f32 %v626, %v733
    %v735 = vpop.f32.mrb[0].mxu0
    %736 = vmatprep.mubr.f32.mxu0 0.0
    %737 = vmatmul.mubr.f32.gmra.mrb[0].mxu0 %v590
    %v738 = vpop.f32.mrb[0].mxu0
    %v739 = vadd.f32 %v626, %v738
    %v740 = vpop.f32.mrb[0].mxu0
    %741 = vmatprep.mubr.f32.mxu0 0.0
    %742 = vmatmul.mubr.f32.gmra.mrb[0].mxu0 %v591
    %v743 = vpop.f32.mrb[0].mxu0
    %v744 = vadd.f32 %v626, %v743
    %v745 = vpop.f32.mrb[0].mxu0
    %746 = vmatprep.mubr.f32.mxu0 0.0
    %747 = vmatmul.mubr.f32.gmra.mrb[0].mxu0 %v592
    %v748 = vpop.f32.mrb[0].mxu0
    %v749 = vadd.f32 %v626, %v748
    %v750 = vpop.f32.mrb[0].mxu0
    %751 = vmatprep.mubr.f32.mxu0 0.0
    %752 = vmatmul.mubr.f32.gmra.mrb[0].mxu0 %v593
    %v753 = vpop.f32.mrb[0].mxu0
    %v754 = vadd.f32 %v626, %v753
    %v755 = vpop.f32.mrb[0].mxu0
    %756 = vmatprep.mubr.f32.mxu0 0.0
    %757 = vmatmul.mubr.f32.gmra.mrb[0].mxu0 %v594
    %v758 = vpop.f32.mrb[0].mxu0
    %v759 = vadd.f32 %v626, %v758
    %v760 = vpop.f32.mrb[0].mxu0
    %761 = vmatprep.mubr.f32.mxu0 0.0
    %762 = vmatmul.mubr.f32.gmra.mrb[0].mxu0 %v595
    %v763 = vpop.f32.mrb[0].mxu0
    %v764 = vadd.f32 %v626, %v763
    %v765 = vpop.f32.mrb[0].mxu0
    %766 = vmatprep.mubr.f32.mxu0 0.0
    %767 = vmatmul.mubr.f32.gmra.mrb[0].mxu0 %v596
    %v768 = vpop.f32.mrb[0].mxu0
    %v769 = vadd.f32 %v626, %v768
    %v770 = vpop.f32.mrb[0].mxu0
    %771 = vmatprep.mubr.f32.mxu0 0.0
    %772 = vmatmul.mubr.f32.gmra.mrb[0].mxu0 %v597
    %v773 = vpop.f32.mrb[0].mxu0
    %v774 = vadd.f32 %v626, %v773
    %v775 = vpop.f32.mrb[0].mxu0
    %776 = vmatprep.mubr.f32.mxu0 0.0
    %777 = vmatmul.mubr.f32.gmra.mrb[0].mxu0 %v598
    %v778 = vpop.f32.mrb[0].mxu0
    %v779 = vadd.f32 %v626, %v778
    %v780 = vpop.f32.mrb[0].mxu0
    %781 = vmatprep.mubr.f32.mxu0 0.0
    %782 = vmatmul.mubr.f32.gmra.mrb[0].mxu0 %v599
    %v783 = vpop.f32.mrb[0].mxu0
    %v784 = vadd.f32 %v626, %v783
    %v785 = vpop.f32.mrb[0].mxu0
    %786 = vmatprep.mubr.f32.mxu0 0.0
    %787 = vmatmul.mubr.f32.gmra.mrb[0].mxu0 %v600
    %v788 = vpop.f32.mrb[0].mxu0
    %v789 = vadd.f32 %v626, %v788
    %v790 = vpop.f32.mrb[0].mxu0
    %791 = vmatprep.mubr.f32.mxu0 0.0
    %792 = vmatmul.mubr.f32.gmra.mrb[0].mxu0 %v601
    %v793 = vpop.f32.mrb[0].mxu0
    %v794 = vadd.f32 %v626, %v793
    %v795 = vpop.f32.mrb[0].mxu0
    %796 = vmatprep.mubr.f32.mxu0 0.0
    %797 = vmatmul.mubr.f32.gmra.mrb[0].mxu0 %v602
    %v798 = vpop.f32.mrb[0].mxu0
    %v799 = vadd.f32 %v626, %v798
    %v800 = vpop.f32.mrb[0].mxu0
    %801 = vmatprep.mubr.f32.mxu0 0.0
    %802 = vmatmul.mubr.f32.gmra.mrb[0].mxu0 %v603
    %v803 = vpop.f32.mrb[0].mxu0
    %v804 = vadd.f32 %v626, %v803
    %v805 = vpop.f32.mrb[0].mxu0
    %806 = vmatprep.mubr.f32.mxu0 0.0
    %807 = vmatmul.mubr.f32.gmra.mrb[0].mxu0 %v604
    %v808 = vpop.f32.mrb[0].mxu0
    %v809 = vadd.f32 %v626, %v808
    %v810 = vpop.f32.mrb[0].mxu0
    %811 = vmatprep.mubr.f32.mxu0 0.0
    %812 = vmatmul.mubr.f32.gmra.mrb[0].mxu0 %v605
    %v813 = vpop.f32.mrb[0].mxu0
    %v814 = vadd.f32 %v626, %v813
    %v815 = vpop.f32.mrb[0].mxu0
    %816 = vdwg.mxu0
    %v817 = vmax.f32 %v694, 0.0
    %v818 = vmax.f32 %v699, 0.0
    %v819 = vmax.f32 %v704, 0.0
    %v820 = vmax.f32 %v709, 0.0
    %v821 = vmax.f32 %v714, 0.0
    %v822 = vmax.f32 %v719, 0.0
    %v823 = vmax.f32 %v724, 0.0
    %v824 = vmax.f32 %v729, 0.0
    %v825 = vmax.f32 %v734, 0.0
    %v826 = vmax.f32 %v739, 0.0
    %v827 = vmax.f32 %v744, 0.0
    %v828 = vmax.f32 %v749, 0.0
    %v829 = vmax.f32 %v754, 0.0
    %v830 = vmax.f32 %v759, 0.0
    %v831 = vmax.f32 %v764, 0.0
    %v832 = vmax.f32 %v769, 0.0
    %v833 = vmax.f32 %v774, 0.0
    %v834 = vmax.f32 %v779, 0.0
    %v835 = vmax.f32 %v784, 0.0
    %v836 = vmax.f32 %v789, 0.0
    %v837 = vmax.f32 %v794, 0.0
    %v838 = vmax.f32 %v799, 0.0
    %v839 = vmax.f32 %v804, 0.0
    %v840 = vmax.f32 %v809, 0.0
    %v841 = vmax.f32 %v814, 0.0
    %v842 = vld [vmem:[#allocation10] sm:$0xff]
    %v843 = vld [vmem:[#allocation10 + $0x8] sm:$0xff]
    %v844 = vld [vmem:[#allocation10 + $0x10] sm:$0xff]
    %v845 = vld [vmem:[#allocation10 + $0x18] sm:$0xff]
    %v846 = vld [vmem:[#allocation10 + $0x20] sm:$0xff]
    %v847 = vld [vmem:[#allocation10 + $0x28] sm:$0xff]
    %v848 = vld [vmem:[#allocation10 + $0x30] sm:$0xff]
    %v849 = vld [vmem:[#allocation10 + $0x38] sm:$0xff]
    %v850 = vld [vmem:[#allocation10 + $0x40] sm:$0xff]
    %v851 = vld [vmem:[#allocation10 + $0x48] sm:$0xff]
    %v852 = vld [vmem:[#allocation10 + $0x50] sm:$0xff]
    %v853 = vld [vmem:[#allocation10 + $0x58] sm:$0xff]
    %v854 = vld [vmem:[#allocation10 + $0x60] sm:$0xff]
    %v855 = vld [vmem:[#allocation10 + $0x68] sm:$0xff]
    %v856 = vld [vmem:[#allocation10 + $0x70] sm:$0xff]
    %v857 = vld [vmem:[#allocation10 + $0x78] sm:$0xff]
    %v858 = vld [vmem:[%s6 + $0x3] sm:$0x1]
    %v859 = vlaneseq
    %v860 = vshrl.u32 %v859, 7
    %v861 = vsub.s32 0, %v860
    %v862 = vrot.slane %v858, %v861
    %863 = vmatprep.subr.mxu0 0.0
    %864 = vmatpush1.msra.mxu0 %v842
    %865 = vmatprep.subr.mxu0 0.0
    %866 = vmatpush1.msra.mxu0 %v843
    %867 = vmatprep.subr.mxu0 0.0
    %868 = vmatpush1.msra.mxu0 %v844
    %869 = vmatprep.subr.mxu0 0.0
    %870 = vmatpush1.msra.mxu0 %v845
    %871 = vmatprep.subr.mxu0 0.0
    %872 = vmatpush1.msra.mxu0 %v846
    %873 = vmatprep.subr.mxu0 0.0
    %874 = vmatpush1.msra.mxu0 %v847
    %875 = vmatprep.subr.mxu0 0.0
    %876 = vmatpush1.msra.mxu0 %v848
    %877 = vmatprep.subr.mxu0 0.0
    %878 = vmatpush1.msra.mxu0 %v849
    %879 = vmatprep.subr.mxu0 0.0
    %880 = vmatpush1.msra.mxu0 %v850
    %881 = vmatprep.subr.mxu0 0.0
    %882 = vmatpush1.msra.mxu0 %v851
    %883 = vmatprep.subr.mxu0 0.0
    %884 = vmatpush1.msra.mxu0 %v852
    %885 = vmatprep.subr.mxu0 0.0
    %886 = vmatpush1.msra.mxu0 %v853
    %887 = vmatprep.subr.mxu0 0.0
    %888 = vmatpush1.msra.mxu0 %v854
    %889 = vmatprep.subr.mxu0 0.0
    %890 = vmatpush1.msra.mxu0 %v855
    %891 = vmatprep.subr.mxu0 0.0
    %892 = vmatpush1.msra.mxu0 %v856
    %893 = vmatprep.subr.mxu0 0.0
    %894 = vmatpush1.msra.mxu0 %v857
    %895 = vmatprep.subr.mxu0 0.0
    %896 = vmatpush1.msra.mxu0 0.0
    %897 = vmatprep.subr.mxu0 0.0
    %898 = vmatpush1.msra.mxu0 0.0
    %899 = vmatprep.subr.mxu0 0.0
    %900 = vmatpush1.msra.mxu0 0.0
    %901 = vmatprep.subr.mxu0 0.0
    %902 = vmatpush1.msra.mxu0 0.0
    %903 = vmatprep.subr.mxu0 0.0
    %904 = vmatpush1.msra.mxu0 0.0
    %905 = vmatprep.subr.mxu0 0.0
    %906 = vmatpush1.msra.mxu0 0.0
    %907 = vmatprep.subr.mxu0 0.0
    %908 = vmatpush1.msra.mxu0 0.0
    %909 = vmatprep.subr.mxu0 0.0
    %910 = vmatpush1.msra.mxu0 0.0
    %911 = vmatprep.subr.mxu0 0.0
    %912 = vmatpush1.msra.mxu0 0.0
    %913 = vmatprep.subr.mxu0 0.0
    %914 = vmatpush1.msra.mxu0 0.0
    %915 = vmatprep.subr.mxu0 0.0
    %916 = vmatpush1.msra.mxu0 0.0
    %917 = vmatprep.subr.mxu0 0.0
    %918 = vmatpush1.msra.mxu0 0.0
    %919 = vmatprep.subr.mxu0 0.0
    %920 = vmatpush1.msra.mxu0 0.0
    %921 = vmatprep.subr.mxu0 0.0
    %922 = vmatpush1.msra.mxu0 0.0
    %923 = vmatprep.subr.mxu0 0.0
    %924 = vmatpush1.msra.mxu0 0.0
    %925 = vmatprep.subr.mxu0 0.0
    %926 = vmatpush1.msra.mxu0 0.0
    %927 = vmatprep.mubr.f32.mxu0 0.0
    %928 = vmatmul.mubr.f32.gmra.mrb[0].mxu0 %v817
    %v929 = vpop.f32.mrb[0].mxu0
    %v930 = vadd.f32 %v862, %v929
    %v931 = vpop.f32.mrb[0].mxu0
    %932 = vmatprep.mubr.f32.mxu0 0.0
    %933 = vmatmul.mubr.f32.gmra.mrb[0].mxu0 %v818
    %v934 = vpop.f32.mrb[0].mxu0
    %v935 = vadd.f32 %v862, %v934
    %v936 = vpop.f32.mrb[0].mxu0
    %937 = vmatprep.mubr.f32.mxu0 0.0
    %938 = vmatmul.mubr.f32.gmra.mrb[0].mxu0 %v819
    %v939 = vpop.f32.mrb[0].mxu0
    %v940 = vadd.f32 %v862, %v939
    %v941 = vpop.f32.mrb[0].mxu0
    %942 = vmatprep.mubr.f32.mxu0 0.0
    %943 = vmatmul.mubr.f32.gmra.mrb[0].mxu0 %v820
    %v944 = vpop.f32.mrb[0].mxu0
    %v945 = vadd.f32 %v862, %v944
    %v946 = vpop.f32.mrb[0].mxu0
    %947 = vmatprep.mubr.f32.mxu0 0.0
    %948 = vmatmul.mubr.f32.gmra.mrb[0].mxu0 %v821
    %v949 = vpop.f32.mrb[0].mxu0
    %v950 = vadd.f32 %v862, %v949
    %v951 = vpop.f32.mrb[0].mxu0
    %952 = vmatprep.mubr.f32.mxu0 0.0
    %953 = vmatmul.mubr.f32.gmra.mrb[0].mxu0 %v822
    %v954 = vpop.f32.mrb[0].mxu0
    %v955 = vadd.f32 %v862, %v954
    %v956 = vpop.f32.mrb[0].mxu0
    %957 = vmatprep.mubr.f32.mxu0 0.0
    %958 = vmatmul.mubr.f32.gmra.mrb[0].mxu0 %v823
    %v959 = vpop.f32.mrb[0].mxu0
    %v960 = vadd.f32 %v862, %v959
    %v961 = vpop.f32.mrb[0].mxu0
    %962 = vmatprep.mubr.f32.mxu0 0.0
    %963 = vmatmul.mubr.f32.gmra.mrb[0].mxu0 %v824
    %v964 = vpop.f32.mrb[0].mxu0
    %v965 = vadd.f32 %v862, %v964
    %v966 = vpop.f32.mrb[0].mxu0
    %967 = vmatprep.mubr.f32.mxu0 0.0
    %968 = vmatmul.mubr.f32.gmra.mrb[0].mxu0 %v825
    %v969 = vpop.f32.mrb[0].mxu0
    %v970 = vadd.f32 %v862, %v969
    %v971 = vpop.f32.mrb[0].mxu0
    %972 = vmatprep.mubr.f32.mxu0 0.0
    %973 = vmatmul.mubr.f32.gmra.mrb[0].mxu0 %v826
    %v974 = vpop.f32.mrb[0].mxu0
    %v975 = vadd.f32 %v862, %v974
    %v976 = vpop.f32.mrb[0].mxu0
    %977 = vmatprep.mubr.f32.mxu0 0.0
    %978 = vmatmul.mubr.f32.gmra.mrb[0].mxu0 %v827
    %v979 = vpop.f32.mrb[0].mxu0
    %v980 = vadd.f32 %v862, %v979
    %v981 = vpop.f32.mrb[0].mxu0
    %982 = vmatprep.mubr.f32.mxu0 0.0
    %983 = vmatmul.mubr.f32.gmra.mrb[0].mxu0 %v828
    %v984 = vpop.f32.mrb[0].mxu0
    %v985 = vadd.f32 %v862, %v984
    %v986 = vpop.f32.mrb[0].mxu0
    %987 = vmatprep.mubr.f32.mxu0 0.0
    %988 = vmatmul.mubr.f32.gmra.mrb[0].mxu0 %v829
    %v989 = vpop.f32.mrb[0].mxu0
    %v990 = vadd.f32 %v862, %v989
    %v991 = vpop.f32.mrb[0].mxu0
    %992 = vmatprep.mubr.f32.mxu0 0.0
    %993 = vmatmul.mubr.f32.gmra.mrb[0].mxu0 %v830
    %v994 = vpop.f32.mrb[0].mxu0
    %v995 = vadd.f32 %v862, %v994
    %v996 = vpop.f32.mrb[0].mxu0
    %997 = vmatprep.mubr.f32.mxu0 0.0
    %998 = vmatmul.mubr.f32.gmra.mrb[0].mxu0 %v831
    %v999 = vpop.f32.mrb[0].mxu0
    %v1000 = vadd.f32 %v862, %v999
    %v1001 = vpop.f32.mrb[0].mxu0
    %1002 = vmatprep.mubr.f32.mxu0 0.0
    %1003 = vmatmul.mubr.f32.gmra.mrb[0].mxu0 %v832
    %v1004 = vpop.f32.mrb[0].mxu0
    %v1005 = vadd.f32 %v862, %v1004
    %v1006 = vpop.f32.mrb[0].mxu0
    %1007 = vmatprep.mubr.f32.mxu0 0.0
    %1008 = vmatmul.mubr.f32.gmra.mrb[0].mxu0 %v833
    %v1009 = vpop.f32.mrb[0].mxu0
    %v1010 = vadd.f32 %v862, %v1009
    %v1011 = vpop.f32.mrb[0].mxu0
    %1012 = vmatprep.mubr.f32.mxu0 0.0
    %1013 = vmatmul.mubr.f32.gmra.mrb[0].mxu0 %v834
    %v1014 = vpop.f32.mrb[0].mxu0
    %v1015 = vadd.f32 %v862, %v1014
    %v1016 = vpop.f32.mrb[0].mxu0
    %1017 = vmatprep.mubr.f32.mxu0 0.0
    %1018 = vmatmul.mubr.f32.gmra.mrb[0].mxu0 %v835
    %v1019 = vpop.f32.mrb[0].mxu0
    %v1020 = vadd.f32 %v862, %v1019
    %v1021 = vpop.f32.mrb[0].mxu0
    %1022 = vmatprep.mubr.f32.mxu0 0.0
    %1023 = vmatmul.mubr.f32.gmra.mrb[0].mxu0 %v836
    %v1024 = vpop.f32.mrb[0].mxu0
    %v1025 = vadd.f32 %v862, %v1024
    %v1026 = vpop.f32.mrb[0].mxu0
    %1027 = vmatprep.mubr.f32.mxu0 0.0
    %1028 = vmatmul.mubr.f32.gmra.mrb[0].mxu0 %v837
    %v1029 = vpop.f32.mrb[0].mxu0
    %v1030 = vadd.f32 %v862, %v1029
    %v1031 = vpop.f32.mrb[0].mxu0
    %1032 = vmatprep.mubr.f32.mxu0 0.0
    %1033 = vmatmul.mubr.f32.gmra.mrb[0].mxu0 %v838
    %v1034 = vpop.f32.mrb[0].mxu0
    %v1035 = vadd.f32 %v862, %v1034
    %v1036 = vpop.f32.mrb[0].mxu0
    %1037 = vmatprep.mubr.f32.mxu0 0.0
    %1038 = vmatmul.mubr.f32.gmra.mrb[0].mxu0 %v839
    %v1039 = vpop.f32.mrb[0].mxu0
    %v1040 = vadd.f32 %v862, %v1039
    %v1041 = vpop.f32.mrb[0].mxu0
    %1042 = vmatprep.mubr.f32.mxu0 0.0
    %1043 = vmatmul.mubr.f32.gmra.mrb[0].mxu0 %v840
    %v1044 = vpop.f32.mrb[0].mxu0
    %v1045 = vadd.f32 %v862, %v1044
    %v1046 = vpop.f32.mrb[0].mxu0
    %1047 = vmatprep.mubr.f32.mxu0 0.0
    %1048 = vmatmul.mubr.f32.gmra.mrb[0].mxu0 %v841
    %v1049 = vpop.f32.mrb[0].mxu0
    %v1050 = vadd.f32 %v862, %v1049
    %v1051 = vpop.f32.mrb[0].mxu0
    %1052 = vdwg.mxu0
    %v1053 = vmax.f32 %v930, 0.0
    %v1054 = vmax.f32 %v935, 0.0
    %v1055 = vmax.f32 %v940, 0.0
    %v1056 = vmax.f32 %v945, 0.0
    %v1057 = vmax.f32 %v950, 0.0
    %v1058 = vmax.f32 %v955, 0.0
    %v1059 = vmax.f32 %v960, 0.0
    %v1060 = vmax.f32 %v965, 0.0
    %v1061 = vmax.f32 %v970, 0.0
    %v1062 = vmax.f32 %v975, 0.0
    %v1063 = vmax.f32 %v980, 0.0
    %v1064 = vmax.f32 %v985, 0.0
    %v1065 = vmax.f32 %v990, 0.0
    %v1066 = vmax.f32 %v995, 0.0
    %v1067 = vmax.f32 %v1000, 0.0
    %v1068 = vmax.f32 %v1005, 0.0
    %v1069 = vmax.f32 %v1010, 0.0
    %v1070 = vmax.f32 %v1015, 0.0
    %v1071 = vmax.f32 %v1020, 0.0
    %v1072 = vmax.f32 %v1025, 0.0
    %v1073 = vmax.f32 %v1030, 0.0
    %v1074 = vmax.f32 %v1035, 0.0
    %v1075 = vmax.f32 %v1040, 0.0
    %v1076 = vmax.f32 %v1045, 0.0
    %v1077 = vmax.f32 %v1050, 0.0
    %v1078 = vld [vmem:[#allocation11] sm:$0xff]
    %v1079 = vld [vmem:[#allocation11 + $0x8] sm:$0xff]
    %v1080 = vld [vmem:[#allocation11 + $0x10] sm:$0xff]
    %v1081 = vld [vmem:[#allocation11 + $0x18] sm:$0xff]
    %v1082 = vld [vmem:[#allocation11 + $0x20] sm:$0xff]
    %v1083 = vld [vmem:[#allocation11 + $0x28] sm:$0xff]
    %v1084 = vld [vmem:[#allocation11 + $0x30] sm:$0xff]
    %v1085 = vld [vmem:[#allocation11 + $0x38] sm:$0xff]
    %v1086 = vld [vmem:[#allocation11 + $0x40] sm:$0xff]
    %v1087 = vld [vmem:[#allocation11 + $0x48] sm:$0xff]
    %v1088 = vld [vmem:[#allocation11 + $0x50] sm:$0xff]
    %v1089 = vld [vmem:[#allocation11 + $0x58] sm:$0xff]
    %v1090 = vld [vmem:[#allocation11 + $0x60] sm:$0xff]
    %v1091 = vld [vmem:[#allocation11 + $0x68] sm:$0xff]
    %v1092 = vld [vmem:[#allocation11 + $0x70] sm:$0xff]
    %v1093 = vld [vmem:[#allocation11 + $0x78] sm:$0xff]
    %v1094 = vld [vmem:[%s6 + $0x4] sm:$0x1]
    %v1095 = vlaneseq
    %v1096 = vshrl.u32 %v1095, 7
    %v1097 = vsub.s32 0, %v1096
    %v1098 = vrot.slane %v1094, %v1097
    %1099 = vmatprep.subr.mxu0 0.0
    %1100 = vmatpush1.msra.mxu0 %v1078
    %1101 = vmatprep.subr.mxu0 0.0
    %1102 = vmatpush1.msra.mxu0 %v1079
    %1103 = vmatprep.subr.mxu0 0.0
    %1104 = vmatpush1.msra.mxu0 %v1080
    %1105 = vmatprep.subr.mxu0 0.0
    %1106 = vmatpush1.msra.mxu0 %v1081
    %1107 = vmatprep.subr.mxu0 0.0
    %1108 = vmatpush1.msra.mxu0 %v1082
    %1109 = vmatprep.subr.mxu0 0.0
    %1110 = vmatpush1.msra.mxu0 %v1083
    %1111 = vmatprep.subr.mxu0 0.0
    %1112 = vmatpush1.msra.mxu0 %v1084
    %1113 = vmatprep.subr.mxu0 0.0
    %1114 = vmatpush1.msra.mxu0 %v1085
    %1115 = vmatprep.subr.mxu0 0.0
    %1116 = vmatpush1.msra.mxu0 %v1086
    %1117 = vmatprep.subr.mxu0 0.0
    %1118 = vmatpush1.msra.mxu0 %v1087
    %1119 = vmatprep.subr.mxu0 0.0
    %1120 = vmatpush1.msra.mxu0 %v1088
    %1121 = vmatprep.subr.mxu0 0.0
    %1122 = vmatpush1.msra.mxu0 %v1089
    %1123 = vmatprep.subr.mxu0 0.0
    %1124 = vmatpush1.msra.mxu0 %v1090
    %1125 = vmatprep.subr.mxu0 0.0
    %1126 = vmatpush1.msra.mxu0 %v1091
    %1127 = vmatprep.subr.mxu0 0.0
    %1128 = vmatpush1.msra.mxu0 %v1092
    %1129 = vmatprep.subr.mxu0 0.0
    %1130 = vmatpush1.msra.mxu0 %v1093
    %1131 = vmatprep.subr.mxu0 0.0
    %1132 = vmatpush1.msra.mxu0 0.0
    %1133 = vmatprep.subr.mxu0 0.0
    %1134 = vmatpush1.msra.mxu0 0.0
    %1135 = vmatprep.subr.mxu0 0.0
    %1136 = vmatpush1.msra.mxu0 0.0
    %1137 = vmatprep.subr.mxu0 0.0
    %1138 = vmatpush1.msra.mxu0 0.0
    %1139 = vmatprep.subr.mxu0 0.0
    %1140 = vmatpush1.msra.mxu0 0.0
    %1141 = vmatprep.subr.mxu0 0.0
    %1142 = vmatpush1.msra.mxu0 0.0
    %1143 = vmatprep.subr.mxu0 0.0
    %1144 = vmatpush1.msra.mxu0 0.0
    %1145 = vmatprep.subr.mxu0 0.0
    %1146 = vmatpush1.msra.mxu0 0.0
    %1147 = vmatprep.subr.mxu0 0.0
    %1148 = vmatpush1.msra.mxu0 0.0
    %1149 = vmatprep.subr.mxu0 0.0
    %1150 = vmatpush1.msra.mxu0 0.0
    %1151 = vmatprep.subr.mxu0 0.0
    %1152 = vmatpush1.msra.mxu0 0.0
    %1153 = vmatprep.subr.mxu0 0.0
    %1154 = vmatpush1.msra.mxu0 0.0
    %1155 = vmatprep.subr.mxu0 0.0
    %1156 = vmatpush1.msra.mxu0 0.0
    %1157 = vmatprep.subr.mxu0 0.0
    %1158 = vmatpush1.msra.mxu0 0.0
    %1159 = vmatprep.subr.mxu0 0.0
    %1160 = vmatpush1.msra.mxu0 0.0
    %1161 = vmatprep.subr.mxu0 0.0
    %1162 = vmatpush1.msra.mxu0 0.0
    %1163 = vmatprep.mubr.f32.mxu0 0.0
    %1164 = vmatmul.mubr.f32.gmra.mrb[0].mxu0 %v1053
    %v1165 = vpop.f32.mrb[0].mxu0
    %v1166 = vadd.f32 %v1098, %v1165
    %v1167 = vpop.f32.mrb[0].mxu0
    %1168 = vmatprep.mubr.f32.mxu0 0.0
    %1169 = vmatmul.mubr.f32.gmra.mrb[0].mxu0 %v1054
    %v1170 = vpop.f32.mrb[0].mxu0
    %v1171 = vadd.f32 %v1098, %v1170
    %v1172 = vpop.f32.mrb[0].mxu0
    %1173 = vmatprep.mubr.f32.mxu0 0.0
    %1174 = vmatmul.mubr.f32.gmra.mrb[0].mxu0 %v1055
    %v1175 = vpop.f32.mrb[0].mxu0
    %v1176 = vadd.f32 %v1098, %v1175
    %v1177 = vpop.f32.mrb[0].mxu0
    %1178 = vmatprep.mubr.f32.mxu0 0.0
    %1179 = vmatmul.mubr.f32.gmra.mrb[0].mxu0 %v1056
    %v1180 = vpop.f32.mrb[0].mxu0
    %v1181 = vadd.f32 %v1098, %v1180
    %v1182 = vpop.f32.mrb[0].mxu0
    %1183 = vmatprep.mubr.f32.mxu0 0.0
    %1184 = vmatmul.mubr.f32.gmra.mrb[0].mxu0 %v1057
    %v1185 = vpop.f32.mrb[0].mxu0
    %v1186 = vadd.f32 %v1098, %v1185
    %v1187 = vpop.f32.mrb[0].mxu0
    %1188 = vmatprep.mubr.f32.mxu0 0.0
    %1189 = vmatmul.mubr.f32.gmra.mrb[0].mxu0 %v1058
    %v1190 = vpop.f32.mrb[0].mxu0
    %v1191 = vadd.f32 %v1098, %v1190
    %v1192 = vpop.f32.mrb[0].mxu0
    %1193 = vmatprep.mubr.f32.mxu0 0.0
    %1194 = vmatmul.mubr.f32.gmra.mrb[0].mxu0 %v1059
    %v1195 = vpop.f32.mrb[0].mxu0
    %v1196 = vadd.f32 %v1098, %v1195
    %v1197 = vpop.f32.mrb[0].mxu0
    %1198 = vmatprep.mubr.f32.mxu0 0.0
    %1199 = vmatmul.mubr.f32.gmra.mrb[0].mxu0 %v1060
    %v1200 = vpop.f32.mrb[0].mxu0
    %v1201 = vadd.f32 %v1098, %v1200
    %v1202 = vpop.f32.mrb[0].mxu0
    %1203 = vmatprep.mubr.f32.mxu0 0.0
    %1204 = vmatmul.mubr.f32.gmra.mrb[0].mxu0 %v1061
    %v1205 = vpop.f32.mrb[0].mxu0
    %v1206 = vadd.f32 %v1098, %v1205
    %v1207 = vpop.f32.mrb[0].mxu0
    %1208 = vmatprep.mubr.f32.mxu0 0.0
    %1209 = vmatmul.mubr.f32.gmra.mrb[0].mxu0 %v1062
    %v1210 = vpop.f32.mrb[0].mxu0
    %v1211 = vadd.f32 %v1098, %v1210
    %v1212 = vpop.f32.mrb[0].mxu0
    %1213 = vmatprep.mubr.f32.mxu0 0.0
    %1214 = vmatmul.mubr.f32.gmra.mrb[0].mxu0 %v1063
    %v1215 = vpop.f32.mrb[0].mxu0
    %v1216 = vadd.f32 %v1098, %v1215
    %v1217 = vpop.f32.mrb[0].mxu0
    %1218 = vmatprep.mubr.f32.mxu0 0.0
    %1219 = vmatmul.mubr.f32.gmra.mrb[0].mxu0 %v1064
    %v1220 = vpop.f32.mrb[0].mxu0
    %v1221 = vadd.f32 %v1098, %v1220
    %v1222 = vpop.f32.mrb[0].mxu0
    %1223 = vmatprep.mubr.f32.mxu0 0.0
    %1224 = vmatmul.mubr.f32.gmra.mrb[0].mxu0 %v1065
    %v1225 = vpop.f32.mrb[0].mxu0
    %v1226 = vadd.f32 %v1098, %v1225
    %v1227 = vpop.f32.mrb[0].mxu0
    %1228 = vmatprep.mubr.f32.mxu0 0.0
    %1229 = vmatmul.mubr.f32.gmra.mrb[0].mxu0 %v1066
    %v1230 = vpop.f32.mrb[0].mxu0
    %v1231 = vadd.f32 %v1098, %v1230
    %v1232 = vpop.f32.mrb[0].mxu0
    %1233 = vmatprep.mubr.f32.mxu0 0.0
    %1234 = vmatmul.mubr.f32.gmra.mrb[0].mxu0 %v1067
    %v1235 = vpop.f32.mrb[0].mxu0
    %v1236 = vadd.f32 %v1098, %v1235
    %v1237 = vpop.f32.mrb[0].mxu0
    %1238 = vmatprep.mubr.f32.mxu0 0.0
    %1239 = vmatmul.mubr.f32.gmra.mrb[0].mxu0 %v1068
    %v1240 = vpop.f32.mrb[0].mxu0
    %v1241 = vadd.f32 %v1098, %v1240
    %v1242 = vpop.f32.mrb[0].mxu0
    %1243 = vmatprep.mubr.f32.mxu0 0.0
    %1244 = vmatmul.mubr.f32.gmra.mrb[0].mxu0 %v1069
    %v1245 = vpop.f32.mrb[0].mxu0
    %v1246 = vadd.f32 %v1098, %v1245
    %v1247 = vpop.f32.mrb[0].mxu0
    %1248 = vmatprep.mubr.f32.mxu0 0.0
    %1249 = vmatmul.mubr.f32.gmra.mrb[0].mxu0 %v1070
    %v1250 = vpop.f32.mrb[0].mxu0
    %v1251 = vadd.f32 %v1098, %v1250
    %v1252 = vpop.f32.mrb[0].mxu0
    %1253 = vmatprep.mubr.f32.mxu0 0.0
    %1254 = vmatmul.mubr.f32.gmra.mrb[0].mxu0 %v1071
    %v1255 = vpop.f32.mrb[0].mxu0
    %v1256 = vadd.f32 %v1098, %v1255
    %v1257 = vpop.f32.mrb[0].mxu0
    %1258 = vmatprep.mubr.f32.mxu0 0.0
    %1259 = vmatmul.mubr.f32.gmra.mrb[0].mxu0 %v1072
    %v1260 = vpop.f32.mrb[0].mxu0
    %v1261 = vadd.f32 %v1098, %v1260
    %v1262 = vpop.f32.mrb[0].mxu0
    %1263 = vmatprep.mubr.f32.mxu0 0.0
    %1264 = vmatmul.mubr.f32.gmra.mrb[0].mxu0 %v1073
    %v1265 = vpop.f32.mrb[0].mxu0
    %v1266 = vadd.f32 %v1098, %v1265
    %v1267 = vpop.f32.mrb[0].mxu0
    %1268 = vmatprep.mubr.f32.mxu0 0.0
    %1269 = vmatmul.mubr.f32.gmra.mrb[0].mxu0 %v1074
    %v1270 = vpop.f32.mrb[0].mxu0
    %v1271 = vadd.f32 %v1098, %v1270
    %v1272 = vpop.f32.mrb[0].mxu0
    %1273 = vmatprep.mubr.f32.mxu0 0.0
    %1274 = vmatmul.mubr.f32.gmra.mrb[0].mxu0 %v1075
    %v1275 = vpop.f32.mrb[0].mxu0
    %v1276 = vadd.f32 %v1098, %v1275
    %v1277 = vpop.f32.mrb[0].mxu0
    %1278 = vmatprep.mubr.f32.mxu0 0.0
    %1279 = vmatmul.mubr.f32.gmra.mrb[0].mxu0 %v1076
    %v1280 = vpop.f32.mrb[0].mxu0
    %v1281 = vadd.f32 %v1098, %v1280
    %v1282 = vpop.f32.mrb[0].mxu0
    %1283 = vmatprep.mubr.f32.mxu0 0.0
    %1284 = vmatmul.mubr.f32.gmra.mrb[0].mxu0 %v1077
    %v1285 = vpop.f32.mrb[0].mxu0
    %v1286 = vadd.f32 %v1098, %v1285
    %v1287 = vpop.f32.mrb[0].mxu0
    %1288 = vdwg.mxu0
    %1289 = vst [vmem:[#allocation13] sm:$0xff] %v1166
    %1290 = vst [vmem:[#allocation13 + $0x8] sm:$0xff] %v1171
    %1291 = vst [vmem:[#allocation13 + $0x10] sm:$0xff] %v1176
    %1292 = vst [vmem:[#allocation13 + $0x18] sm:$0xff] %v1181
    %1293 = vst [vmem:[#allocation13 + $0x20] sm:$0xff] %v1186
    %1294 = vst [vmem:[#allocation13 + $0x28] sm:$0xff] %v1191
    %1295 = vst [vmem:[#allocation13 + $0x30] sm:$0xff] %v1196
    %1296 = vst [vmem:[#allocation13 + $0x38] sm:$0xff] %v1201
    %1297 = vst [vmem:[#allocation13 + $0x40] sm:$0xff] %v1206
    %1298 = vst [vmem:[#allocation13 + $0x48] sm:$0xff] %v1211
    %1299 = vst [vmem:[#allocation13 + $0x50] sm:$0xff] %v1216
    %1300 = vst [vmem:[#allocation13 + $0x58] sm:$0xff] %v1221
    %1301 = vst [vmem:[#allocation13 + $0x60] sm:$0xff] %v1226
    %1302 = vst [vmem:[#allocation13 + $0x68] sm:$0xff] %v1231
    %1303 = vst [vmem:[#allocation13 + $0x70] sm:$0xff] %v1236
    %1304 = vst [vmem:[#allocation13 + $0x78] sm:$0xff] %v1241
    %1305 = vst [vmem:[#allocation13 + $0x80] sm:$0xff] %v1246
    %1306 = vst [vmem:[#allocation13 + $0x88] sm:$0xff] %v1251
    %1307 = vst [vmem:[#allocation13 + $0x90] sm:$0xff] %v1256
    %1308 = vst [vmem:[#allocation13 + $0x98] sm:$0xff] %v1261
    %1309 = vst [vmem:[#allocation13 + $0xa0] sm:$0xff] %v1266
    %1310 = vst [vmem:[#allocation13 + $0xa8] sm:$0xff] %v1271
    %1311 = vst [vmem:[#allocation13 + $0xb0] sm:$0xff] %v1276
    %1312 = vst [vmem:[#allocation13 + $0xb8] sm:$0xff] %v1281
    %1313 = vst [vmem:[#allocation13 + $0xc0] sm:$0xff] %v1286
    // Predicated region
    $region54: #{tpu_custom_call.1} parent=1 // pred_check
      _
    $region55: #{tpu_custom_call.1} parent=1 // pred_check_branch
      %1315 = sbr.rel (0) target = $region57
    $region56: #{tpu_custom_call.1} parent=1 // pred_region
      %s1317 = ssub.s32 3200, 3200
      %1318 = vsyncadd [#allocation4], %s1317
      %s1319 = sshll.u32 [#allocation13], 4
      %s1320 = int_to_ptr.vmem [resolvable:$true] %s1319
      %1325 = dma.vmem_to_hbm [thread:$0]  %s1320, 3200, %s7, [#allocation4], 128, 128, 8
    $region57: #{tpu_custom_call.1} parent=1 // pred_fallthru
      _
    // Predicated region
    $region58: #{tpu_custom_call.1} parent=1 // pred_check
      _
    $region59: #{tpu_custom_call.1} parent=1 // pred_check_branch
      %1327 = sbr.rel (0) target = $region61
    $region60: #{tpu_custom_call.1} parent=1 // pred_region
      %1328 = dma.done [#allocation4], 3200
    $region61: #{tpu_custom_call.1} parent=1 // pred_fallthru
      _
    %1329 = vsyncpa [#allocation3], 1
    %1330 = vsyncpa [#allocation6], 1
    %1331 = vsyncpa [#allocation9], 1
    %1332 = vsyncpa [#allocation12], 1
    %1333 = vsyncpa [#allocation4], 1

</llo_original>
